<compile_context>
chip_gen: v7x
topology: tpu7x:2x2x1
jax: 0.10.0
libtpu: 0.0.40
codegen_flags: <defaults>
</compile_context>

<pallas_src>
import functools

import jax
import jax.numpy as jnp
from jax import lax
from jax.experimental import pallas as pl
from jax.experimental.pallas import tpu as pltpu

EPS = 1e-5  # nn.BatchNorm2d default eps


# ---------------------------------------------------------------------------
# In-kernel helpers
# ---------------------------------------------------------------------------
def _conv3x3_lane_dense(xf, wb_ref, h):
    """3x3 stride-1 'SAME' conv in lane-dense (rows, W*C) layout.

    xf: (M, W*C) with M = B_tile*H rows (B_tile images stacked along
    sublanes).  wb_ref: (3, W*C, W*C) block-banded weights (width taps folded
    into the band), one matrix per height tap.

    Three full-M MXU matmuls on the UNSHIFTED rows, accumulated in vregs; the
    +/-1-row height shift is applied afterwards with a cheap XLU sublane
    rotate plus a per-row mask that kills image-boundary (and roll-wrap) rows.
    """
    m = xf.shape[0]
    row = lax.broadcasted_iota(jnp.int32, (m, 1), 0) % h  # image-local row id

    y = jnp.dot(xf, wb_ref[1], preferred_element_type=jnp.float32)   # kh = 1
    y0 = jnp.dot(xf, wb_ref[0], preferred_element_type=jnp.float32)  # kh = 0
    y = y + jnp.where(row != 0, pltpu.roll(y0, 1, axis=0), 0.0)
    y2 = jnp.dot(xf, wb_ref[2], preferred_element_type=jnp.float32)  # kh = 2
    y = y + jnp.where(row != h - 1, pltpu.roll(y2, m - 1, axis=0), 0.0)
    return y


def _write_bn_partials(y, s_ref, q_ref):
    """Per-tile per-lane sum and CENTERED sum-of-squares (parallel-variance
    partials; folded in the wrapper).  Lane-dense sublane reductions."""
    s = jnp.sum(y, axis=0, keepdims=True)                  # (1, W*C)
    mu = s * (1.0 / y.shape[0])
    d = y - mu
    s_ref[0] = s
    q_ref[0] = jnp.sum(d * d, axis=0, keepdims=True)


# ---------------------------------------------------------------------------
# Kernels (grid = (N // B_tile,), one batch tile per step, 'parallel')
# ---------------------------------------------------------------------------
def _conv1_stats_kernel(x_ref, wb_ref, y_ref, s_ref, q_ref, *, h):
    # conv1 + BN1 partial statistics.
    y = _conv3x3_lane_dense(x_ref[...], wb_ref, h)
    y_ref[...] = y
    _write_bn_partials(y, s_ref, q_ref)


def _bn_relu_conv_stats_kernel(y1_ref, sc_ref, sh_ref, wb_ref,
                               y2_ref, s_ref, q_ref, *, h):
    # bn1 (folded per-lane affine) + relu + conv2 + BN2 partial statistics.
    a = jnp.maximum(y1_ref[...] * sc_ref[...] + sh_ref[...], 0.0)
    y = _conv3x3_lane_dense(a, wb_ref, h)
    y2_ref[...] = y
    _write_bn_partials(y, s_ref, q_ref)


def _bn_residual_relu_kernel(y2_ref, sc_ref, sh_ref, x_ref, o_ref):
    # out = relu(bn2(conv2_out) + identity_shortcut)
    o_ref[...] = jnp.maximum(
        y2_ref[...] * sc_ref[...] + sh_ref[...] + x_ref[...], 0.0)


# ---------------------------------------------------------------------------
# Wrapper-side helpers (one-time weight prep + tiny per-channel BN finish)
# ---------------------------------------------------------------------------
def _banded_weights(w_oihw, w_spatial):
    """Fold the 3 width taps of a 3x3 OIHW conv weight into block-banded
    (W*C, W*C) matrices, one per height tap:
      band[kh, wi*C+ci, wo*C+co] = w[kh, wi-wo+1, ci, co] if |wi-wo| <= 1."""
    w_hwio = jnp.transpose(w_oihw, (2, 3, 1, 0)).astype(jnp.float32)
    c = w_hwio.shape[-1]
    wc = w_spatial * c
    idx = jnp.arange(wc)
    w_in = idx[:, None] // c
    c_in = idx[:, None] % c
    w_out = idx[None, :] // c
    c_out = idx[None, :] % c
    kw = w_in - w_out + 1                               # (WC, WC)
    valid = (kw >= 0) & (kw <= 2)
    band = w_hwio[:, jnp.clip(kw, 0, 2), c_in, c_out]   # (3, WC, WC)
    return jnp.where(valid[None], band, 0.0)


def prepare_block_params(params, w_spatial):
    """One-time weight prep, hoisted out of the per-forward path (review item).
    Call once per weight set and reuse the result across forwards."""
    w1, g1, b1, w2, g2, b2 = params
    return (_banded_weights(w1, w_spatial),
            jnp.asarray(g1, jnp.float32), jnp.asarray(b1, jnp.float32),
            _banded_weights(w2, w_spatial),
            jnp.asarray(g2, jnp.float32), jnp.asarray(b2, jnp.float32))


def _finish_bn(s_part, q_part, gamma, beta, rows_per_tile, count, w_spatial):
    """Fold per-tile (sum, centered sq-sum) partials into per-channel
    scale/shift lane vectors using the parallel-variance combination."""
    c = gamma.shape[0]
    g = s_part.shape[0]
    s = s_part.reshape(g, w_spatial, c)                 # lane = w*C + c
    q = q_part.reshape(g, w_spatial, c)
    group_mean = s / rows_per_tile                      # per (tile, w) group
    mean = jnp.sum(s, axis=(0, 1)) / count              # (C,)
    var = (jnp.sum(q, axis=(0, 1))
           + rows_per_tile * jnp.sum((group_mean - mean) ** 2, axis=(0, 1))
           ) / count                                    # biased var (training)
    inv = gamma * lax.rsqrt(var + EPS)
    scale = jnp.tile(inv, w_spatial)[None, :].astype(jnp.float32)   # (1, W*C)
    shift = jnp.tile(beta - mean * inv, w_spatial)[None, :].astype(jnp.float32)
    return scale, shift


def _pick_batch_tile(n, h, target_rows=256):
    """Batch-tile size: raise matmul M toward target_rows, keep >=2 grid steps
    when N allows (v7x has 2 TensorCores; grid=(1,) would idle one)."""
    bt = max(1, min(n, max(1, target_rows // h)))
    while bt > 1 and n % bt:
        bt -= 1
    while bt > 1 and n // bt < 2:
        bt //= 2
        while bt > 1 and n % bt:
            bt -= 1
    return bt


# ---------------------------------------------------------------------------
# Layout glue (NCHW <-> lane-dense).  In a stacked ResNet keep everything in
# the lane-dense layout and call basic_block_forward_lane directly.
# ---------------------------------------------------------------------------
def nchw_to_lane(x_nchw):
    n, c, h, w = x_nchw.shape
    return jnp.transpose(x_nchw, (0, 2, 3, 1)).reshape(n, h, w * c)


def lane_to_nchw(x_lane, c):
    n, h, wc = x_lane.shape
    return jnp.transpose(x_lane.reshape(n, h, wc // c, c), (0, 3, 1, 2))


# ---------------------------------------------------------------------------
# Forward
# ---------------------------------------------------------------------------
@jax.jit
def basic_block_forward_lane(x_lane, prep):
    """Core BasicBlock forward in the lane-dense (N, H, W*C) layout."""
    wb1, g1, b1, wb2, g2, b2 = prep
    n, h, wc = x_lane.shape
    c = g1.shape[0]
    w = wc // c
    bt = _pick_batch_tile(n, h)
    grid = (n // bt,)
    tm = bt * h                       # matmul M per grid step
    rows = n * h
    count = n * h * w                 # BN normalization count

    x2 = x_lane.reshape(rows, wc).astype(jnp.float32)   # free reshape

    act_spec = pl.BlockSpec((tm, wc), lambda g_: (g_, 0))
    vec_spec = pl.BlockSpec((1, wc), lambda g_: (0, 0))
    wgt_spec = pl.BlockSpec((3, wc, wc), lambda g_: (0, 0, 0))
    stat_spec = pl.BlockSpec((1, 1, wc), lambda g_: (g_, 0, 0))

    act_shape = jax.ShapeDtypeStruct((rows, wc), jnp.float32)
    stat_shape = jax.ShapeDtypeStruct((grid[0], 1, wc), jnp.float32)
    cparams = pltpu.CompilerParams(
        dimension_semantics=("parallel",),
        vmem_limit_bytes=32 * 1024 * 1024)

    # --- pass 1: conv1 + BN1 partial statistics ------------------------------
    y1, s1, q1 = pl.pallas_call(
        functools.partial(_conv1_stats_kernel, h=h),
        grid=grid,
        in_specs=[act_spec, wgt_spec],
        out_specs=(act_spec, stat_spec, stat_spec),
        out_shape=(act_shape, stat_shape, stat_shape),
        compiler_params=cparams,
    )(x2, wb1)
    scale1, shift1 = _finish_bn(s1, q1, g1, b1, tm, count, w)

    # --- pass 2: bn1 + relu + conv2 + BN2 partial statistics -----------------
    y2, s2, q2 = pl.pallas_call(
        functools.partial(_bn_relu_conv_stats_kernel, h=h),
        grid=grid,
        in_specs=[act_spec, vec_spec, vec_spec, wgt_spec],
        out_specs=(act_spec, stat_spec, stat_spec),
        out_shape=(act_shape, stat_shape, stat_shape),
        input_output_aliases={0: 0},          # reuse y1's HBM buffer for y2
        compiler_params=cparams,
    )(y1, scale1, shift1, wb2)
    scale2, shift2 = _finish_bn(s2, q2, g2, b2, tm, count, w)

    # --- pass 3: bn2 + identity shortcut + relu -------------------------------
    out = pl.pallas_call(
        _bn_residual_relu_kernel,
        grid=grid,
        in_specs=[act_spec, vec_spec, vec_spec, act_spec],
        out_specs=act_spec,
        out_shape=act_shape,
        input_output_aliases={0: 0},          # reuse y2's HBM buffer for out
        compiler_params=cparams,
    )(y2, scale2, shift2, x2)

    return out.reshape(n, h, wc)


@jax.jit
def basic_block_forward(x_nchw, prep):
    """NCHW-interface wrapper (matches the PyTorch module).  The layout flips
    only happen at the edges; stacked blocks should stay lane-dense."""
    c = prep[1].shape[0]
    out_lane = basic_block_forward_lane(nchw_to_lane(x_nchw.astype(jnp.float32)),
                                        prep)
    return lane_to_nchw(out_lane, c)


# ---------------------------------------------------------------------------
# Pure-JAX reference (lax conv, training-mode BN) for the correctness check
# ---------------------------------------------------------------------------
def basic_block_reference(x_nchw, params):
    w1, g1, b1, w2, g2, b2 = params
    c = x_nchw.shape[1]
    x = jnp.transpose(x_nchw, (0, 2, 3, 1)).astype(jnp.float32)   # NHWC
    dn = ('NHWC', 'HWIO', 'NHWC')
    w1h = jnp.transpose(w1, (2, 3, 1, 0))
    w2h = jnp.transpose(w2, (2, 3, 1, 0))

    def bn(y, g, b):
        mean = jnp.mean(y, axis=(0, 1, 2), keepdims=True)
        var = jnp.mean((y - mean) ** 2, axis=(0, 1, 2), keepdims=True)
        return (y - mean) * lax.rsqrt(var + EPS) * g.reshape(1, 1, 1, c) \
            + b.reshape(1, 1, 1, c)

    y = lax.conv_general_dilated(x, w1h, (1, 1), 'SAME', dimension_numbers=dn)
    y = jnp.maximum(bn(y, g1, b1), 0.0)
    y = lax.conv_general_dilated(y, w2h, (1, 1), 'SAME', dimension_numbers=dn)
    y = jnp.maximum(bn(y, g2, b2) + x, 0.0)
    return jnp.transpose(y, (0, 3, 1, 2))


if __name__ == "__main__":
    # BasicBlock(in_planes=8, planes=8, stride=1) -> identity shortcut.
    # W*C = 16*8 = 128 -> exactly one lane tile.  N=16 so each grid step
    # batches 8 images (matmul M = 128) while the grid still has 2 steps.
    N, C, H, W = 16, 8, 16, 16
    key = jax.random.PRNGKey(0)
    k = jax.random.split(key, 7)

    x = jax.random.normal(k[0], (N, C, H, W), jnp.float32)

    # Conv weights in PyTorch OIHW layout (planes, in_planes, 3, 3), bias=False.
    w1 = 0.1 * jax.random.normal(k[1], (C, C, 3, 3), jnp.float32)
    w2 = 0.1 * jax.random.normal(k[2], (C, C, 3, 3), jnp.float32)
    # BatchNorm affine params (PyTorch init is gamma=1, beta=0; perturb so the
    # affine path is actually exercised — deterministic either way).
    g1 = 1.0 + 0.1 * jax.random.normal(k[3], (C,), jnp.float32)
    b1 = 0.1 * jax.random.normal(k[4], (C,), jnp.float32)
    g2 = 1.0 + 0.1 * jax.random.normal(k[5], (C,), jnp.float32)
    b2 = 0.1 * jax.random.normal(k[6], (C,), jnp.float32)
    params = (w1, g1, b1, w2, g2, b2)

    # Hoisted: banded-weight construction runs once per weight set, not per call.
    prep = prepare_block_params(params, W)

    out = jax.block_until_ready(basic_block_forward(x, prep))
    ref = jax.block_until_ready(basic_block_reference(x, params))

    assert out.shape == (N, C, H, W), out.shape
    err = float(jnp.max(jnp.abs(out - ref)))
    if err < 1e-3:
        print("KERNEL_OK")
    else:
        print(f"MISMATCH max_abs_err={err}")
</pallas_src>

<mosaic_0001>
module attributes {stable_mosaic.version = 11 : i64} {
  func.func @_conv1_stats_kernel(%arg0: i32, %arg1: memref<128x128xf32, #tpu.memory_space<vmem>>, %arg2: memref<3x128x128xf32, #tpu.memory_space<vmem>>, %arg3: memref<128x128xf32, #tpu.memory_space<vmem>>, %arg4: memref<1x1x128xf32, #tpu.memory_space<vmem>>, %arg5: memref<1x1x128xf32, #tpu.memory_space<vmem>>) attributes {dimension_semantics = [#tpu.dimension_semantics<parallel>], iteration_bounds = array<i64: 2>, scalar_prefetch = 0 : i64, scratch_operands = 0 : i64, tpu.core_type = #tpu.core_type<tc>, window_params = [{transform_indices = @transform_0, window_bounds = array<i64: 128, 128>}, {pipeline_mode = #tpu.pipeline_mode<synchronous>, transform_indices = @transform_1, window_bounds = array<i64: 3, 128, 128>}, {transform_indices = @transform_2, window_bounds = array<i64: 128, 128>}, {transform_indices = @transform_3, window_bounds = array<i64: 1, 1, 128>}, {transform_indices = @transform_4, window_bounds = array<i64: 1, 1, 128>}]} {
    %c0 = arith.constant 0 : index
    %c0_0 = arith.constant 0 : index
    %0 = vector.load %arg1[%c0, %c0_0] : memref<128x128xf32, #tpu.memory_space<vmem>>, vector<128x128xf32>
    %1 = tpu.iota {dimensions = array<i32: 0>} : vector<128x1xi32>
    %c16_i32 = arith.constant 16 : i32
    %c0_i32 = arith.constant 0 : i32
    %2 = arith.cmpi eq, %c16_i32, %c0_i32 : i32
    %c1_i32 = arith.constant 1 : i32
    %3 = arith.select %2, %c1_i32, %c16_i32 : i32
    %4 = vector.broadcast %3 : i32 to vector<128x1xi32>
    %5 = arith.remsi %1, %4 : vector<128x1xi32>
    %c0_i32_1 = arith.constant 0 : i32
    %6 = vector.broadcast %c0_i32_1 : i32 to vector<128x1xi32>
    %7 = arith.cmpi ne, %5, %6 : vector<128x1xi32>
    %c0_i32_2 = arith.constant 0 : i32
    %8 = vector.broadcast %c0_i32_2 : i32 to vector<128x1xi32>
    %9 = arith.cmpi slt, %5, %8 : vector<128x1xi32>
    %c0_i32_3 = arith.constant 0 : i32
    %10 = arith.cmpi slt, %3, %c0_i32_3 : i32
    %11 = vector.broadcast %10 : i1 to vector<128x1xi1>
    %12 = vector.broadcast %11 : vector<128x1xi1> to vector<128x1xi1>
    %13 = arith.xori %9, %12 : vector<128x1xi1>
    %14 = arith.andi %13, %7 : vector<128x1xi1>
    %15 = vector.broadcast %3 : i32 to vector<128x1xi32>
    %16 = arith.addi %5, %15 : vector<128x1xi32>
    %17 = arith.select %14, %16, %5 : vector<128x1xi1>, vector<128x1xi32>
    %c1 = arith.constant 1 : index
    %c0_4 = arith.constant 0 : index
    %c0_5 = arith.constant 0 : index
    %18 = vector.load %arg2[%c1, %c0_4, %c0_5] : memref<3x128x128xf32, #tpu.memory_space<vmem>>, vector<1x128x128xf32>
    %19 = vector.shape_cast %18 : vector<1x128x128xf32> to vector<128x128xf32>
    %cst = arith.constant dense<0.000000e+00> : vector<128x128xf32>
    %20 = tpu.matmul %0, %19, %cst {dimension_numbers = #tpu.dot_dimension_numbers<[1], [0], [0], [1], [0, 0, 1, 1], [], []>} : vector<128x128xf32>, vector<128x128xf32>, vector<128x128xf32> -> vector<128x128xf32>
    %c0_6 = arith.constant 0 : index
    %c0_7 = arith.constant 0 : index
    %c0_8 = arith.constant 0 : index
    %21 = vector.load %arg2[%c0_6, %c0_7, %c0_8] : memref<3x128x128xf32, #tpu.memory_space<vmem>>, vector<1x128x128xf32>
    %22 = vector.shape_cast %21 : vector<1x128x128xf32> to vector<128x128xf32>
    %cst_9 = arith.constant dense<0.000000e+00> : vector<128x128xf32>
    %23 = tpu.matmul %0, %22, %cst_9 {dimension_numbers = #tpu.dot_dimension_numbers<[1], [0], [0], [1], [0, 0, 1, 1], [], []>} : vector<128x128xf32>, vector<128x128xf32>, vector<128x128xf32> -> vector<128x128xf32>
    %c0_i32_10 = arith.constant 0 : i32
    %24 = vector.broadcast %c0_i32_10 : i32 to vector<128x1xi32>
    %25 = arith.cmpi ne, %17, %24 : vector<128x1xi32>
    %c1_i32_11 = arith.constant 1 : i32
    %26 = tpu.dynamic_rotate %23 by %c1_i32_11 dim 0 : vector<128x128xf32>, i32 -> vector<128x128xf32>
    %cst_12 = arith.constant 0.000000e+00 : f32
    %27 = vector.shape_cast %25 : vector<128x1xi1> to vector<128x1xi1>
    %28 = vector.broadcast %27 : vector<128x1xi1> to vector<128x128xi1>
    %29 = vector.broadcast %cst_12 : f32 to vector<128x128xf32>
    %30 = arith.select %28, %26, %29 : vector<128x128xi1>, vector<128x128xf32>
    %31 = arith.addf %20, %30 : vector<128x128xf32>
    %c2 = arith.constant 2 : index
    %c0_13 = arith.constant 0 : index
    %c0_14 = arith.constant 0 : index
    %32 = vector.load %arg2[%c2, %c0_13, %c0_14] : memref<3x128x128xf32, #tpu.memory_space<vmem>>, vector<1x128x128xf32>
    %33 = vector.shape_cast %32 : vector<1x128x128xf32> to vector<128x128xf32>
    %cst_15 = arith.constant dense<0.000000e+00> : vector<128x128xf32>
    %34 = tpu.matmul %0, %33, %cst_15 {dimension_numbers = #tpu.dot_dimension_numbers<[1], [0], [0], [1], [0, 0, 1, 1], [], []>} : vector<128x128xf32>, vector<128x128xf32>, vector<128x128xf32> -> vector<128x128xf32>
    %c15_i32 = arith.constant 15 : i32
    %35 = vector.broadcast %c15_i32 : i32 to vector<128x1xi32>
    %36 = arith.cmpi ne, %17, %35 : vector<128x1xi32>
    %c127_i32 = arith.constant 127 : i32
    %37 = tpu.dynamic_rotate %34 by %c127_i32 dim 0 : vector<128x128xf32>, i32 -> vector<128x128xf32>
    %cst_16 = arith.constant 0.000000e+00 : f32
    %38 = vector.shape_cast %36 : vector<128x1xi1> to vector<128x1xi1>
    %39 = vector.broadcast %38 : vector<128x1xi1> to vector<128x128xi1>
    %40 = vector.broadcast %cst_16 : f32 to vector<128x128xf32>
    %41 = arith.select %39, %37, %40 : vector<128x128xi1>, vector<128x128xf32>
    %42 = arith.addf %31, %41 : vector<128x128xf32>
    %c0_17 = arith.constant 0 : index
    %c0_18 = arith.constant 0 : index
    %43 = vector.load %arg3[%c0_17, %c0_18] : memref<128x128xf32, #tpu.memory_space<vmem>>, vector<128x128xf32>
    tpu.vector_store %arg3[%c0_17, %c0_18], %42 {strides = array<i32>} : memref<128x128xf32, #tpu.memory_space<vmem>>, vector<128x128xf32>,
    %cst_19 = arith.constant dense<0.000000e+00> : vector<128xf32>
    %44 = vector.multi_reduction <add>, %42, %cst_19 [0] : vector<128x128xf32> to vector<128xf32>
    %45 = vector.shape_cast %44 : vector<128xf32> to vector<1x128xf32>
    %cst_20 = arith.constant 7.812500e-03 : f32
    %46 = vector.broadcast %cst_20 : f32 to vector<1x128xf32>
    %47 = arith.mulf %45, %46 : vector<1x128xf32>
    %48 = vector.broadcast %47 : vector<1x128xf32> to vector<128x128xf32>
    %49 = arith.subf %42, %48 : vector<128x128xf32>
    %c0_21 = arith.constant 0 : index
    %c0_22 = arith.constant 0 : index
    %c0_23 = arith.constant 0 : index
    %50 = vector.load %arg4[%c0_21, %c0_22, %c0_23] : memref<1x1x128xf32, #tpu.memory_space<vmem>>, vector<1x1x128xf32>
    %51 = vector.shape_cast %50 : vector<1x1x128xf32> to vector<1x128xf32>
    %52 = vector.shape_cast %45 : vector<1x128xf32> to vector<1x1x128xf32>
    tpu.vector_store %arg4[%c0_21, %c0_22, %c0_23], %52 {strides = array<i32>} : memref<1x1x128xf32, #tpu.memory_space<vmem>>, vector<1x1x128xf32>,
    %53 = arith.mulf %49, %49 : vector<128x128xf32>
    %cst_24 = arith.constant dense<0.000000e+00> : vector<128xf32>
    %54 = vector.multi_reduction <add>, %53, %cst_24 [0] : vector<128x128xf32> to vector<128xf32>
    %55 = vector.shape_cast %54 : vector<128xf32> to vector<1x128xf32>
    %c0_25 = arith.constant 0 : index
    %c0_26 = arith.constant 0 : index
    %c0_27 = arith.constant 0 : index
    %56 = vector.load %arg5[%c0_25, %c0_26, %c0_27] : memref<1x1x128xf32, #tpu.memory_space<vmem>>, vector<1x1x128xf32>
    %57 = vector.shape_cast %56 : vector<1x1x128xf32> to vector<1x128xf32>
    %58 = vector.shape_cast %55 : vector<1x128xf32> to vector<1x1x128xf32>
    tpu.vector_store %arg5[%c0_25, %c0_26, %c0_27], %58 {strides = array<i32>} : memref<1x1x128xf32, #tpu.memory_space<vmem>>, vector<1x1x128xf32>,
    return
  }
  func.func @transform_0(%arg0: i32) -> (i32, i32) {
    %c0_i32 = arith.constant 0 : i32
    %c0_i32_0 = arith.constant 0 : i32
    return %arg0, %c0_i32 : i32, i32
  }
  func.func @transform_1(%arg0: i32) -> (i32, i32, i32) {
    %c0_i32 = arith.constant 0 : i32
    %c0_i32_0 = arith.constant 0 : i32
    %c0_i32_1 = arith.constant 0 : i32
    %c0_i32_2 = arith.constant 0 : i32
    return %c0_i32, %c0_i32_0, %c0_i32_1 : i32, i32, i32
  }
  func.func @transform_2(%arg0: i32) -> (i32, i32) {
    %c0_i32 = arith.constant 0 : i32
    %c0_i32_0 = arith.constant 0 : i32
    return %arg0, %c0_i32 : i32, i32
  }
  func.func @transform_3(%arg0: i32) -> (i32, i32, i32) {
    %c0_i32 = arith.constant 0 : i32
    %c0_i32_0 = arith.constant 0 : i32
    %c0_i32_1 = arith.constant 0 : i32
    return %arg0, %c0_i32, %c0_i32_0 : i32, i32, i32
  }
  func.func @transform_4(%arg0: i32) -> (i32, i32, i32) {
    %c0_i32 = arith.constant 0 : i32
    %c0_i32_0 = arith.constant 0 : i32
    %c0_i32_1 = arith.constant 0 : i32
    return %arg0, %c0_i32, %c0_i32_0 : i32, i32, i32
  }
}

module attributes {stable_mosaic.version = 11 : i64} {
  func.func @_bn_residual_relu_kernel(%arg0: i32, %arg1: memref<128x128xf32, #tpu.memory_space<vmem>>, %arg2: memref<1x128xf32, #tpu.memory_space<vmem>>, %arg3: memref<1x128xf32, #tpu.memory_space<vmem>>, %arg4: memref<128x128xf32, #tpu.memory_space<vmem>>, %arg5: memref<128x128xf32, #tpu.memory_space<vmem>>) attributes {dimension_semantics = [#tpu.dimension_semantics<parallel>], iteration_bounds = array<i64: 2>, scalar_prefetch = 0 : i64, scratch_operands = 0 : i64, tpu.core_type = #tpu.core_type<tc>, window_params = [{transform_indices = @transform_0, window_bounds = array<i64: 128, 128>}, {pipeline_mode = #tpu.pipeline_mode<synchronous>, transform_indices = @transform_1, window_bounds = array<i64: 1, 128>}, {pipeline_mode = #tpu.pipeline_mode<synchronous>, transform_indices = @transform_2, window_bounds = array<i64: 1, 128>}, {transform_indices = @transform_3, window_bounds = array<i64: 128, 128>}, {transform_indices = @transform_4, window_bounds = array<i64: 128, 128>}]} {
    %c0 = arith.constant 0 : index
    %c0_0 = arith.constant 0 : index
    %0 = vector.load %arg1[%c0, %c0_0] : memref<128x128xf32, #tpu.memory_space<vmem>>, vector<128x128xf32>
    %c0_1 = arith.constant 0 : index
    %c0_2 = arith.constant 0 : index
    %1 = vector.load %arg2[%c0_1, %c0_2] : memref<1x128xf32, #tpu.memory_space<vmem>>, vector<1x128xf32>
    %2 = vector.broadcast %1 : vector<1x128xf32> to vector<128x128xf32>
    %3 = arith.mulf %0, %2 : vector<128x128xf32>
    %c0_3 = arith.constant 0 : index
    %c0_4 = arith.constant 0 : index
    %4 = vector.load %arg3[%c0_3, %c0_4] : memref<1x128xf32, #tpu.memory_space<vmem>>, vector<1x128xf32>
    %5 = vector.broadcast %4 : vector<1x128xf32> to vector<128x128xf32>
    %6 = arith.addf %3, %5 : vector<128x128xf32>
    %c0_5 = arith.constant 0 : index
    %c0_6 = arith.constant 0 : index
    %7 = vector.load %arg4[%c0_5, %c0_6] : memref<128x128xf32, #tpu.memory_space<vmem>>, vector<128x128xf32>
    %8 = arith.addf %6, %7 : vector<128x128xf32>
    %cst = arith.constant 0.000000e+00 : f32
    %9 = vector.broadcast %cst : f32 to vector<128x128xf32>
    %10 = arith.maximumf %8, %9 : vector<128x128xf32>
    %c0_7 = arith.constant 0 : index
    %c0_8 = arith.constant 0 : index
    %11 = vector.load %arg5[%c0_7, %c0_8] : memref<128x128xf32, #tpu.memory_space<vmem>>, vector<128x128xf32>
    tpu.vector_store %arg5[%c0_7, %c0_8], %10 {strides = array<i32>} : memref<128x128xf32, #tpu.memory_space<vmem>>, vector<128x128xf32>,
    return
  }
  func.func @transform_0(%arg0: i32) -> (i32, i32) {
    %c0_i32 = arith.constant 0 : i32
    %c0_i32_0 = arith.constant 0 : i32
    return %arg0, %c0_i32 : i32, i32
  }
  func.func @transform_1(%arg0: i32) -> (i32, i32) {
    %c0_i32 = arith.constant 0 : i32
    %c0_i32_0 = arith.constant 0 : i32
    %c0_i32_1 = arith.constant 0 : i32
    return %c0_i32, %c0_i32_0 : i32, i32
  }
  func.func @transform_2(%arg0: i32) -> (i32, i32) {
    %c0_i32 = arith.constant 0 : i32
    %c0_i32_0 = arith.constant 0 : i32
    %c0_i32_1 = arith.constant 0 : i32
    return %c0_i32, %c0_i32_0 : i32, i32
  }
  func.func @transform_3(%arg0: i32) -> (i32, i32) {
    %c0_i32 = arith.constant 0 : i32
    %c0_i32_0 = arith.constant 0 : i32
    return %arg0, %c0_i32 : i32, i32
  }
  func.func @transform_4(%arg0: i32) -> (i32, i32) {
    %c0_i32 = arith.constant 0 : i32
    %c0_i32_0 = arith.constant 0 : i32
    return %arg0, %c0_i32 : i32, i32
  }
}

module attributes {stable_mosaic.version = 11 : i64} {
  func.func @_bn_relu_conv_stats_kernel(%arg0: i32, %arg1: memref<128x128xf32, #tpu.memory_space<vmem>>, %arg2: memref<1x128xf32, #tpu.memory_space<vmem>>, %arg3: memref<1x128xf32, #tpu.memory_space<vmem>>, %arg4: memref<3x128x128xf32, #tpu.memory_space<vmem>>, %arg5: memref<128x128xf32, #tpu.memory_space<vmem>>, %arg6: memref<1x1x128xf32, #tpu.memory_space<vmem>>, %arg7: memref<1x1x128xf32, #tpu.memory_space<vmem>>) attributes {dimension_semantics = [#tpu.dimension_semantics<parallel>], iteration_bounds = array<i64: 2>, scalar_prefetch = 0 : i64, scratch_operands = 0 : i64, tpu.core_type = #tpu.core_type<tc>, window_params = [{transform_indices = @transform_0, window_bounds = array<i64: 128, 128>}, {pipeline_mode = #tpu.pipeline_mode<synchronous>, transform_indices = @transform_1, window_bounds = array<i64: 1, 128>}, {pipeline_mode = #tpu.pipeline_mode<synchronous>, transform_indices = @transform_2, window_bounds = array<i64: 1, 128>}, {pipeline_mode = #tpu.pipeline_mode<synchronous>, transform_indices = @transform_3, window_bounds = array<i64: 3, 128, 128>}, {transform_indices = @transform_4, window_bounds = array<i64: 128, 128>}, {transform_indices = @transform_5, window_bounds = array<i64: 1, 1, 128>}, {transform_indices = @transform_6, window_bounds = array<i64: 1, 1, 128>}]} {
    %c0 = arith.constant 0 : index
    %c0_0 = arith.constant 0 : index
    %0 = vector.load %arg1[%c0, %c0_0] : memref<128x128xf32, #tpu.memory_space<vmem>>, vector<128x128xf32>
    %c0_1 = arith.constant 0 : index
    %c0_2 = arith.constant 0 : index
    %1 = vector.load %arg2[%c0_1, %c0_2] : memref<1x128xf32, #tpu.memory_space<vmem>>, vector<1x128xf32>
    %2 = vector.broadcast %1 : vector<1x128xf32> to vector<128x128xf32>
    %3 = arith.mulf %0, %2 : vector<128x128xf32>
    %c0_3 = arith.constant 0 : index
    %c0_4 = arith.constant 0 : index
    %4 = vector.load %arg3[%c0_3, %c0_4] : memref<1x128xf32, #tpu.memory_space<vmem>>, vector<1x128xf32>
    %5 = vector.broadcast %4 : vector<1x128xf32> to vector<128x128xf32>
    %6 = arith.addf %3, %5 : vector<128x128xf32>
    %cst = arith.constant 0.000000e+00 : f32
    %7 = vector.broadcast %cst : f32 to vector<128x128xf32>
    %8 = arith.maximumf %6, %7 : vector<128x128xf32>
    %9 = tpu.iota {dimensions = array<i32: 0>} : vector<128x1xi32>
    %c16_i32 = arith.constant 16 : i32
    %c0_i32 = arith.constant 0 : i32
    %10 = arith.cmpi eq, %c16_i32, %c0_i32 : i32
    %c1_i32 = arith.constant 1 : i32
    %11 = arith.select %10, %c1_i32, %c16_i32 : i32
    %12 = vector.broadcast %11 : i32 to vector<128x1xi32>
    %13 = arith.remsi %9, %12 : vector<128x1xi32>
    %c0_i32_5 = arith.constant 0 : i32
    %14 = vector.broadcast %c0_i32_5 : i32 to vector<128x1xi32>
    %15 = arith.cmpi ne, %13, %14 : vector<128x1xi32>
    %c0_i32_6 = arith.constant 0 : i32
    %16 = vector.broadcast %c0_i32_6 : i32 to vector<128x1xi32>
    %17 = arith.cmpi slt, %13, %16 : vector<128x1xi32>
    %c0_i32_7 = arith.constant 0 : i32
    %18 = arith.cmpi slt, %11, %c0_i32_7 : i32
    %19 = vector.broadcast %18 : i1 to vector<128x1xi1>
    %20 = vector.broadcast %19 : vector<128x1xi1> to vector<128x1xi1>
    %21 = arith.xori %17, %20 : vector<128x1xi1>
    %22 = arith.andi %21, %15 : vector<128x1xi1>
    %23 = vector.broadcast %11 : i32 to vector<128x1xi32>
    %24 = arith.addi %13, %23 : vector<128x1xi32>
    %25 = arith.select %22, %24, %13 : vector<128x1xi1>, vector<128x1xi32>
    %c1 = arith.constant 1 : index
    %c0_8 = arith.constant 0 : index
    %c0_9 = arith.constant 0 : index
    %26 = vector.load %arg4[%c1, %c0_8, %c0_9] : memref<3x128x128xf32, #tpu.memory_space<vmem>>, vector<1x128x128xf32>
    %27 = vector.shape_cast %26 : vector<1x128x128xf32> to vector<128x128xf32>
    %cst_10 = arith.constant dense<0.000000e+00> : vector<128x128xf32>
    %28 = tpu.matmul %8, %27, %cst_10 {dimension_numbers = #tpu.dot_dimension_numbers<[1], [0], [0], [1], [0, 0, 1, 1], [], []>} : vector<128x128xf32>, vector<128x128xf32>, vector<128x128xf32> -> vector<128x128xf32>
    %c0_11 = arith.constant 0 : index
    %c0_12 = arith.constant 0 : index
    %c0_13 = arith.constant 0 : index
    %29 = vector.load %arg4[%c0_11, %c0_12, %c0_13] : memref<3x128x128xf32, #tpu.memory_space<vmem>>, vector<1x128x128xf32>
    %30 = vector.shape_cast %29 : vector<1x128x128xf32> to vector<128x128xf32>
    %cst_14 = arith.constant dense<0.000000e+00> : vector<128x128xf32>
    %31 = tpu.matmul %8, %30, %cst_14 {dimension_numbers = #tpu.dot_dimension_numbers<[1], [0], [0], [1], [0, 0, 1, 1], [], []>} : vector<128x128xf32>, vector<128x128xf32>, vector<128x128xf32> -> vector<128x128xf32>
    %c0_i32_15 = arith.constant 0 : i32
    %32 = vector.broadcast %c0_i32_15 : i32 to vector<128x1xi32>
    %33 = arith.cmpi ne, %25, %32 : vector<128x1xi32>
    %c1_i32_16 = arith.constant 1 : i32
    %34 = tpu.dynamic_rotate %31 by %c1_i32_16 dim 0 : vector<128x128xf32>, i32 -> vector<128x128xf32>
    %cst_17 = arith.constant 0.000000e+00 : f32
    %35 = vector.shape_cast %33 : vector<128x1xi1> to vector<128x1xi1>
    %36 = vector.broadcast %35 : vector<128x1xi1> to vector<128x128xi1>
    %37 = vector.broadcast %cst_17 : f32 to vector<128x128xf32>
    %38 = arith.select %36, %34, %37 : vector<128x128xi1>, vector<128x128xf32>
    %39 = arith.addf %28, %38 : vector<128x128xf32>
    %c2 = arith.constant 2 : index
    %c0_18 = arith.constant 0 : index
    %c0_19 = arith.constant 0 : index
    %40 = vector.load %arg4[%c2, %c0_18, %c0_19] : memref<3x128x128xf32, #tpu.memory_space<vmem>>, vector<1x128x128xf32>
    %41 = vector.shape_cast %40 : vector<1x128x128xf32> to vector<128x128xf32>
    %cst_20 = arith.constant dense<0.000000e+00> : vector<128x128xf32>
    %42 = tpu.matmul %8, %41, %cst_20 {dimension_numbers = #tpu.dot_dimension_numbers<[1], [0], [0], [1], [0, 0, 1, 1], [], []>} : vector<128x128xf32>, vector<128x128xf32>, vector<128x128xf32> -> vector<128x128xf32>
    %c15_i32 = arith.constant 15 : i32
    %43 = vector.broadcast %c15_i32 : i32 to vector<128x1xi32>
    %44 = arith.cmpi ne, %25, %43 : vector<128x1xi32>
    %c127_i32 = arith.constant 127 : i32
    %45 = tpu.dynamic_rotate %42 by %c127_i32 dim 0 : vector<128x128xf32>, i32 -> vector<128x128xf32>
    %cst_21 = arith.constant 0.000000e+00 : f32
    %46 = vector.shape_cast %44 : vector<128x1xi1> to vector<128x1xi1>
    %47 = vector.broadcast %46 : vector<128x1xi1> to vector<128x128xi1>
    %48 = vector.broadcast %cst_21 : f32 to vector<128x128xf32>
    %49 = arith.select %47, %45, %48 : vector<128x128xi1>, vector<128x128xf32>
    %50 = arith.addf %39, %49 : vector<128x128xf32>
    %c0_22 = arith.constant 0 : index
    %c0_23 = arith.constant 0 : index
    %51 = vector.load %arg5[%c0_22, %c0_23] : memref<128x128xf32, #tpu.memory_space<vmem>>, vector<128x128xf32>
    tpu.vector_store %arg5[%c0_22, %c0_23], %50 {strides = array<i32>} : memref<128x128xf32, #tpu.memory_space<vmem>>, vector<128x128xf32>,
    %cst_24 = arith.constant dense<0.000000e+00> : vector<128xf32>
    %52 = vector.multi_reduction <add>, %50, %cst_24 [0] : vector<128x128xf32> to vector<128xf32>
    %53 = vector.shape_cast %52 : vector<128xf32> to vector<1x128xf32>
    %cst_25 = arith.constant 7.812500e-03 : f32
    %54 = vector.broadcast %cst_25 : f32 to vector<1x128xf32>
    %55 = arith.mulf %53, %54 : vector<1x128xf32>
    %56 = vector.broadcast %55 : vector<1x128xf32> to vector<128x128xf32>
    %57 = arith.subf %50, %56 : vector<128x128xf32>
    %c0_26 = arith.constant 0 : index
    %c0_27 = arith.constant 0 : index
    %c0_28 = arith.constant 0 : index
    %58 = vector.load %arg6[%c0_26, %c0_27, %c0_28] : memref<1x1x128xf32, #tpu.memory_space<vmem>>, vector<1x1x128xf32>
    %59 = vector.shape_cast %58 : vector<1x1x128xf32> to vector<1x128xf32>
    %60 = vector.shape_cast %53 : vector<1x128xf32> to vector<1x1x128xf32>
    tpu.vector_store %arg6[%c0_26, %c0_27, %c0_28], %60 {strides = array<i32>} : memref<1x1x128xf32, #tpu.memory_space<vmem>>, vector<1x1x128xf32>,
    %61 = arith.mulf %57, %57 : vector<128x128xf32>
    %cst_29 = arith.constant dense<0.000000e+00> : vector<128xf32>
    %62 = vector.multi_reduction <add>, %61, %cst_29 [0] : vector<128x128xf32> to vector<128xf32>
    %63 = vector.shape_cast %62 : vector<128xf32> to vector<1x128xf32>
    %c0_30 = arith.constant 0 : index
    %c0_31 = arith.constant 0 : index
    %c0_32 = arith.constant 0 : index
    %64 = vector.load %arg7[%c0_30, %c0_31, %c0_32] : memref<1x1x128xf32, #tpu.memory_space<vmem>>, vector<1x1x128xf32>
    %65 = vector.shape_cast %64 : vector<1x1x128xf32> to vector<1x128xf32>
    %66 = vector.shape_cast %63 : vector<1x128xf32> to vector<1x1x128xf32>
    tpu.vector_store %arg7[%c0_30, %c0_31, %c0_32], %66 {strides = array<i32>} : memref<1x1x128xf32, #tpu.memory_space<vmem>>, vector<1x1x128xf32>,
    return
  }
  func.func @transform_0(%arg0: i32) -> (i32, i32) {
    %c0_i32 = arith.constant 0 : i32
    %c0_i32_0 = arith.constant 0 : i32
    return %arg0, %c0_i32 : i32, i32
  }
  func.func @transform_1(%arg0: i32) -> (i32, i32) {
    %c0_i32 = arith.constant 0 : i32
    %c0_i32_0 = arith.constant 0 : i32
    %c0_i32_1 = arith.constant 0 : i32
    return %c0_i32, %c0_i32_0 : i32, i32
  }
  func.func @transform_2(%arg0: i32) -> (i32, i32) {
    %c0_i32 = arith.constant 0 : i32
    %c0_i32_0 = arith.constant 0 : i32
    %c0_i32_1 = arith.constant 0 : i32
    return %c0_i32, %c0_i32_0 : i32, i32
  }
  func.func @transform_3(%arg0: i32) -> (i32, i32, i32) {
    %c0_i32 = arith.constant 0 : i32
    %c0_i32_0 = arith.constant 0 : i32
    %c0_i32_1 = arith.constant 0 : i32
    %c0_i32_2 = arith.constant 0 : i32
    return %c0_i32, %c0_i32_0, %c0_i32_1 : i32, i32, i32
  }
  func.func @transform_4(%arg0: i32) -> (i32, i32) {
    %c0_i32 = arith.constant 0 : i32
    %c0_i32_0 = arith.constant 0 : i32
    return %arg0, %c0_i32 : i32, i32
  }
  func.func @transform_5(%arg0: i32) -> (i32, i32, i32) {
    %c0_i32 = arith.constant 0 : i32
    %c0_i32_0 = arith.constant 0 : i32
    %c0_i32_1 = arith.constant 0 : i32
    return %arg0, %c0_i32, %c0_i32_0 : i32, i32, i32
  }
  func.func @transform_6(%arg0: i32) -> (i32, i32, i32) {
    %c0_i32 = arith.constant 0 : i32
    %c0_i32_0 = arith.constant 0 : i32
    %c0_i32_1 = arith.constant 0 : i32
    return %arg0, %c0_i32, %c0_i32_0 : i32, i32, i32
  }
}

</mosaic_0001>

<llo_original>
// kernel: tile.29
$region0: #{tile.29}
  %s0 = inlined_call_operand.vmem [shape: f32[16,8], index: 0, kind: input, shape index: {}]
  %s1 = inlined_call_operand.vmem [shape: f32[1,128], index: 1, kind: output, shape index: {}]
  $region1: #{tile.29} parent=0
    #allocation0 [shape = 'u8[4096]{0}', space=vmem, size = 0x1000, scoped, tag = 'scoped mem for output reshape']
    %v2 = vld [vmem:[%s0] sm:$0x1]
    %vm3 = vcmask 64512
    %4 = vst.msk [vmem:[#allocation0] sm:$0x1] %vm3, %v2
    %s5 = scalar_lea.vmem %s0, 15
    %v6 = vld [vmem:[%s5] sm:$0x1]
    %7 = vrot.lane.b32.xlu0 %v6, 120
    %v8 = vpop.permute.xlu0 %7
    %vm9 = vcmask 1048512
    %10 = vst.msk [vmem:[#allocation0] sm:$0x1] %vm9, %v8
    %s11 = scalar_lea.vmem %s0, 14
    %v12 = vld [vmem:[%s11] sm:$0x1]
    %13 = vrot.lane.b32.xlu0 %v12, 112
    %v14 = vpop.permute.xlu0 %13
    %vm15 = vcmask 982912
    %16 = vst.msk [vmem:[#allocation0] sm:$0x1] %vm15, %v14
    %s17 = scalar_lea.vmem %s0, 13
    %v18 = vld [vmem:[%s17] sm:$0x1]
    %19 = vrot.lane.b32.xlu0 %v18, 104
    %v20 = vpop.permute.xlu0 %19
    %vm21 = vcmask 917312
    %22 = vst.msk [vmem:[#allocation0] sm:$0x1] %vm21, %v20
    %s23 = scalar_lea.vmem %s0, 12
    %v24 = vld [vmem:[%s23] sm:$0x1]
    %25 = vrot.lane.b32.xlu0 %v24, 96
    %v26 = vpop.permute.xlu0 %25
    %vm27 = vcmask 851712
    %28 = vst.msk [vmem:[#allocation0] sm:$0x1] %vm27, %v26
    %s29 = scalar_lea.vmem %s0, 11
    %v30 = vld [vmem:[%s29] sm:$0x1]
    %31 = vrot.lane.b32.xlu0 %v30, 88
    %v32 = vpop.permute.xlu0 %31
    %vm33 = vcmask 786112
    %34 = vst.msk [vmem:[#allocation0] sm:$0x1] %vm33, %v32
    %s35 = scalar_lea.vmem %s0, 10
    %v36 = vld [vmem:[%s35] sm:$0x1]
    %37 = vrot.lane.b32.xlu0 %v36, 80
    %v38 = vpop.permute.xlu0 %37
    %vm39 = vcmask 720512
    %40 = vst.msk [vmem:[#allocation0] sm:$0x1] %vm39, %v38
    %s41 = scalar_lea.vmem %s0, 9
    %v42 = vld [vmem:[%s41] sm:$0x1]
    %43 = vrot.lane.b32.xlu0 %v42, 72
    %v44 = vpop.permute.xlu0 %43
    %vm45 = vcmask 654912
    %46 = vst.msk [vmem:[#allocation0] sm:$0x1] %vm45, %v44
    %s47 = scalar_lea.vmem %s0, 8
    %v48 = vld [vmem:[%s47] sm:$0x1]
    %49 = vrot.lane.b32.xlu0 %v48, 64
    %v50 = vpop.permute.xlu0 %49
    %vm51 = vcmask 589312
    %52 = vst.msk [vmem:[#allocation0] sm:$0x1] %vm51, %v50
    %s53 = scalar_lea.vmem %s0, 7
    %v54 = vld [vmem:[%s53] sm:$0x1]
    %55 = vrot.lane.b32.xlu0 %v54, 56
    %v56 = vpop.permute.xlu0 %55
    %vm57 = vcmask 523712
    %58 = vst.msk [vmem:[#allocation0] sm:$0x1] %vm57, %v56
    %s59 = scalar_lea.vmem %s0, 6
    %v60 = vld [vmem:[%s59] sm:$0x1]
    %61 = vrot.lane.b32.xlu0 %v60, 48
    %v62 = vpop.permute.xlu0 %61
    %vm63 = vcmask 458112
    %64 = vst.msk [vmem:[#allocation0] sm:$0x1] %vm63, %v62
    %s65 = scalar_lea.vmem %s0, 5
    %v66 = vld [vmem:[%s65] sm:$0x1]
    %67 = vrot.lane.b32.xlu0 %v66, 40
    %v68 = vpop.permute.xlu0 %67
    %vm69 = vcmask 392512
    %70 = vst.msk [vmem:[#allocation0] sm:$0x1] %vm69, %v68
    %s71 = scalar_lea.vmem %s0, 4
    %v72 = vld [vmem:[%s71] sm:$0x1]
    %73 = vrot.lane.b32.xlu0 %v72, 32
    %v74 = vpop.permute.xlu0 %73
    %vm75 = vcmask 326912
    %76 = vst.msk [vmem:[#allocation0] sm:$0x1] %vm75, %v74
    %s77 = scalar_lea.vmem %s0, 3
    %v78 = vld [vmem:[%s77] sm:$0x1]
    %79 = vrot.lane.b32.xlu0 %v78, 24
    %v80 = vpop.permute.xlu0 %79
    %vm81 = vcmask 261312
    %82 = vst.msk [vmem:[#allocation0] sm:$0x1] %vm81, %v80
    %s83 = scalar_lea.vmem %s0, 2
    %v84 = vld [vmem:[%s83] sm:$0x1]
    %85 = vrot.lane.b32.xlu0 %v84, 16
    %v86 = vpop.permute.xlu0 %85
    %vm87 = vcmask 195712
    %88 = vst.msk [vmem:[#allocation0] sm:$0x1] %vm87, %v86
    %s89 = scalar_lea.vmem %s0, 1
    %v90 = vld [vmem:[%s89] sm:$0x1]
    %91 = vrot.lane.b32.xlu0 %v90, 8
    %v92 = vpop.permute.xlu0 %91
    %vm93 = vcmask 130112
    %94 = vst.msk [vmem:[#allocation0] sm:$0x1] %vm93, %v92
    %s96 = sshllo.u32 0, 1
    %v98 = vld [vmem:[#allocation0] sm:%s96]
    %s99 = sshllo.u32 0, 1
    %100 = vst [vmem:[%s1] sm:%s99] %v98

// kernel: basic_block_forward_lane.5
$region0: #{basic_block_forward_lane.5}
  #allocation0 [shape = 'u32[]', space=smem, size = 0x4, offset = 0x4, fixed_abs, tag = 'smem constant byte address 0x4 - core index']
  #allocation1 [shape = 'u32[144,128]{1,0:T(1,128)}', space=vmem, size = 0x12000, scoped, tag = 'internal scratch']
  %s0 = inlined_call_operand.vmem [shape: f32[256,128], index: 0, kind: input, shape index: {}, may-alias: {0,4}]
  %s1 = inlined_call_operand.vmem [shape: f32[1,128], index: 1, kind: input, shape index: {}]
  %s2 = inlined_call_operand.vmem [shape: f32[1,128], index: 2, kind: input, shape index: {}]
  %s3 = inlined_call_operand.vmem [shape: f32[256,128], index: 3, kind: input, shape index: {}]
  %s4 = inlined_call_operand.vmem [shape: f32[256,128], index: 4, kind: output, shape index: {}, may-alias: {0,4}]
  %s5 = sld [smem:[#allocation0]]
  $region49: #{basic_block_forward_lane.5} parent=0
    _
  %s7 = ssub.s32 1, %s5
  %s8 = scalar_select 0, %s7, %s5
  loop: start=0, step=1, limit=4
  $region2: #{basic_block_forward_lane.5} parent=0 // loop_pre_header
    _
  $region3: #{basic_block_forward_lane.5} parent=0 // loop_header
    %s10 = sphi 0, %s14
    %p11 = scmp.ge.s32.totalorder %s10, 4
    %s20 = sphi 0, %s22
    %s23 = sphi 0, %s20
    %s24 = sphi 0, %s23
    %s40 = sphi 0, %s24
    %s44 = sphi 0, %s44
    %s46 = sphi 0, %s44
    %s47 = sphi 0, %s46
    %s61 = sphi 0, %s47
    %s65 = sphi 0, %s65
    %s67 = sphi 0, %s65
    %s68 = sphi 0, %s67
    %s82 = sphi 0, %s68
    %s88 = sphi 0, %s90
    %s91 = sphi 0, %s88
    %s92 = sphi 0, %s91
    %s108 = sphi 0, %s92
    %s114 = sphi 0, %s116
    %s117 = sphi 0, %s114
    %s118 = sphi 0, %s117
    %s134 = sphi 0, %s118
  $region4: #{basic_block_forward_lane.5} parent=0 // loop_header_branch
    %13 = sbr.rel (%p11) target = $region8
  $region5: #{basic_block_forward_lane.5} parent=0 // loop_body
    %s15 = ssub.s32 %s10, 1
    %s16 = ssub.s32 %s10, 2
    %s17 = sadd.s32 %s10, 1
    %s18 = ssub.s32 %s10, %s17
    %p19 = scmp.eq.s32.totalorder %s18, 0
    %s21 = sadd.s32 %s20, 1
    %s22 = scalar_select %p19, %s20, %s21
    %p25 = pneg %p19
    %p26 = scmp.eq.s32.totalorder %s10, 1
    %p27 = por %p25, %p26
    %p28 = scmp.ne.s32.totalorder %s20, %s23
    %p29 = scmp.eq.s32.totalorder %s10, 0
    %p30 = por %p28, %p29
    %p31 = scmp.ne.s32.totalorder %s20, %s23
    %p32 = scmp.eq.s32.totalorder %s15, 1
    %p33 = por %p31, %p32
    %p34 = scmp.ne.s32.totalorder %s23, %s24
    %p35 = scmp.eq.s32.totalorder %s15, 0
    %p36 = por %p34, %p35
    %p37 = scmp.ne.s32.totalorder %s23, %s24
    %p38 = scmp.eq.s32.totalorder %s16, 1
    %p39 = por %p37, %p38
    %p41 = scmp.ne.s32.totalorder %s24, %s40
    %p42 = scmp.eq.s32.totalorder %s16, 0
    %p43 = por %p41, %p42
    %s45 = sadd.s32 %s44, 1
    %p48 = scmp.eq.s32.totalorder %s10, 1
    %p49 = scmp.ne.s32.totalorder %s44, %s46
    %p50 = scmp.eq.s32.totalorder %s10, 0
    %p51 = por %p49, %p50
    %p52 = scmp.ne.s32.totalorder %s44, %s46
    %p53 = scmp.eq.s32.totalorder %s15, 1
    %p54 = por %p52, %p53
    %p55 = scmp.ne.s32.totalorder %s46, %s47
    %p56 = scmp.eq.s32.totalorder %s15, 0
    %p57 = por %p55, %p56
    %p58 = scmp.ne.s32.totalorder %s46, %s47
    %p59 = scmp.eq.s32.totalorder %s16, 1
    %p60 = por %p58, %p59
    %p62 = scmp.ne.s32.totalorder %s47, %s61
    %p63 = scmp.eq.s32.totalorder %s16, 0
    %p64 = por %p62, %p63
    %s66 = sadd.s32 %s65, 1
    %p69 = scmp.eq.s32.totalorder %s10, 1
    %p70 = scmp.ne.s32.totalorder %s65, %s67
    %p71 = scmp.eq.s32.totalorder %s10, 0
    %p72 = por %p70, %p71
    %p73 = scmp.ne.s32.totalorder %s65, %s67
    %p74 = scmp.eq.s32.totalorder %s15, 1
    %p75 = por %p73, %p74
    %p76 = scmp.ne.s32.totalorder %s67, %s68
    %p77 = scmp.eq.s32.totalorder %s15, 0
    %p78 = por %p76, %p77
    %p79 = scmp.ne.s32.totalorder %s67, %s68
    %p80 = scmp.eq.s32.totalorder %s16, 1
    %p81 = por %p79, %p80
    %p83 = scmp.ne.s32.totalorder %s68, %s82
    %p84 = scmp.eq.s32.totalorder %s16, 0
    %p85 = por %p83, %p84
    %s86 = ssub.s32 %s10, %s17
    %p87 = scmp.eq.s32.totalorder %s86, 0
    %s89 = sadd.s32 %s88, 1
    %s90 = scalar_select %p87, %s88, %s89
    %p93 = pneg %p87
    %p94 = scmp.eq.s32.totalorder %s10, 1
    %p95 = por %p93, %p94
    %p96 = scmp.ne.s32.totalorder %s88, %s91
    %p97 = scmp.eq.s32.totalorder %s10, 0
    %p98 = por %p96, %p97
    %p99 = scmp.ne.s32.totalorder %s88, %s91
    %p100 = scmp.eq.s32.totalorder %s15, 1
    %p101 = por %p99, %p100
    %p102 = scmp.ne.s32.totalorder %s91, %s92
    %p103 = scmp.eq.s32.totalorder %s15, 0
    %p104 = por %p102, %p103
    %p105 = scmp.ne.s32.totalorder %s91, %s92
    %p106 = scmp.eq.s32.totalorder %s16, 1
    %p107 = por %p105, %p106
    %p109 = scmp.ne.s32.totalorder %s92, %s108
    %p110 = scmp.eq.s32.totalorder %s16, 0
    %p111 = por %p109, %p110
    %s112 = ssub.s32 %s10, %s17
    %p113 = scmp.eq.s32.totalorder %s112, 0
    %s115 = sadd.s32 %s114, 1
    %s116 = scalar_select %p113, %s114, %s115
    %p119 = pneg %p113
    %p120 = scmp.eq.s32.totalorder %s10, 1
    %p121 = por %p119, %p120
    %p122 = scmp.ne.s32.totalorder %s114, %s117
    %p123 = scmp.eq.s32.totalorder %s10, 0
    %p124 = por %p122, %p123
    %p125 = scmp.ne.s32.totalorder %s114, %s117
    %p126 = scmp.eq.s32.totalorder %s15, 1
    %p127 = por %p125, %p126
    %p128 = scmp.ne.s32.totalorder %s117, %s118
    %p129 = scmp.eq.s32.totalorder %s15, 0
    %p130 = por %p128, %p129
    %p131 = scmp.ne.s32.totalorder %s117, %s118
    %p132 = scmp.eq.s32.totalorder %s16, 1
    %p133 = por %p131, %p132
    %p135 = scmp.ne.s32.totalorder %s118, %s134
    %p136 = scmp.eq.s32.totalorder %s16, 0
    %p137 = por %p135, %p136
    %p138 = scmp.le.s32.totalorder 1, %s10
    %p139 = scmp.lt.s32.totalorder %s10, 3
    %p140 = pnand %p138, %p139
    %p141 = pneg %p140
    // Predicated region
    $region9: #{basic_block_forward_lane.5} parent=5 // pred_check
      _
    $region10: #{basic_block_forward_lane.5} parent=5 // pred_check_branch
      %143 = sbr.rel (%p140) target = $region12
    $region11: #{basic_block_forward_lane.5} parent=5 // pred_region
      %s144 = ssub.s32 %s10, 1
      // Predicated region
      $region13: #{basic_block_forward_lane.5} parent=11 // pred_check
        %p145 = pneg %p57
      $region14: #{basic_block_forward_lane.5} parent=11 // pred_check_branch
        %147 = sbr.rel (%p145) target = $region16
      $region15: #{basic_block_forward_lane.5} parent=11 // pred_region
        _
      $region16: #{basic_block_forward_lane.5} parent=11 // pred_fallthru
        _
      // Predicated region
      $region17: #{basic_block_forward_lane.5} parent=11 // pred_check
        %p148 = pneg %p78
      $region18: #{basic_block_forward_lane.5} parent=11 // pred_check_branch
        %150 = sbr.rel (%p148) target = $region20
      $region19: #{basic_block_forward_lane.5} parent=11 // pred_region
        _
      $region20: #{basic_block_forward_lane.5} parent=11 // pred_fallthru
        _
    $region12: #{basic_block_forward_lane.5} parent=5 // pred_fallthru
      _
    %p151 = scmp.lt.s32.totalorder %s10, 2
    // Predicated region
    $region21: #{basic_block_forward_lane.5} parent=5 // pred_check
      %p152 = pneg %p151
    $region22: #{basic_block_forward_lane.5} parent=5 // pred_check_branch
      %154 = sbr.rel (%p152) target = $region24
    $region23: #{basic_block_forward_lane.5} parent=5 // pred_region
      // Predicated region
      $region25: #{basic_block_forward_lane.5} parent=23 // pred_check
        %p155 = pneg %p30
      $region26: #{basic_block_forward_lane.5} parent=23 // pred_check_branch
        %157 = sbr.rel (%p155) target = $region28
      $region27: #{basic_block_forward_lane.5} parent=23 // pred_region
        %s158 = smul.u32 16, %s10
        %p159 = scmp.lt.s32.totalorder %s158, 31
        %s160 = scalar_select %p159, %s158, 31
        %s161 = smul.addr %s160, 8
        %s162 = scalar_lea.vmem %s0, %s161
        %s163 = smul.u32 16, %s10
      $region28: #{basic_block_forward_lane.5} parent=23 // pred_fallthru
        _
      // Predicated region
      $region29: #{basic_block_forward_lane.5} parent=23 // pred_check
        %p164 = pneg %p98
      $region30: #{basic_block_forward_lane.5} parent=23 // pred_check_branch
        %166 = sbr.rel (%p164) target = $region32
      $region31: #{basic_block_forward_lane.5} parent=23 // pred_region
        %s167 = smul.u32 16, %s10
        %p168 = scmp.lt.s32.totalorder %s167, 31
        %s169 = scalar_select %p168, %s167, 31
        %s170 = smul.addr %s169, 8
        %s171 = scalar_lea.vmem %s3, %s170
        %s172 = smul.u32 16, %s10
      $region32: #{basic_block_forward_lane.5} parent=23 // pred_fallthru
        _
    $region24: #{basic_block_forward_lane.5} parent=5 // pred_fallthru
      _
    %p173 = scmp.le.s32.totalorder 1, %s10
    %p174 = scmp.lt.s32.totalorder %s10, 3
    %p175 = pnand %p173, %p174
    %p176 = pneg %p175
    // Predicated region
    $region33: #{basic_block_forward_lane.5} parent=5 // pred_check
      _
    $region34: #{basic_block_forward_lane.5} parent=5 // pred_check_branch
      %178 = sbr.rel (%p175) target = $region36
    $region35: #{basic_block_forward_lane.5} parent=5 // pred_region
      %s179 = ssub.s32 %s10, 1
      %s180 = smul.u32 16, %s15
      %p181 = scmp.lt.s32.totalorder %s180, 31
      %s182 = scalar_select %p181, %s180, 31
      %s183 = smul.addr %s182, 8
      %s184 = scalar_lea.vmem %s0, %s183
      %p185 = pneg %p36
      %p186 = pneg %p33
      %p187 = pneg %p57
      %p188 = pneg %p54
      %p189 = pneg %p78
      %p190 = pneg %p75
      %s191 = smul.u32 16, %s15
      %p192 = scmp.lt.s32.totalorder %s191, 31
      %s193 = scalar_select %p192, %s191, 31
      %s194 = smul.addr %s193, 8
      %s195 = scalar_lea.vmem %s3, %s194
      %p196 = pneg %p104
      %p197 = pneg %p101
      %p198 = pneg %p130
      %p199 = pneg %p127
      %s200 = smul.u32 16, %s15
      %p201 = scmp.lt.s32.totalorder %s200, 31
      %s202 = scalar_select %p201, %s200, 31
      %s203 = smul.addr %s202, 8
      %s204 = scalar_lea.vmem %s4, %s203
      %s205 = smul.u32 16, %s15
      %p206 = scmp.lt.s32.totalorder %s205, 31
      %s207 = scalar_select %p206, %s205, 31
      %s208 = smul.addr %s207, 8
      %s209 = scalar_lea.vmem %s0, %s208
      %s210 = smul.u32 16, %s15
      %s211 = smul.u32 16, %s15
      %p212 = scmp.lt.s32.totalorder %s211, 31
      %s213 = scalar_select %p212, %s211, 31
      %s214 = smul.addr %s213, 8
      %s215 = scalar_lea.vmem %s3, %s214
      %s216 = smul.u32 16, %s15
      %s217 = smul.u32 16, %s15
      %p218 = scmp.lt.s32.totalorder %s217, 31
      %s219 = scalar_select %p218, %s217, 31
      %s220 = smul.addr %s219, 8
      %s221 = scalar_lea.vmem %s4, %s220
      %s222 = smul.u32 16, %s15
      %v223 = vld [vmem:[%s209] sm:$0xff]
      %v224 = vld [vmem:[%s209 + $0x8] sm:$0xff]
      %v225 = vld [vmem:[%s209 + $0x10] sm:$0xff]
      %v226 = vld [vmem:[%s209 + $0x18] sm:$0xff]
      %v227 = vld [vmem:[%s209 + $0x20] sm:$0xff]
      %v228 = vld [vmem:[%s209 + $0x28] sm:$0xff]
      %v229 = vld [vmem:[%s209 + $0x30] sm:$0xff]
      %v230 = vld [vmem:[%s209 + $0x38] sm:$0xff]
      %v231 = vld [vmem:[%s209 + $0x40] sm:$0xff]
      %v232 = vld [vmem:[%s209 + $0x48] sm:$0xff]
      %v233 = vld [vmem:[%s209 + $0x50] sm:$0xff]
      %v234 = vld [vmem:[%s209 + $0x58] sm:$0xff]
      %v235 = vld [vmem:[%s209 + $0x60] sm:$0xff]
      %v236 = vld [vmem:[%s209 + $0x68] sm:$0xff]
      %v237 = vld [vmem:[%s209 + $0x70] sm:$0xff]
      %v238 = vld [vmem:[%s209 + $0x78] sm:$0xff]
      %v239 = vld [vmem:[%s1] sm:$0x1]
      %v241 = vlaneseq
      %v242 = vshrl.u32 %v241, 7
      %v243 = vsub.s32 0, %v242
      %v244 = vrot.slane %v239, %v243
      %v246 = vmul.f32 %v223, %v244
      %v247 = vmul.f32 %v224, %v244
      %v248 = vmul.f32 %v225, %v244
      %v249 = vmul.f32 %v226, %v244
      %v250 = vmul.f32 %v227, %v244
      %v251 = vmul.f32 %v228, %v244
      %v252 = vmul.f32 %v229, %v244
      %v253 = vmul.f32 %v230, %v244
      %v254 = vmul.f32 %v231, %v244
      %v255 = vmul.f32 %v232, %v244
      %v256 = vmul.f32 %v233, %v244
      %v257 = vmul.f32 %v234, %v244
      %v258 = vmul.f32 %v235, %v244
      %v259 = vmul.f32 %v236, %v244
      %v260 = vmul.f32 %v237, %v244
      %v261 = vmul.f32 %v238, %v244
      %v262 = vld [vmem:[%s2] sm:$0x1]
      %v264 = vlaneseq
      %v265 = vshrl.u32 %v264, 7
      %v266 = vsub.s32 0, %v265
      %v267 = vrot.slane %v262, %v266
      %v269 = vadd.f32 %v246, %v267
      %v270 = vadd.f32 %v247, %v267
      %v271 = vadd.f32 %v248, %v267
      %v272 = vadd.f32 %v249, %v267
      %v273 = vadd.f32 %v250, %v267
      %v274 = vadd.f32 %v251, %v267
      %v275 = vadd.f32 %v252, %v267
      %v276 = vadd.f32 %v253, %v267
      %v277 = vadd.f32 %v254, %v267
      %v278 = vadd.f32 %v255, %v267
      %v279 = vadd.f32 %v256, %v267
      %v280 = vadd.f32 %v257, %v267
      %v281 = vadd.f32 %v258, %v267
      %v282 = vadd.f32 %v259, %v267
      %v283 = vadd.f32 %v260, %v267
      %v284 = vadd.f32 %v261, %v267
      %v285 = vld [vmem:[%s215] sm:$0xff]
      %v286 = vld [vmem:[%s215 + $0x8] sm:$0xff]
      %v287 = vld [vmem:[%s215 + $0x10] sm:$0xff]
      %v288 = vld [vmem:[%s215 + $0x18] sm:$0xff]
      %v289 = vld [vmem:[%s215 + $0x20] sm:$0xff]
      %v290 = vld [vmem:[%s215 + $0x28] sm:$0xff]
      %v291 = vld [vmem:[%s215 + $0x30] sm:$0xff]
      %v292 = vld [vmem:[%s215 + $0x38] sm:$0xff]
      %v293 = vld [vmem:[%s215 + $0x40] sm:$0xff]
      %v294 = vld [vmem:[%s215 + $0x48] sm:$0xff]
      %v295 = vld [vmem:[%s215 + $0x50] sm:$0xff]
      %v296 = vld [vmem:[%s215 + $0x58] sm:$0xff]
      %v297 = vld [vmem:[%s215 + $0x60] sm:$0xff]
      %v298 = vld [vmem:[%s215 + $0x68] sm:$0xff]
      %v299 = vld [vmem:[%s215 + $0x70] sm:$0xff]
      %v300 = vld [vmem:[%s215 + $0x78] sm:$0xff]
      %v301 = vadd.f32 %v269, %v285
      %v302 = vadd.f32 %v270, %v286
      %v303 = vadd.f32 %v271, %v287
      %v304 = vadd.f32 %v272, %v288
      %v305 = vadd.f32 %v273, %v289
      %v306 = vadd.f32 %v274, %v290
      %v307 = vadd.f32 %v275, %v291
      %v308 = vadd.f32 %v276, %v292
      %v309 = vadd.f32 %v277, %v293
      %v310 = vadd.f32 %v278, %v294
      %v311 = vadd.f32 %v279, %v295
      %v312 = vadd.f32 %v280, %v296
      %v313 = vadd.f32 %v281, %v297
      %v314 = vadd.f32 %v282, %v298
      %v315 = vadd.f32 %v283, %v299
      %v316 = vadd.f32 %v284, %v300
      %v317 = vmax.f32 %v301, 0.0
      %v318 = vmax.f32 %v302, 0.0
      %v319 = vmax.f32 %v303, 0.0
      %v320 = vmax.f32 %v304, 0.0
      %v321 = vmax.f32 %v305, 0.0
      %v322 = vmax.f32 %v306, 0.0
      %v323 = vmax.f32 %v307, 0.0
      %v324 = vmax.f32 %v308, 0.0
      %v325 = vmax.f32 %v309, 0.0
      %v326 = vmax.f32 %v310, 0.0
      %v327 = vmax.f32 %v311, 0.0
      %v328 = vmax.f32 %v312, 0.0
      %v329 = vmax.f32 %v313, 0.0
      %v330 = vmax.f32 %v314, 0.0
      %v331 = vmax.f32 %v315, 0.0
      %v332 = vmax.f32 %v316, 0.0
      %333 = vst [vmem:[%s221] sm:$0xff] %v317
      %334 = vst [vmem:[%s221 + $0x8] sm:$0xff] %v318
      %335 = vst [vmem:[%s221 + $0x10] sm:$0xff] %v319
      %336 = vst [vmem:[%s221 + $0x18] sm:$0xff] %v320
      %337 = vst [vmem:[%s221 + $0x20] sm:$0xff] %v321
      %338 = vst [vmem:[%s221 + $0x28] sm:$0xff] %v322
      %339 = vst [vmem:[%s221 + $0x30] sm:$0xff] %v323
      %340 = vst [vmem:[%s221 + $0x38] sm:$0xff] %v324
      %341 = vst [vmem:[%s221 + $0x40] sm:$0xff] %v325
      %342 = vst [vmem:[%s221 + $0x48] sm:$0xff] %v326
      %343 = vst [vmem:[%s221 + $0x50] sm:$0xff] %v327
      %344 = vst [vmem:[%s221 + $0x58] sm:$0xff] %v328
      %345 = vst [vmem:[%s221 + $0x60] sm:$0xff] %v329
      %346 = vst [vmem:[%s221 + $0x68] sm:$0xff] %v330
      %347 = vst [vmem:[%s221 + $0x70] sm:$0xff] %v331
      %348 = vst [vmem:[%s221 + $0x78] sm:$0xff] %v332
      %s349 = smul.u32 16, %s15
      %p350 = scmp.lt.s32.totalorder %s349, 31
      %s351 = scalar_select %p350, %s349, 31
      %s352 = smul.addr %s351, 8
      %s353 = scalar_lea.vmem %s4, %s352
      // Predicated region
      $region37: #{basic_block_forward_lane.5} parent=35 // pred_check
        %p354 = pneg %p127
      $region38: #{basic_block_forward_lane.5} parent=35 // pred_check_branch
        %356 = sbr.rel (%p354) target = $region40
      $region39: #{basic_block_forward_lane.5} parent=35 // pred_region
        %s357 = smul.u32 16, %s15
      $region40: #{basic_block_forward_lane.5} parent=35 // pred_fallthru
        _
    $region36: #{basic_block_forward_lane.5} parent=5 // pred_fallthru
      _
    %p358 = scmp.le.s32.totalorder 2, %s10
    // Predicated region
    $region41: #{basic_block_forward_lane.5} parent=5 // pred_check
      %p359 = pneg %p358
    $region42: #{basic_block_forward_lane.5} parent=5 // pred_check_branch
      %361 = sbr.rel (%p359) target = $region44
    $region43: #{basic_block_forward_lane.5} parent=5 // pred_region
      %s362 = ssub.s32 %s10, 2
      // Predicated region
      $region45: #{basic_block_forward_lane.5} parent=43 // pred_check
        %p363 = pneg %p133
      $region46: #{basic_block_forward_lane.5} parent=43 // pred_check_branch
        %365 = sbr.rel (%p363) target = $region48
      $region47: #{basic_block_forward_lane.5} parent=43 // pred_region
        %s366 = smul.u32 16, %s16
        %p367 = scmp.lt.s32.totalorder %s366, 31
        %s368 = scalar_select %p367, %s366, 31
        %s369 = smul.addr %s368, 8
        %s370 = scalar_lea.vmem %s4, %s369
      $region48: #{basic_block_forward_lane.5} parent=43 // pred_fallthru
        _
    $region44: #{basic_block_forward_lane.5} parent=5 // pred_fallthru
      _
  $region6: #{basic_block_forward_lane.5} parent=0 // loop_footer
    %s14 = sadd.s32 1, %s10
  $region7: #{basic_block_forward_lane.5} parent=0 // loop_footer_branch
    %9 = sbr.rel target = $region3
  $region8: #{basic_block_forward_lane.5} parent=0 // loop_exit
    _

// kernel: basic_block_forward_lane.3
$region0: #{basic_block_forward_lane.3}
  #allocation0 [shape = 'u32[]', space=smem, size = 0x4, offset = 0x4, fixed_abs, tag = 'smem constant byte address 0x4 - core index']
  #allocation1 [shape = 'u32[144,128]{1,0:T(1,128)}', space=vmem, size = 0x12000, scoped, tag = 'internal scratch']
  %s0 = inlined_call_operand.hbm [shape: f32[256,128], index: 0, kind: input, shape index: {}]
  %s1 = inlined_call_operand.hbm [shape: f32[3,128,128], index: 1, kind: input, shape index: {}]
  %s2 = inlined_call_operand.vmem [shape: f32[256,128], index: 2, kind: output, shape index: {0}]
  %s3 = inlined_call_operand.vmem [shape: f32[2,1,128], index: 3, kind: output, shape index: {1}]
  %s4 = inlined_call_operand.vmem [shape: f32[2,1,128], index: 4, kind: output, shape index: {2}]
  %5 = xla_tuple %s2, %s3, %s4
  %s6 = sld [smem:[#allocation0]]
  $region65: #{basic_block_forward_lane.3} parent=0
    _
  %s8 = ssub.s32 1, %s6
  %s9 = scalar_select 0, %s8, %s6
  $region1: #{basic_block_forward_lane.3} parent=0
    #allocation2 [shape = 'u8[131072]{0}', space=vmem, size = 0x20000, scoped, tag = 'input window, operand 0']
    #allocation3 [shape = 's32[2]{0}', space=sflag, size = 0x8, scoped, tag = 'scoped memory for basic_block_forward_lane.3']
    #allocation4 [shape = 'u8[196608]{0}', space=vmem, size = 0x30000, scoped, tag = 'input window, operand 1, single buffered']
    #allocation5 [shape = 's32[1]{0}', space=sflag, size = 0x4, scoped, tag = 'scoped memory for basic_block_forward_lane.3']
    %10 = vsyncpa [#allocation3], 0
    %s11 = scalar_lea.sflag [#allocation3], 1
    %12 = vsyncpa %s11, 0
    %13 = vsyncpa [#allocation5], 0
    loop: start=0, step=1, limit=4
    $region2: #{basic_block_forward_lane.3} parent=1 // loop_pre_header
      _
    $region3: #{basic_block_forward_lane.3} parent=1 // loop_header
      %s15 = sphi 0, %s19
      %p16 = scmp.ge.s32.totalorder %s15, 4
      %s25 = sphi 0, %s27
      %s28 = sphi 0, %s25
      %s29 = sphi 0, %s28
      %s45 = sphi 0, %s29
      %s49 = sphi 0, %s49
      %s51 = sphi 0, %s49
      %s52 = sphi 0, %s51
      %s66 = sphi 0, %s52
      %s72 = sphi 0, %s74
      %s75 = sphi 0, %s72
      %s76 = sphi 0, %s75
      %s92 = sphi 0, %s76
      %s98 = sphi 0, %s100
      %s101 = sphi 0, %s98
      %s102 = sphi 0, %s101
      %s118 = sphi 0, %s102
      %s124 = sphi 0, %s126
      %s127 = sphi 0, %s124
      %s128 = sphi 0, %s127
      %s144 = sphi 0, %s128
    $region4: #{basic_block_forward_lane.3} parent=1 // loop_header_branch
      %18 = sbr.rel (%p16) target = $region8
    $region5: #{basic_block_forward_lane.3} parent=1 // loop_body
      %s20 = ssub.s32 %s15, 1
      %s21 = ssub.s32 %s15, 2
      %s22 = sadd.s32 %s15, 1
      %s23 = ssub.s32 %s15, %s22
      %p24 = scmp.eq.s32.totalorder %s23, 0
      %s26 = sadd.s32 %s25, 1
      %s27 = scalar_select %p24, %s25, %s26
      %p30 = pneg %p24
      %p31 = scmp.eq.s32.totalorder %s15, 1
      %p32 = por %p30, %p31
      %p33 = scmp.ne.s32.totalorder %s25, %s28
      %p34 = scmp.eq.s32.totalorder %s15, 0
      %p35 = por %p33, %p34
      %p36 = scmp.ne.s32.totalorder %s25, %s28
      %p37 = scmp.eq.s32.totalorder %s20, 1
      %p38 = por %p36, %p37
      %p39 = scmp.ne.s32.totalorder %s28, %s29
      %p40 = scmp.eq.s32.totalorder %s20, 0
      %p41 = por %p39, %p40
      %p42 = scmp.ne.s32.totalorder %s28, %s29
      %p43 = scmp.eq.s32.totalorder %s21, 1
      %p44 = por %p42, %p43
      %p46 = scmp.ne.s32.totalorder %s29, %s45
      %p47 = scmp.eq.s32.totalorder %s21, 0
      %p48 = por %p46, %p47
      %s50 = sadd.s32 %s49, 1
      %p53 = scmp.eq.s32.totalorder %s15, 1
      %p54 = scmp.ne.s32.totalorder %s49, %s51
      %p55 = scmp.eq.s32.totalorder %s15, 0
      %p56 = por %p54, %p55
      %p57 = scmp.ne.s32.totalorder %s49, %s51
      %p58 = scmp.eq.s32.totalorder %s20, 1
      %p59 = por %p57, %p58
      %p60 = scmp.ne.s32.totalorder %s51, %s52
      %p61 = scmp.eq.s32.totalorder %s20, 0
      %p62 = por %p60, %p61
      %p63 = scmp.ne.s32.totalorder %s51, %s52
      %p64 = scmp.eq.s32.totalorder %s21, 1
      %p65 = por %p63, %p64
      %p67 = scmp.ne.s32.totalorder %s52, %s66
      %p68 = scmp.eq.s32.totalorder %s21, 0
      %p69 = por %p67, %p68
      %s70 = ssub.s32 %s15, %s22
      %p71 = scmp.eq.s32.totalorder %s70, 0
      %s73 = sadd.s32 %s72, 1
      %s74 = scalar_select %p71, %s72, %s73
      %p77 = pneg %p71
      %p78 = scmp.eq.s32.totalorder %s15, 1
      %p79 = por %p77, %p78
      %p80 = scmp.ne.s32.totalorder %s72, %s75
      %p81 = scmp.eq.s32.totalorder %s15, 0
      %p82 = por %p80, %p81
      %p83 = scmp.ne.s32.totalorder %s72, %s75
      %p84 = scmp.eq.s32.totalorder %s20, 1
      %p85 = por %p83, %p84
      %p86 = scmp.ne.s32.totalorder %s75, %s76
      %p87 = scmp.eq.s32.totalorder %s20, 0
      %p88 = por %p86, %p87
      %p89 = scmp.ne.s32.totalorder %s75, %s76
      %p90 = scmp.eq.s32.totalorder %s21, 1
      %p91 = por %p89, %p90
      %p93 = scmp.ne.s32.totalorder %s76, %s92
      %p94 = scmp.eq.s32.totalorder %s21, 0
      %p95 = por %p93, %p94
      %s96 = ssub.s32 %s15, %s22
      %p97 = scmp.eq.s32.totalorder %s96, 0
      %s99 = sadd.s32 %s98, 1
      %s100 = scalar_select %p97, %s98, %s99
      %p103 = pneg %p97
      %p104 = scmp.eq.s32.totalorder %s15, 1
      %p105 = por %p103, %p104
      %p106 = scmp.ne.s32.totalorder %s98, %s101
      %p107 = scmp.eq.s32.totalorder %s15, 0
      %p108 = por %p106, %p107
      %p109 = scmp.ne.s32.totalorder %s98, %s101
      %p110 = scmp.eq.s32.totalorder %s20, 1
      %p111 = por %p109, %p110
      %p112 = scmp.ne.s32.totalorder %s101, %s102
      %p113 = scmp.eq.s32.totalorder %s20, 0
      %p114 = por %p112, %p113
      %p115 = scmp.ne.s32.totalorder %s101, %s102
      %p116 = scmp.eq.s32.totalorder %s21, 1
      %p117 = por %p115, %p116
      %p119 = scmp.ne.s32.totalorder %s102, %s118
      %p120 = scmp.eq.s32.totalorder %s21, 0
      %p121 = por %p119, %p120
      %s122 = ssub.s32 %s15, %s22
      %p123 = scmp.eq.s32.totalorder %s122, 0
      %s125 = sadd.s32 %s124, 1
      %s126 = scalar_select %p123, %s124, %s125
      %p129 = pneg %p123
      %p130 = scmp.eq.s32.totalorder %s15, 1
      %p131 = por %p129, %p130
      %p132 = scmp.ne.s32.totalorder %s124, %s127
      %p133 = scmp.eq.s32.totalorder %s15, 0
      %p134 = por %p132, %p133
      %p135 = scmp.ne.s32.totalorder %s124, %s127
      %p136 = scmp.eq.s32.totalorder %s20, 1
      %p137 = por %p135, %p136
      %p138 = scmp.ne.s32.totalorder %s127, %s128
      %p139 = scmp.eq.s32.totalorder %s20, 0
      %p140 = por %p138, %p139
      %p141 = scmp.ne.s32.totalorder %s127, %s128
      %p142 = scmp.eq.s32.totalorder %s21, 1
      %p143 = por %p141, %p142
      %p145 = scmp.ne.s32.totalorder %s128, %s144
      %p146 = scmp.eq.s32.totalorder %s21, 0
      %p147 = por %p145, %p146
      %p148 = scmp.le.s32.totalorder 1, %s15
      %p149 = scmp.lt.s32.totalorder %s15, 3
      %p150 = pnand %p148, %p149
      %p151 = pneg %p150
      // Predicated region
      $region9: #{basic_block_forward_lane.3} parent=5 // pred_check
        _
      $region10: #{basic_block_forward_lane.3} parent=5 // pred_check_branch
        %153 = sbr.rel (%p150) target = $region12
      $region11: #{basic_block_forward_lane.3} parent=5 // pred_region
        %s154 = ssub.s32 %s15, 1
        // Predicated region
        $region13: #{basic_block_forward_lane.3} parent=11 // pred_check
          %p155 = pneg %p62
        $region14: #{basic_block_forward_lane.3} parent=11 // pred_check_branch
          %157 = sbr.rel (%p155) target = $region16
        $region15: #{basic_block_forward_lane.3} parent=11 // pred_region
          %s159 = ssub.s32 6144, 6144
          %160 = vsyncadd [#allocation5], %s159
          %s161 = sshll.u32 [#allocation4], 4
          %s162 = int_to_ptr.vmem [resolvable:$true] %s161
          %167 = dma.hbm_to_vmem [thread:$0]  %s1, 6144, %s162, [#allocation5], 128, 128, 8
        $region16: #{basic_block_forward_lane.3} parent=11 // pred_fallthru
          _
      $region12: #{basic_block_forward_lane.3} parent=5 // pred_fallthru
        _
      %p168 = scmp.lt.s32.totalorder %s15, 2
      // Predicated region
      $region17: #{basic_block_forward_lane.3} parent=5 // pred_check
        %p169 = pneg %p168
      $region18: #{basic_block_forward_lane.3} parent=5 // pred_check_branch
        %171 = sbr.rel (%p169) target = $region20
      $region19: #{basic_block_forward_lane.3} parent=5 // pred_region
        // Predicated region
        $region21: #{basic_block_forward_lane.3} parent=19 // pred_check
          %p172 = pneg %p35
        $region22: #{basic_block_forward_lane.3} parent=19 // pred_check_branch
          %174 = sbr.rel (%p172) target = $region24
        $region23: #{basic_block_forward_lane.3} parent=19 // pred_region
          %s175 = sand.u32 %s25, 1
          %s176 = scalar_lea.sflag [#allocation3], %s175
          %s177 = sand.u32 %s25, 1
          %s178 = smul.addr %s177, 128
          %s179 = scalar_lea.vmem [#allocation2], %s178
          %s180 = smul.u32 16, %s15
          %s182 = ssub.s32 2048, 2048
          %183 = vsyncadd %s176, %s182
          %s184 = smul.addr %s180, 128
          %s185 = scalar_lea.hbm %s0, %s184
          %s186 = sshll.u32 %s179, 4
          %s187 = int_to_ptr.vmem [resolvable:$true] %s186
          %192 = dma.hbm_to_vmem [thread:$0]  %s185, 2048, %s187, %s176, 128, 128, 8
        $region24: #{basic_block_forward_lane.3} parent=19 // pred_fallthru
          _
      $region20: #{basic_block_forward_lane.3} parent=5 // pred_fallthru
        _
      %p193 = scmp.le.s32.totalorder 1, %s15
      %p194 = scmp.lt.s32.totalorder %s15, 3
      %p195 = pnand %p193, %p194
      %p196 = pneg %p195
      // Predicated region
      $region25: #{basic_block_forward_lane.3} parent=5 // pred_check
        _
      $region26: #{basic_block_forward_lane.3} parent=5 // pred_check_branch
        %198 = sbr.rel (%p195) target = $region28
      $region27: #{basic_block_forward_lane.3} parent=5 // pred_region
        %s199 = ssub.s32 %s15, 1
        %s200 = sand.u32 %s28, 1
        %s201 = scalar_lea.sflag [#allocation3], %s200
        %s202 = sand.u32 %s28, 1
        %s203 = smul.addr %s202, 128
        %s204 = scalar_lea.vmem [#allocation2], %s203
        // Predicated region
        $region29: #{basic_block_forward_lane.3} parent=27 // pred_check
          %p205 = pneg %p41
        $region30: #{basic_block_forward_lane.3} parent=27 // pred_check_branch
          %207 = sbr.rel (%p205) target = $region32
        $region31: #{basic_block_forward_lane.3} parent=27 // pred_region
          %208 = dma.done %s201, 2048
        $region32: #{basic_block_forward_lane.3} parent=27 // pred_fallthru
          _
        // Predicated region
        $region33: #{basic_block_forward_lane.3} parent=27 // pred_check
          %p209 = pneg %p62
        $region34: #{basic_block_forward_lane.3} parent=27 // pred_check_branch
          %211 = sbr.rel (%p209) target = $region36
        $region35: #{basic_block_forward_lane.3} parent=27 // pred_region
          %212 = dma.done [#allocation5], 6144
        $region36: #{basic_block_forward_lane.3} parent=27 // pred_fallthru
          _
        %s213 = sand.u32 %s28, 1
        %s214 = scalar_lea.sflag [#allocation3], %s213
        %s215 = sand.u32 %s28, 1
        %s216 = smul.addr %s215, 128
        %s217 = scalar_lea.vmem [#allocation2], %s216
        %p218 = pneg %p41
        %p219 = pneg %p38
        %p220 = pneg %p62
        %p221 = pneg %p59
        %p222 = pneg %p88
        %p223 = pneg %p85
        %s224 = smul.u32 16, %s20
        %p225 = scmp.lt.s32.totalorder %s224, 31
        %s226 = scalar_select %p225, %s224, 31
        %s227 = smul.addr %s226, 8
        %s228 = scalar_lea.vmem %s2, %s227
        %p229 = pneg %p114
        %p230 = pneg %p111
        %p231 = scmp.lt.s32.totalorder %s20, 1
        %s232 = scalar_select %p231, %s20, 1
        %s233 = scalar_lea.vmem %s3, %s232
        %p234 = pneg %p140
        %p235 = pneg %p137
        %p236 = scmp.lt.s32.totalorder %s20, 1
        %s237 = scalar_select %p236, %s20, 1
        %s238 = scalar_lea.vmem %s4, %s237
        %s239 = smul.u32 16, %s20
        %s240 = smul.u32 16, %s20
        %p241 = scmp.lt.s32.totalorder %s240, 31
        %s242 = scalar_select %p241, %s240, 31
        %s243 = smul.addr %s242, 8
        %s244 = scalar_lea.vmem %s2, %s243
        %s245 = smul.u32 16, %s20
        %p246 = scmp.lt.s32.totalorder %s20, 1
        %s247 = scalar_select %p246, %s20, 1
        %s248 = scalar_lea.vmem %s3, %s247
        %p249 = scmp.lt.s32.totalorder %s20, 1
        %s250 = scalar_select %p249, %s20, 1
        %s251 = scalar_lea.vmem %s4, %s250
        %v252 = vld [vmem:[%s204] sm:$0xff]
        %v253 = vld [vmem:[%s204 + $0x8] sm:$0xff]
        %v254 = vld [vmem:[%s204 + $0x10] sm:$0xff]
        %v255 = vld [vmem:[%s204 + $0x18] sm:$0xff]
        %v256 = vld [vmem:[%s204 + $0x20] sm:$0xff]
        %v257 = vld [vmem:[%s204 + $0x28] sm:$0xff]
        %v258 = vld [vmem:[%s204 + $0x30] sm:$0xff]
        %v259 = vld [vmem:[%s204 + $0x38] sm:$0xff]
        %v260 = vld [vmem:[%s204 + $0x40] sm:$0xff]
        %v261 = vld [vmem:[%s204 + $0x48] sm:$0xff]
        %v262 = vld [vmem:[%s204 + $0x50] sm:$0xff]
        %v263 = vld [vmem:[%s204 + $0x58] sm:$0xff]
        %v264 = vld [vmem:[%s204 + $0x60] sm:$0xff]
        %v265 = vld [vmem:[%s204 + $0x68] sm:$0xff]
        %v266 = vld [vmem:[%s204 + $0x70] sm:$0xff]
        %v267 = vld [vmem:[%s204 + $0x78] sm:$0xff]
        %v268 = vlaneseq
        %v269 = vshrl.u32 %v268, 7
        %v270 = vadd.s32 %v269, 8
        %v271 = vadd.s32 %v269, 16
        %v272 = vadd.s32 %v269, 24
        %v273 = vadd.s32 %v269, 32
        %v274 = vadd.s32 %v269, 40
        %v275 = vadd.s32 %v269, 48
        %v276 = vadd.s32 %v269, 56
        %v277 = vadd.s32 %v269, 64
        %v278 = vadd.s32 %v269, 72
        %v279 = vadd.s32 %v269, 80
        %v280 = vadd.s32 %v269, 88
        %v281 = vadd.s32 %v269, 96
        %v282 = vadd.s32 %v269, 104
        %v283 = vadd.s32 %v269, 112
        %v284 = vadd.s32 %v269, 120
        %vm285 = vcmp.lt.s32.totalorder %v269, 0
        %v286 = vsub.s32 0, %v269
        %v287 = vsel %vm285, %v286, %v269
        %v288 = vshrl.u32 %v287, 4
        %v289 = vand.u32 %v287, 15
        %v290 = vsub.s32 0, %v289
        %v291 = vsel %vm285, %v290, %v289
        %vm292 = vcmp.lt.s32.totalorder %v270, 0
        %v293 = vsub.s32 0, %v270
        %v294 = vsel %vm292, %v293, %v270
        %v295 = vshrl.u32 %v294, 4
        %v296 = vand.u32 %v294, 15
        %v297 = vsub.s32 0, %v296
        %v298 = vsel %vm292, %v297, %v296
        %vm299 = vcmp.lt.s32.totalorder %v271, 0
        %v300 = vsub.s32 0, %v271
        %v301 = vsel %vm299, %v300, %v271
        %v302 = vshrl.u32 %v301, 4
        %v303 = vand.u32 %v301, 15
        %v304 = vsub.s32 0, %v303
        %v305 = vsel %vm299, %v304, %v303
        %vm306 = vcmp.lt.s32.totalorder %v272, 0
        %v307 = vsub.s32 0, %v272
        %v308 = vsel %vm306, %v307, %v272
        %v309 = vshrl.u32 %v308, 4
        %v310 = vand.u32 %v308, 15
        %v311 = vsub.s32 0, %v310
        %v312 = vsel %vm306, %v311, %v310
        %vm313 = vcmp.lt.s32.totalorder %v273, 0
        %v314 = vsub.s32 0, %v273
        %v315 = vsel %vm313, %v314, %v273
        %v316 = vshrl.u32 %v315, 4
        %v317 = vand.u32 %v315, 15
        %v318 = vsub.s32 0, %v317
        %v319 = vsel %vm313, %v318, %v317
        %vm320 = vcmp.lt.s32.totalorder %v274, 0
        %v321 = vsub.s32 0, %v274
        %v322 = vsel %vm320, %v321, %v274
        %v323 = vshrl.u32 %v322, 4
        %v324 = vand.u32 %v322, 15
        %v325 = vsub.s32 0, %v324
        %v326 = vsel %vm320, %v325, %v324
        %vm327 = vcmp.lt.s32.totalorder %v275, 0
        %v328 = vsub.s32 0, %v275
        %v329 = vsel %vm327, %v328, %v275
        %v330 = vshrl.u32 %v329, 4
        %v331 = vand.u32 %v329, 15
        %v332 = vsub.s32 0, %v331
        %v333 = vsel %vm327, %v332, %v331
        %vm334 = vcmp.lt.s32.totalorder %v276, 0
        %v335 = vsub.s32 0, %v276
        %v336 = vsel %vm334, %v335, %v276
        %v337 = vshrl.u32 %v336, 4
        %v338 = vand.u32 %v336, 15
        %v339 = vsub.s32 0, %v338
        %v340 = vsel %vm334, %v339, %v338
        %vm341 = vcmp.lt.s32.totalorder %v277, 0
        %v342 = vsub.s32 0, %v277
        %v343 = vsel %vm341, %v342, %v277
        %v344 = vshrl.u32 %v343, 4
        %v345 = vand.u32 %v343, 15
        %v346 = vsub.s32 0, %v345
        %v347 = vsel %vm341, %v346, %v345
        %vm348 = vcmp.lt.s32.totalorder %v278, 0
        %v349 = vsub.s32 0, %v278
        %v350 = vsel %vm348, %v349, %v278
        %v351 = vshrl.u32 %v350, 4
        %v352 = vand.u32 %v350, 15
        %v353 = vsub.s32 0, %v352
        %v354 = vsel %vm348, %v353, %v352
        %vm355 = vcmp.lt.s32.totalorder %v279, 0
        %v356 = vsub.s32 0, %v279
        %v357 = vsel %vm355, %v356, %v279
        %v358 = vshrl.u32 %v357, 4
        %v359 = vand.u32 %v357, 15
        %v360 = vsub.s32 0, %v359
        %v361 = vsel %vm355, %v360, %v359
        %vm362 = vcmp.lt.s32.totalorder %v280, 0
        %v363 = vsub.s32 0, %v280
        %v364 = vsel %vm362, %v363, %v280
        %v365 = vshrl.u32 %v364, 4
        %v366 = vand.u32 %v364, 15
        %v367 = vsub.s32 0, %v366
        %v368 = vsel %vm362, %v367, %v366
        %vm369 = vcmp.lt.s32.totalorder %v281, 0
        %v370 = vsub.s32 0, %v281
        %v371 = vsel %vm369, %v370, %v281
        %v372 = vshrl.u32 %v371, 4
        %v373 = vand.u32 %v371, 15
        %v374 = vsub.s32 0, %v373
        %v375 = vsel %vm369, %v374, %v373
        %vm376 = vcmp.lt.s32.totalorder %v282, 0
        %v377 = vsub.s32 0, %v282
        %v378 = vsel %vm376, %v377, %v282
        %v379 = vshrl.u32 %v378, 4
        %v380 = vand.u32 %v378, 15
        %v381 = vsub.s32 0, %v380
        %v382 = vsel %vm376, %v381, %v380
        %vm383 = vcmp.lt.s32.totalorder %v283, 0
        %v384 = vsub.s32 0, %v283
        %v385 = vsel %vm383, %v384, %v283
        %v386 = vshrl.u32 %v385, 4
        %v387 = vand.u32 %v385, 15
        %v388 = vsub.s32 0, %v387
        %v389 = vsel %vm383, %v388, %v387
        %vm390 = vcmp.lt.s32.totalorder %v284, 0
        %v391 = vsub.s32 0, %v284
        %v392 = vsel %vm390, %v391, %v284
        %v393 = vshrl.u32 %v392, 4
        %v394 = vand.u32 %v392, 15
        %v395 = vsub.s32 0, %v394
        %v396 = vsel %vm390, %v395, %v394
        %vm397 = vcmp.ne.s32.totalorder %v291, 0
        %vm398 = vcmp.ne.s32.totalorder %v298, 0
        %vm399 = vcmp.ne.s32.totalorder %v305, 0
        %vm400 = vcmp.ne.s32.totalorder %v312, 0
        %vm401 = vcmp.ne.s32.totalorder %v319, 0
        %vm402 = vcmp.ne.s32.totalorder %v326, 0
        %vm403 = vcmp.ne.s32.totalorder %v333, 0
        %vm404 = vcmp.ne.s32.totalorder %v340, 0
        %vm405 = vcmp.ne.s32.totalorder %v347, 0
        %vm406 = vcmp.ne.s32.totalorder %v354, 0
        %vm407 = vcmp.ne.s32.totalorder %v361, 0
        %vm408 = vcmp.ne.s32.totalorder %v368, 0
        %vm409 = vcmp.ne.s32.totalorder %v375, 0
        %vm410 = vcmp.ne.s32.totalorder %v382, 0
        %vm411 = vcmp.ne.s32.totalorder %v389, 0
        %vm412 = vcmp.ne.s32.totalorder %v396, 0
        %vm413 = vcmp.lt.s32.totalorder %v291, 0
        %vm414 = vcmp.lt.s32.totalorder %v298, 0
        %vm415 = vcmp.lt.s32.totalorder %v305, 0
        %vm416 = vcmp.lt.s32.totalorder %v312, 0
        %vm417 = vcmp.lt.s32.totalorder %v319, 0
        %vm418 = vcmp.lt.s32.totalorder %v326, 0
        %vm419 = vcmp.lt.s32.totalorder %v333, 0
        %vm420 = vcmp.lt.s32.totalorder %v340, 0
        %vm421 = vcmp.lt.s32.totalorder %v347, 0
        %vm422 = vcmp.lt.s32.totalorder %v354, 0
        %vm423 = vcmp.lt.s32.totalorder %v361, 0
        %vm424 = vcmp.lt.s32.totalorder %v368, 0
        %vm425 = vcmp.lt.s32.totalorder %v375, 0
        %vm426 = vcmp.lt.s32.totalorder %v382, 0
        %vm427 = vcmp.lt.s32.totalorder %v389, 0
        %vm428 = vcmp.lt.s32.totalorder %v396, 0
        %vm429 = vmand %vm413, %vm397
        %vm430 = vmand %vm414, %vm398
        %vm431 = vmand %vm415, %vm399
        %vm432 = vmand %vm416, %vm400
        %vm433 = vmand %vm417, %vm401
        %vm434 = vmand %vm418, %vm402
        %vm435 = vmand %vm419, %vm403
        %vm436 = vmand %vm420, %vm404
        %vm437 = vmand %vm421, %vm405
        %vm438 = vmand %vm422, %vm406
        %vm439 = vmand %vm423, %vm407
        %vm440 = vmand %vm424, %vm408
        %vm441 = vmand %vm425, %vm409
        %vm442 = vmand %vm426, %vm410
        %vm443 = vmand %vm427, %vm411
        %vm444 = vmand %vm428, %vm412
        %v445 = vadd.s32 %v291, 16
        %v446 = vadd.s32 %v298, 16
        %v447 = vadd.s32 %v305, 16
        %v448 = vadd.s32 %v312, 16
        %v449 = vadd.s32 %v319, 16
        %v450 = vadd.s32 %v326, 16
        %v451 = vadd.s32 %v333, 16
        %v452 = vadd.s32 %v340, 16
        %v453 = vadd.s32 %v347, 16
        %v454 = vadd.s32 %v354, 16
        %v455 = vadd.s32 %v361, 16
        %v456 = vadd.s32 %v368, 16
        %v457 = vadd.s32 %v375, 16
        %v458 = vadd.s32 %v382, 16
        %v459 = vadd.s32 %v389, 16
        %v460 = vadd.s32 %v396, 16
        %v461 = vsel %vm429, %v445, %v291
        %v462 = vsel %vm430, %v446, %v298
        %v463 = vsel %vm431, %v447, %v305
        %v464 = vsel %vm432, %v448, %v312
        %v465 = vsel %vm433, %v449, %v319
        %v466 = vsel %vm434, %v450, %v326
        %v467 = vsel %vm435, %v451, %v333
        %v468 = vsel %vm436, %v452, %v340
        %v469 = vsel %vm437, %v453, %v347
        %v470 = vsel %vm438, %v454, %v354
        %v471 = vsel %vm439, %v455, %v361
        %v472 = vsel %vm440, %v456, %v368
        %v473 = vsel %vm441, %v457, %v375
        %v474 = vsel %vm442, %v458, %v382
        %v475 = vsel %vm443, %v459, %v389
        %v476 = vsel %vm444, %v460, %v396
        %s477 = scalar_lea.vmem [#allocation4], 128
        %v478 = vld [vmem:[%s477] sm:$0xff]
        %v479 = vld [vmem:[%s477 + $0x8] sm:$0xff]
        %v480 = vld [vmem:[%s477 + $0x10] sm:$0xff]
        %v481 = vld [vmem:[%s477 + $0x18] sm:$0xff]
        %v482 = vld [vmem:[%s477 + $0x20] sm:$0xff]
        %v483 = vld [vmem:[%s477 + $0x28] sm:$0xff]
        %v484 = vld [vmem:[%s477 + $0x30] sm:$0xff]
        %v485 = vld [vmem:[%s477 + $0x38] sm:$0xff]
        %v486 = vld [vmem:[%s477 + $0x40] sm:$0xff]
        %v487 = vld [vmem:[%s477 + $0x48] sm:$0xff]
        %v488 = vld [vmem:[%s477 + $0x50] sm:$0xff]
        %v489 = vld [vmem:[%s477 + $0x58] sm:$0xff]
        %v490 = vld [vmem:[%s477 + $0x60] sm:$0xff]
        %v491 = vld [vmem:[%s477 + $0x68] sm:$0xff]
        %v492 = vld [vmem:[%s477 + $0x70] sm:$0xff]
        %v493 = vld [vmem:[%s477 + $0x78] sm:$0xff]
        %v494 = vld [vmem:[#allocation4] sm:$0xff]
        %v495 = vld [vmem:[#allocation4 + $0x8] sm:$0xff]
        %v496 = vld [vmem:[#allocation4 + $0x10] sm:$0xff]
        %v497 = vld [vmem:[#allocation4 + $0x18] sm:$0xff]
        %v498 = vld [vmem:[#allocation4 + $0x20] sm:$0xff]
        %v499 = vld [vmem:[#allocation4 + $0x28] sm:$0xff]
        %v500 = vld [vmem:[#allocation4 + $0x30] sm:$0xff]
        %v501 = vld [vmem:[#allocation4 + $0x38] sm:$0xff]
        %v502 = vld [vmem:[#allocation4 + $0x40] sm:$0xff]
        %v503 = vld [vmem:[#allocation4 + $0x48] sm:$0xff]
        %v504 = vld [vmem:[#allocation4 + $0x50] sm:$0xff]
        %v505 = vld [vmem:[#allocation4 + $0x58] sm:$0xff]
        %v506 = vld [vmem:[#allocation4 + $0x60] sm:$0xff]
        %v507 = vld [vmem:[#allocation4 + $0x68] sm:$0xff]
        %v508 = vld [vmem:[#allocation4 + $0x70] sm:$0xff]
        %v509 = vld [vmem:[#allocation4 + $0x78] sm:$0xff]
        %510 = vmatprep.subr.mxu0 0.0
        %511 = vmatpush1.msra.mxu0 %v494
        %512 = vmatprep.subr.mxu0 0.0
        %513 = vmatpush1.msra.mxu0 %v495
        %514 = vmatprep.subr.mxu0 0.0
        %515 = vmatpush1.msra.mxu0 %v496
        %516 = vmatprep.subr.mxu0 0.0
        %517 = vmatpush1.msra.mxu0 %v497
        %518 = vmatprep.subr.mxu0 0.0
        %519 = vmatpush1.msra.mxu0 %v498
        %520 = vmatprep.subr.mxu0 0.0
        %521 = vmatpush1.msra.mxu0 %v499
        %522 = vmatprep.subr.mxu0 0.0
        %523 = vmatpush1.msra.mxu0 %v500
        %524 = vmatprep.subr.mxu0 0.0
        %525 = vmatpush1.msra.mxu0 %v501
        %526 = vmatprep.subr.mxu0 0.0
        %527 = vmatpush1.msra.mxu0 %v502
        %528 = vmatprep.subr.mxu0 0.0
        %529 = vmatpush1.msra.mxu0 %v503
        %530 = vmatprep.subr.mxu0 0.0
        %531 = vmatpush1.msra.mxu0 %v504
        %532 = vmatprep.subr.mxu0 0.0
        %533 = vmatpush1.msra.mxu0 %v505
        %534 = vmatprep.subr.mxu0 0.0
        %535 = vmatpush1.msra.mxu0 %v506
        %536 = vmatprep.subr.mxu0 0.0
        %537 = vmatpush1.msra.mxu0 %v507
        %538 = vmatprep.subr.mxu0 0.0
        %539 = vmatpush1.msra.mxu0 %v508
        %540 = vmatprep.subr.mxu0 0.0
        %541 = vmatpush1.msra.mxu0 %v509
        %542 = vmatprep.subr.mxu0 0.0
        %543 = vmatpush1.msra.mxu0 0.0
        %544 = vmatprep.subr.mxu0 0.0
        %545 = vmatpush1.msra.mxu0 0.0
        %546 = vmatprep.subr.mxu0 0.0
        %547 = vmatpush1.msra.mxu0 0.0
        %548 = vmatprep.subr.mxu0 0.0
        %549 = vmatpush1.msra.mxu0 0.0
        %550 = vmatprep.subr.mxu0 0.0
        %551 = vmatpush1.msra.mxu0 0.0
        %552 = vmatprep.subr.mxu0 0.0
        %553 = vmatpush1.msra.mxu0 0.0
        %554 = vmatprep.subr.mxu0 0.0
        %555 = vmatpush1.msra.mxu0 0.0
        %556 = vmatprep.subr.mxu0 0.0
        %557 = vmatpush1.msra.mxu0 0.0
        %558 = vmatprep.subr.mxu0 0.0
        %559 = vmatpush1.msra.mxu0 0.0
        %560 = vmatprep.subr.mxu0 0.0
        %561 = vmatpush1.msra.mxu0 0.0
        %562 = vmatprep.subr.mxu0 0.0
        %563 = vmatpush1.msra.mxu0 0.0
        %564 = vmatprep.subr.mxu0 0.0
        %565 = vmatpush1.msra.mxu0 0.0
        %566 = vmatprep.subr.mxu0 0.0
        %567 = vmatpush1.msra.mxu0 0.0
        %568 = vmatprep.subr.mxu0 0.0
        %569 = vmatpush1.msra.mxu0 0.0
        %570 = vmatprep.subr.mxu0 0.0
        %571 = vmatpush1.msra.mxu0 0.0
        %572 = vmatprep.subr.mxu0 0.0
        %573 = vmatpush1.msra.mxu0 0.0
        %574 = vmatprep.mubr.f32.mxu0 0.0
        %575 = vmatmul.mubr.f32.gmra.mrb[0].mxu0 %v252
        %v576 = vpop.f32.mrb[0].mxu0
        %v577 = vadd.f32 0.0, %v576
        %v578 = vpop.f32.mrb[0].mxu0
        %579 = vmatprep.mubr.f32.mxu0 0.0
        %580 = vmatmul.mubr.f32.gmra.mrb[0].mxu0 %v253
        %v581 = vpop.f32.mrb[0].mxu0
        %v582 = vadd.f32 0.0, %v581
        %v583 = vpop.f32.mrb[0].mxu0
        %584 = vmatprep.mubr.f32.mxu0 0.0
        %585 = vmatmul.mubr.f32.gmra.mrb[0].mxu0 %v254
        %v586 = vpop.f32.mrb[0].mxu0
        %v587 = vadd.f32 0.0, %v586
        %v588 = vpop.f32.mrb[0].mxu0
        %589 = vmatprep.mubr.f32.mxu0 0.0
        %590 = vmatmul.mubr.f32.gmra.mrb[0].mxu0 %v255
        %v591 = vpop.f32.mrb[0].mxu0
        %v592 = vadd.f32 0.0, %v591
        %v593 = vpop.f32.mrb[0].mxu0
        %594 = vmatprep.mubr.f32.mxu0 0.0
        %595 = vmatmul.mubr.f32.gmra.mrb[0].mxu0 %v256
        %v596 = vpop.f32.mrb[0].mxu0
        %v597 = vadd.f32 0.0, %v596
        %v598 = vpop.f32.mrb[0].mxu0
        %599 = vmatprep.mubr.f32.mxu0 0.0
        %600 = vmatmul.mubr.f32.gmra.mrb[0].mxu0 %v257
        %v601 = vpop.f32.mrb[0].mxu0
        %v602 = vadd.f32 0.0, %v601
        %v603 = vpop.f32.mrb[0].mxu0
        %604 = vmatprep.mubr.f32.mxu0 0.0
        %605 = vmatmul.mubr.f32.gmra.mrb[0].mxu0 %v258
        %v606 = vpop.f32.mrb[0].mxu0
        %v607 = vadd.f32 0.0, %v606
        %v608 = vpop.f32.mrb[0].mxu0
        %609 = vmatprep.mubr.f32.mxu0 0.0
        %610 = vmatmul.mubr.f32.gmra.mrb[0].mxu0 %v259
        %v611 = vpop.f32.mrb[0].mxu0
        %v612 = vadd.f32 0.0, %v611
        %v613 = vpop.f32.mrb[0].mxu0
        %614 = vmatprep.mubr.f32.mxu0 0.0
        %615 = vmatmul.mubr.f32.gmra.mrb[0].mxu0 %v260
        %v616 = vpop.f32.mrb[0].mxu0
        %v617 = vadd.f32 0.0, %v616
        %v618 = vpop.f32.mrb[0].mxu0
        %619 = vmatprep.mubr.f32.mxu0 0.0
        %620 = vmatmul.mubr.f32.gmra.mrb[0].mxu0 %v261
        %v621 = vpop.f32.mrb[0].mxu0
        %v622 = vadd.f32 0.0, %v621
        %v623 = vpop.f32.mrb[0].mxu0
        %624 = vmatprep.mubr.f32.mxu0 0.0
        %625 = vmatmul.mubr.f32.gmra.mrb[0].mxu0 %v262
        %v626 = vpop.f32.mrb[0].mxu0
        %v627 = vadd.f32 0.0, %v626
        %v628 = vpop.f32.mrb[0].mxu0
        %629 = vmatprep.mubr.f32.mxu0 0.0
        %630 = vmatmul.mubr.f32.gmra.mrb[0].mxu0 %v263
        %v631 = vpop.f32.mrb[0].mxu0
        %v632 = vadd.f32 0.0, %v631
        %v633 = vpop.f32.mrb[0].mxu0
        %634 = vmatprep.mubr.f32.mxu0 0.0
        %635 = vmatmul.mubr.f32.gmra.mrb[0].mxu0 %v264
        %v636 = vpop.f32.mrb[0].mxu0
        %v637 = vadd.f32 0.0, %v636
        %v638 = vpop.f32.mrb[0].mxu0
        %639 = vmatprep.mubr.f32.mxu0 0.0
        %640 = vmatmul.mubr.f32.gmra.mrb[0].mxu0 %v265
        %v641 = vpop.f32.mrb[0].mxu0
        %v642 = vadd.f32 0.0, %v641
        %v643 = vpop.f32.mrb[0].mxu0
        %644 = vmatprep.mubr.f32.mxu0 0.0
        %645 = vmatmul.mubr.f32.gmra.mrb[0].mxu0 %v266
        %v646 = vpop.f32.mrb[0].mxu0
        %v647 = vadd.f32 0.0, %v646
        %v648 = vpop.f32.mrb[0].mxu0
        %649 = vmatprep.mubr.f32.mxu0 0.0
        %650 = vmatmul.mubr.f32.gmra.mrb[0].mxu0 %v267
        %v651 = vpop.f32.mrb[0].mxu0
        %v652 = vadd.f32 0.0, %v651
        %v653 = vpop.f32.mrb[0].mxu0
        %654 = vdwg.mxu0
        %vm655 = vcmp.ne.s32.totalorder %v461, 0
        %vm656 = vcmp.ne.s32.totalorder %v462, 0
        %vm657 = vcmp.ne.s32.totalorder %v463, 0
        %vm658 = vcmp.ne.s32.totalorder %v464, 0
        %vm659 = vcmp.ne.s32.totalorder %v465, 0
        %vm660 = vcmp.ne.s32.totalorder %v466, 0
        %vm661 = vcmp.ne.s32.totalorder %v467, 0
        %vm662 = vcmp.ne.s32.totalorder %v468, 0
        %vm663 = vcmp.ne.s32.totalorder %v469, 0
        %vm664 = vcmp.ne.s32.totalorder %v470, 0
        %vm665 = vcmp.ne.s32.totalorder %v471, 0
        %vm666 = vcmp.ne.s32.totalorder %v472, 0
        %vm667 = vcmp.ne.s32.totalorder %v473, 0
        %vm668 = vcmp.ne.s32.totalorder %v474, 0
        %vm669 = vcmp.ne.s32.totalorder %v475, 0
        %vm670 = vcmp.ne.s32.totalorder %v476, 0
        %v671 = vrot.slane %v577, 7
        %v672 = vrot.slane %v582, 7
        %v673 = vrot.slane %v587, 7
        %v674 = vrot.slane %v592, 7
        %v675 = vrot.slane %v597, 7
        %v676 = vrot.slane %v602, 7
        %v677 = vrot.slane %v607, 7
        %v678 = vrot.slane %v612, 7
        %v679 = vrot.slane %v617, 7
        %v680 = vrot.slane %v622, 7
        %v681 = vrot.slane %v627, 7
        %v682 = vrot.slane %v632, 7
        %v683 = vrot.slane %v637, 7
        %v684 = vrot.slane %v642, 7
        %v685 = vrot.slane %v647, 7
        %v686 = vrot.slane %v652, 7
        %vm687 = vcmp.lt.s32.totalorder %v269, 1
        %v688 = vsel %vm687, %v685, %v686
        %v689 = vsel %vm687, %v684, %v685
        %v690 = vsel %vm687, %v683, %v684
        %v691 = vsel %vm687, %v682, %v683
        %v692 = vsel %vm687, %v681, %v682
        %v693 = vsel %vm687, %v680, %v681
        %v694 = vsel %vm687, %v679, %v680
        %v695 = vsel %vm687, %v678, %v679
        %v696 = vsel %vm687, %v677, %v678
        %v697 = vsel %vm687, %v676, %v677
        %v698 = vsel %vm687, %v675, %v676
        %v699 = vsel %vm687, %v674, %v675
        %v700 = vsel %vm687, %v673, %v674
        %v701 = vsel %vm687, %v672, %v673
        %v702 = vsel %vm687, %v671, %v672
        %v703 = vsel %vm687, %v686, %v671
        %v704 = vsel %vm655, 1, 0
        %v705 = vsel %vm656, 1, 0
        %v706 = vsel %vm657, 1, 0
        %v707 = vsel %vm658, 1, 0
        %v708 = vsel %vm659, 1, 0
        %v709 = vsel %vm660, 1, 0
        %v710 = vsel %vm661, 1, 0
        %v711 = vsel %vm662, 1, 0
        %v712 = vsel %vm663, 1, 0
        %v713 = vsel %vm664, 1, 0
        %v714 = vsel %vm665, 1, 0
        %v715 = vsel %vm666, 1, 0
        %v716 = vsel %vm667, 1, 0
        %v717 = vsel %vm668, 1, 0
        %v718 = vsel %vm669, 1, 0
        %v719 = vsel %vm670, 1, 0
        %vm720 = vcmp.eq.s32.totalorder %v704, 1
        %vm721 = vcmp.eq.s32.totalorder %v705, 1
        %vm722 = vcmp.eq.s32.totalorder %v706, 1
        %vm723 = vcmp.eq.s32.totalorder %v707, 1
        %vm724 = vcmp.eq.s32.totalorder %v708, 1
        %vm725 = vcmp.eq.s32.totalorder %v709, 1
        %vm726 = vcmp.eq.s32.totalorder %v710, 1
        %vm727 = vcmp.eq.s32.totalorder %v711, 1
        %vm728 = vcmp.eq.s32.totalorder %v712, 1
        %vm729 = vcmp.eq.s32.totalorder %v713, 1
        %vm730 = vcmp.eq.s32.totalorder %v714, 1
        %vm731 = vcmp.eq.s32.totalorder %v715, 1
        %vm732 = vcmp.eq.s32.totalorder %v716, 1
        %vm733 = vcmp.eq.s32.totalorder %v717, 1
        %vm734 = vcmp.eq.s32.totalorder %v718, 1
        %vm735 = vcmp.eq.s32.totalorder %v719, 1
        %v736 = vsel %vm720, %v703, 0.0
        %v737 = vsel %vm721, %v702, 0.0
        %v738 = vsel %vm722, %v701, 0.0
        %v739 = vsel %vm723, %v700, 0.0
        %v740 = vsel %vm724, %v699, 0.0
        %v741 = vsel %vm725, %v698, 0.0
        %v742 = vsel %vm726, %v697, 0.0
        %v743 = vsel %vm727, %v696, 0.0
        %v744 = vsel %vm728, %v695, 0.0
        %v745 = vsel %vm729, %v694, 0.0
        %v746 = vsel %vm730, %v693, 0.0
        %v747 = vsel %vm731, %v692, 0.0
        %v748 = vsel %vm732, %v691, 0.0
        %v749 = vsel %vm733, %v690, 0.0
        %v750 = vsel %vm734, %v689, 0.0
        %v751 = vsel %vm735, %v688, 0.0
        %752 = vmatprep.subr.mxu0 0.0
        %753 = vmatpush1.msra.mxu0 %v478
        %754 = vmatprep.subr.mxu0 0.0
        %755 = vmatpush1.msra.mxu0 %v479
        %756 = vmatprep.subr.mxu0 0.0
        %757 = vmatpush1.msra.mxu0 %v480
        %758 = vmatprep.subr.mxu0 0.0
        %759 = vmatpush1.msra.mxu0 %v481
        %760 = vmatprep.subr.mxu0 0.0
        %761 = vmatpush1.msra.mxu0 %v482
        %762 = vmatprep.subr.mxu0 0.0
        %763 = vmatpush1.msra.mxu0 %v483
        %764 = vmatprep.subr.mxu0 0.0
        %765 = vmatpush1.msra.mxu0 %v484
        %766 = vmatprep.subr.mxu0 0.0
        %767 = vmatpush1.msra.mxu0 %v485
        %768 = vmatprep.subr.mxu0 0.0
        %769 = vmatpush1.msra.mxu0 %v486
        %770 = vmatprep.subr.mxu0 0.0
        %771 = vmatpush1.msra.mxu0 %v487
        %772 = vmatprep.subr.mxu0 0.0
        %773 = vmatpush1.msra.mxu0 %v488
        %774 = vmatprep.subr.mxu0 0.0
        %775 = vmatpush1.msra.mxu0 %v489
        %776 = vmatprep.subr.mxu0 0.0
        %777 = vmatpush1.msra.mxu0 %v490
        %778 = vmatprep.subr.mxu0 0.0
        %779 = vmatpush1.msra.mxu0 %v491
        %780 = vmatprep.subr.mxu0 0.0
        %781 = vmatpush1.msra.mxu0 %v492
        %782 = vmatprep.subr.mxu0 0.0
        %783 = vmatpush1.msra.mxu0 %v493
        %784 = vmatprep.subr.mxu0 0.0
        %785 = vmatpush1.msra.mxu0 0.0
        %786 = vmatprep.subr.mxu0 0.0
        %787 = vmatpush1.msra.mxu0 0.0
        %788 = vmatprep.subr.mxu0 0.0
        %789 = vmatpush1.msra.mxu0 0.0
        %790 = vmatprep.subr.mxu0 0.0
        %791 = vmatpush1.msra.mxu0 0.0
        %792 = vmatprep.subr.mxu0 0.0
        %793 = vmatpush1.msra.mxu0 0.0
        %794 = vmatprep.subr.mxu0 0.0
        %795 = vmatpush1.msra.mxu0 0.0
        %796 = vmatprep.subr.mxu0 0.0
        %797 = vmatpush1.msra.mxu0 0.0
        %798 = vmatprep.subr.mxu0 0.0
        %799 = vmatpush1.msra.mxu0 0.0
        %800 = vmatprep.subr.mxu0 0.0
        %801 = vmatpush1.msra.mxu0 0.0
        %802 = vmatprep.subr.mxu0 0.0
        %803 = vmatpush1.msra.mxu0 0.0
        %804 = vmatprep.subr.mxu0 0.0
        %805 = vmatpush1.msra.mxu0 0.0
        %806 = vmatprep.subr.mxu0 0.0
        %807 = vmatpush1.msra.mxu0 0.0
        %808 = vmatprep.subr.mxu0 0.0
        %809 = vmatpush1.msra.mxu0 0.0
        %810 = vmatprep.subr.mxu0 0.0
        %811 = vmatpush1.msra.mxu0 0.0
        %812 = vmatprep.subr.mxu0 0.0
        %813 = vmatpush1.msra.mxu0 0.0
        %814 = vmatprep.subr.mxu0 0.0
        %815 = vmatpush1.msra.mxu0 0.0
        %816 = vmatprep.mubr.f32.mxu0 0.0
        %817 = vmatmul.mubr.f32.gmra.mrb[0].mxu0 %v252
        %v818 = vpop.f32.mrb[0].mxu0
        %v819 = vadd.f32 %v736, %v818
        %v820 = vpop.f32.mrb[0].mxu0
        %821 = vmatprep.mubr.f32.mxu0 0.0
        %822 = vmatmul.mubr.f32.gmra.mrb[0].mxu0 %v253
        %v823 = vpop.f32.mrb[0].mxu0
        %v824 = vadd.f32 %v737, %v823
        %v825 = vpop.f32.mrb[0].mxu0
        %826 = vmatprep.mubr.f32.mxu0 0.0
        %827 = vmatmul.mubr.f32.gmra.mrb[0].mxu0 %v254
        %v828 = vpop.f32.mrb[0].mxu0
        %v829 = vadd.f32 %v738, %v828
        %v830 = vpop.f32.mrb[0].mxu0
        %831 = vmatprep.mubr.f32.mxu0 0.0
        %832 = vmatmul.mubr.f32.gmra.mrb[0].mxu0 %v255
        %v833 = vpop.f32.mrb[0].mxu0
        %v834 = vadd.f32 %v739, %v833
        %v835 = vpop.f32.mrb[0].mxu0
        %836 = vmatprep.mubr.f32.mxu0 0.0
        %837 = vmatmul.mubr.f32.gmra.mrb[0].mxu0 %v256
        %v838 = vpop.f32.mrb[0].mxu0
        %v839 = vadd.f32 %v740, %v838
        %v840 = vpop.f32.mrb[0].mxu0
        %841 = vmatprep.mubr.f32.mxu0 0.0
        %842 = vmatmul.mubr.f32.gmra.mrb[0].mxu0 %v257
        %v843 = vpop.f32.mrb[0].mxu0
        %v844 = vadd.f32 %v741, %v843
        %v845 = vpop.f32.mrb[0].mxu0
        %846 = vmatprep.mubr.f32.mxu0 0.0
        %847 = vmatmul.mubr.f32.gmra.mrb[0].mxu0 %v258
        %v848 = vpop.f32.mrb[0].mxu0
        %v849 = vadd.f32 %v742, %v848
        %v850 = vpop.f32.mrb[0].mxu0
        %851 = vmatprep.mubr.f32.mxu0 0.0
        %852 = vmatmul.mubr.f32.gmra.mrb[0].mxu0 %v259
        %v853 = vpop.f32.mrb[0].mxu0
        %v854 = vadd.f32 %v743, %v853
        %v855 = vpop.f32.mrb[0].mxu0
        %856 = vmatprep.mubr.f32.mxu0 0.0
        %857 = vmatmul.mubr.f32.gmra.mrb[0].mxu0 %v260
        %v858 = vpop.f32.mrb[0].mxu0
        %v859 = vadd.f32 %v744, %v858
        %v860 = vpop.f32.mrb[0].mxu0
        %861 = vmatprep.mubr.f32.mxu0 0.0
        %862 = vmatmul.mubr.f32.gmra.mrb[0].mxu0 %v261
        %v863 = vpop.f32.mrb[0].mxu0
        %v864 = vadd.f32 %v745, %v863
        %v865 = vpop.f32.mrb[0].mxu0
        %866 = vmatprep.mubr.f32.mxu0 0.0
        %867 = vmatmul.mubr.f32.gmra.mrb[0].mxu0 %v262
        %v868 = vpop.f32.mrb[0].mxu0
        %v869 = vadd.f32 %v746, %v868
        %v870 = vpop.f32.mrb[0].mxu0
        %871 = vmatprep.mubr.f32.mxu0 0.0
        %872 = vmatmul.mubr.f32.gmra.mrb[0].mxu0 %v263
        %v873 = vpop.f32.mrb[0].mxu0
        %v874 = vadd.f32 %v747, %v873
        %v875 = vpop.f32.mrb[0].mxu0
        %876 = vmatprep.mubr.f32.mxu0 0.0
        %877 = vmatmul.mubr.f32.gmra.mrb[0].mxu0 %v264
        %v878 = vpop.f32.mrb[0].mxu0
        %v879 = vadd.f32 %v748, %v878
        %v880 = vpop.f32.mrb[0].mxu0
        %881 = vmatprep.mubr.f32.mxu0 0.0
        %882 = vmatmul.mubr.f32.gmra.mrb[0].mxu0 %v265
        %v883 = vpop.f32.mrb[0].mxu0
        %v884 = vadd.f32 %v749, %v883
        %v885 = vpop.f32.mrb[0].mxu0
        %886 = vmatprep.mubr.f32.mxu0 0.0
        %887 = vmatmul.mubr.f32.gmra.mrb[0].mxu0 %v266
        %v888 = vpop.f32.mrb[0].mxu0
        %v889 = vadd.f32 %v750, %v888
        %v890 = vpop.f32.mrb[0].mxu0
        %891 = vmatprep.mubr.f32.mxu0 0.0
        %892 = vmatmul.mubr.f32.gmra.mrb[0].mxu0 %v267
        %v893 = vpop.f32.mrb[0].mxu0
        %v894 = vadd.f32 %v751, %v893
        %v895 = vpop.f32.mrb[0].mxu0
        %896 = vdwg.mxu0
        %s897 = scalar_lea.vmem [#allocation4], 256
        %v898 = vld [vmem:[%s897] sm:$0xff]
        %v899 = vld [vmem:[%s897 + $0x8] sm:$0xff]
        %v900 = vld [vmem:[%s897 + $0x10] sm:$0xff]
        %v901 = vld [vmem:[%s897 + $0x18] sm:$0xff]
        %v902 = vld [vmem:[%s897 + $0x20] sm:$0xff]
        %v903 = vld [vmem:[%s897 + $0x28] sm:$0xff]
        %v904 = vld [vmem:[%s897 + $0x30] sm:$0xff]
        %v905 = vld [vmem:[%s897 + $0x38] sm:$0xff]
        %v906 = vld [vmem:[%s897 + $0x40] sm:$0xff]
        %v907 = vld [vmem:[%s897 + $0x48] sm:$0xff]
        %v908 = vld [vmem:[%s897 + $0x50] sm:$0xff]
        %v909 = vld [vmem:[%s897 + $0x58] sm:$0xff]
        %v910 = vld [vmem:[%s897 + $0x60] sm:$0xff]
        %v911 = vld [vmem:[%s897 + $0x68] sm:$0xff]
        %v912 = vld [vmem:[%s897 + $0x70] sm:$0xff]
        %v913 = vld [vmem:[%s897 + $0x78] sm:$0xff]
        %914 = vmatprep.subr.mxu0 0.0
        %915 = vmatpush1.msra.mxu0 %v898
        %916 = vmatprep.subr.mxu0 0.0
        %917 = vmatpush1.msra.mxu0 %v899
        %918 = vmatprep.subr.mxu0 0.0
        %919 = vmatpush1.msra.mxu0 %v900
        %920 = vmatprep.subr.mxu0 0.0
        %921 = vmatpush1.msra.mxu0 %v901
        %922 = vmatprep.subr.mxu0 0.0
        %923 = vmatpush1.msra.mxu0 %v902
        %924 = vmatprep.subr.mxu0 0.0
        %925 = vmatpush1.msra.mxu0 %v903
        %926 = vmatprep.subr.mxu0 0.0
        %927 = vmatpush1.msra.mxu0 %v904
        %928 = vmatprep.subr.mxu0 0.0
        %929 = vmatpush1.msra.mxu0 %v905
        %930 = vmatprep.subr.mxu0 0.0
        %931 = vmatpush1.msra.mxu0 %v906
        %932 = vmatprep.subr.mxu0 0.0
        %933 = vmatpush1.msra.mxu0 %v907
        %934 = vmatprep.subr.mxu0 0.0
        %935 = vmatpush1.msra.mxu0 %v908
        %936 = vmatprep.subr.mxu0 0.0
        %937 = vmatpush1.msra.mxu0 %v909
        %938 = vmatprep.subr.mxu0 0.0
        %939 = vmatpush1.msra.mxu0 %v910
        %940 = vmatprep.subr.mxu0 0.0
        %941 = vmatpush1.msra.mxu0 %v911
        %942 = vmatprep.subr.mxu0 0.0
        %943 = vmatpush1.msra.mxu0 %v912
        %944 = vmatprep.subr.mxu0 0.0
        %945 = vmatpush1.msra.mxu0 %v913
        %946 = vmatprep.subr.mxu0 0.0
        %947 = vmatpush1.msra.mxu0 0.0
        %948 = vmatprep.subr.mxu0 0.0
        %949 = vmatpush1.msra.mxu0 0.0
        %950 = vmatprep.subr.mxu0 0.0
        %951 = vmatpush1.msra.mxu0 0.0
        %952 = vmatprep.subr.mxu0 0.0
        %953 = vmatpush1.msra.mxu0 0.0
        %954 = vmatprep.subr.mxu0 0.0
        %955 = vmatpush1.msra.mxu0 0.0
        %956 = vmatprep.subr.mxu0 0.0
        %957 = vmatpush1.msra.mxu0 0.0
        %958 = vmatprep.subr.mxu0 0.0
        %959 = vmatpush1.msra.mxu0 0.0
        %960 = vmatprep.subr.mxu0 0.0
        %961 = vmatpush1.msra.mxu0 0.0
        %962 = vmatprep.subr.mxu0 0.0
        %963 = vmatpush1.msra.mxu0 0.0
        %964 = vmatprep.subr.mxu0 0.0
        %965 = vmatpush1.msra.mxu0 0.0
        %966 = vmatprep.subr.mxu0 0.0
        %967 = vmatpush1.msra.mxu0 0.0
        %968 = vmatprep.subr.mxu0 0.0
        %969 = vmatpush1.msra.mxu0 0.0
        %970 = vmatprep.subr.mxu0 0.0
        %971 = vmatpush1.msra.mxu0 0.0
        %972 = vmatprep.subr.mxu0 0.0
        %973 = vmatpush1.msra.mxu0 0.0
        %974 = vmatprep.subr.mxu0 0.0
        %975 = vmatpush1.msra.mxu0 0.0
        %976 = vmatprep.subr.mxu0 0.0
        %977 = vmatpush1.msra.mxu0 0.0
        %978 = vmatprep.mubr.f32.mxu0 0.0
        %979 = vmatmul.mubr.f32.gmra.mrb[0].mxu0 %v252
        %v980 = vpop.f32.mrb[0].mxu0
        %v981 = vadd.f32 0.0, %v980
        %v982 = vpop.f32.mrb[0].mxu0
        %983 = vmatprep.mubr.f32.mxu0 0.0
        %984 = vmatmul.mubr.f32.gmra.mrb[0].mxu0 %v253
        %v985 = vpop.f32.mrb[0].mxu0
        %v986 = vadd.f32 0.0, %v985
        %v987 = vpop.f32.mrb[0].mxu0
        %988 = vmatprep.mubr.f32.mxu0 0.0
        %989 = vmatmul.mubr.f32.gmra.mrb[0].mxu0 %v254
        %v990 = vpop.f32.mrb[0].mxu0
        %v991 = vadd.f32 0.0, %v990
        %v992 = vpop.f32.mrb[0].mxu0
        %993 = vmatprep.mubr.f32.mxu0 0.0
        %994 = vmatmul.mubr.f32.gmra.mrb[0].mxu0 %v255
        %v995 = vpop.f32.mrb[0].mxu0
        %v996 = vadd.f32 0.0, %v995
        %v997 = vpop.f32.mrb[0].mxu0
        %998 = vmatprep.mubr.f32.mxu0 0.0
        %999 = vmatmul.mubr.f32.gmra.mrb[0].mxu0 %v256
        %v1000 = vpop.f32.mrb[0].mxu0
        %v1001 = vadd.f32 0.0, %v1000
        %v1002 = vpop.f32.mrb[0].mxu0
        %1003 = vmatprep.mubr.f32.mxu0 0.0
        %1004 = vmatmul.mubr.f32.gmra.mrb[0].mxu0 %v257
        %v1005 = vpop.f32.mrb[0].mxu0
        %v1006 = vadd.f32 0.0, %v1005
        %v1007 = vpop.f32.mrb[0].mxu0
        %1008 = vmatprep.mubr.f32.mxu0 0.0
        %1009 = vmatmul.mubr.f32.gmra.mrb[0].mxu0 %v258
        %v1010 = vpop.f32.mrb[0].mxu0
        %v1011 = vadd.f32 0.0, %v1010
        %v1012 = vpop.f32.mrb[0].mxu0
        %1013 = vmatprep.mubr.f32.mxu0 0.0
        %1014 = vmatmul.mubr.f32.gmra.mrb[0].mxu0 %v259
        %v1015 = vpop.f32.mrb[0].mxu0
        %v1016 = vadd.f32 0.0, %v1015
        %v1017 = vpop.f32.mrb[0].mxu0
        %1018 = vmatprep.mubr.f32.mxu0 0.0
        %1019 = vmatmul.mubr.f32.gmra.mrb[0].mxu0 %v260
        %v1020 = vpop.f32.mrb[0].mxu0
        %v1021 = vadd.f32 0.0, %v1020
        %v1022 = vpop.f32.mrb[0].mxu0
        %1023 = vmatprep.mubr.f32.mxu0 0.0
        %1024 = vmatmul.mubr.f32.gmra.mrb[0].mxu0 %v261
        %v1025 = vpop.f32.mrb[0].mxu0
        %v1026 = vadd.f32 0.0, %v1025
        %v1027 = vpop.f32.mrb[0].mxu0
        %1028 = vmatprep.mubr.f32.mxu0 0.0
        %1029 = vmatmul.mubr.f32.gmra.mrb[0].mxu0 %v262
        %v1030 = vpop.f32.mrb[0].mxu0
        %v1031 = vadd.f32 0.0, %v1030
        %v1032 = vpop.f32.mrb[0].mxu0
        %1033 = vmatprep.mubr.f32.mxu0 0.0
        %1034 = vmatmul.mubr.f32.gmra.mrb[0].mxu0 %v263
        %v1035 = vpop.f32.mrb[0].mxu0
        %v1036 = vadd.f32 0.0, %v1035
        %v1037 = vpop.f32.mrb[0].mxu0
        %1038 = vmatprep.mubr.f32.mxu0 0.0
        %1039 = vmatmul.mubr.f32.gmra.mrb[0].mxu0 %v264
        %v1040 = vpop.f32.mrb[0].mxu0
        %v1041 = vadd.f32 0.0, %v1040
        %v1042 = vpop.f32.mrb[0].mxu0
        %1043 = vmatprep.mubr.f32.mxu0 0.0
        %1044 = vmatmul.mubr.f32.gmra.mrb[0].mxu0 %v265
        %v1045 = vpop.f32.mrb[0].mxu0
        %v1046 = vadd.f32 0.0, %v1045
        %v1047 = vpop.f32.mrb[0].mxu0
        %1048 = vmatprep.mubr.f32.mxu0 0.0
        %1049 = vmatmul.mubr.f32.gmra.mrb[0].mxu0 %v266
        %v1050 = vpop.f32.mrb[0].mxu0
        %v1051 = vadd.f32 0.0, %v1050
        %v1052 = vpop.f32.mrb[0].mxu0
        %1053 = vmatprep.mubr.f32.mxu0 0.0
        %1054 = vmatmul.mubr.f32.gmra.mrb[0].mxu0 %v267
        %v1055 = vpop.f32.mrb[0].mxu0
        %v1056 = vadd.f32 0.0, %v1055
        %v1057 = vpop.f32.mrb[0].mxu0
        %1058 = vdwg.mxu0
        %vm1059 = vcmp.ne.s32.totalorder %v461, 15
        %vm1060 = vcmp.ne.s32.totalorder %v462, 15
        %vm1061 = vcmp.ne.s32.totalorder %v463, 15
        %vm1062 = vcmp.ne.s32.totalorder %v464, 15
        %vm1063 = vcmp.ne.s32.totalorder %v465, 15
        %vm1064 = vcmp.ne.s32.totalorder %v466, 15
        %vm1065 = vcmp.ne.s32.totalorder %v467, 15
        %vm1066 = vcmp.ne.s32.totalorder %v468, 15
        %vm1067 = vcmp.ne.s32.totalorder %v469, 15
        %vm1068 = vcmp.ne.s32.totalorder %v470, 15
        %vm1069 = vcmp.ne.s32.totalorder %v471, 15
        %vm1070 = vcmp.ne.s32.totalorder %v472, 15
        %vm1071 = vcmp.ne.s32.totalorder %v473, 15
        %vm1072 = vcmp.ne.s32.totalorder %v474, 15
        %vm1073 = vcmp.ne.s32.totalorder %v475, 15
        %vm1074 = vcmp.ne.s32.totalorder %v476, 15
        %v1075 = vrot.slane %v981, 1
        %v1076 = vrot.slane %v986, 1
        %v1077 = vrot.slane %v991, 1
        %v1078 = vrot.slane %v996, 1
        %v1079 = vrot.slane %v1001, 1
        %v1080 = vrot.slane %v1006, 1
        %v1081 = vrot.slane %v1011, 1
        %v1082 = vrot.slane %v1016, 1
        %v1083 = vrot.slane %v1021, 1
        %v1084 = vrot.slane %v1026, 1
        %v1085 = vrot.slane %v1031, 1
        %v1086 = vrot.slane %v1036, 1
        %v1087 = vrot.slane %v1041, 1
        %v1088 = vrot.slane %v1046, 1
        %v1089 = vrot.slane %v1051, 1
        %v1090 = vrot.slane %v1056, 1
        %vm1091 = vcmp.lt.s32.totalorder %v269, 7
        %v1092 = vsel %vm1091, %v1089, %v1090
        %v1093 = vsel %vm1091, %v1088, %v1089
        %v1094 = vsel %vm1091, %v1087, %v1088
        %v1095 = vsel %vm1091, %v1086, %v1087
        %v1096 = vsel %vm1091, %v1085, %v1086
        %v1097 = vsel %vm1091, %v1084, %v1085
        %v1098 = vsel %vm1091, %v1083, %v1084
        %v1099 = vsel %vm1091, %v1082, %v1083
        %v1100 = vsel %vm1091, %v1081, %v1082
        %v1101 = vsel %vm1091, %v1080, %v1081
        %v1102 = vsel %vm1091, %v1079, %v1080
        %v1103 = vsel %vm1091, %v1078, %v1079
        %v1104 = vsel %vm1091, %v1077, %v1078
        %v1105 = vsel %vm1091, %v1076, %v1077
        %v1106 = vsel %vm1091, %v1075, %v1076
        %v1107 = vsel %vm1091, %v1090, %v1075
        %v1108 = vsel %vm1059, 1, 0
        %v1109 = vsel %vm1060, 1, 0
        %v1110 = vsel %vm1061, 1, 0
        %v1111 = vsel %vm1062, 1, 0
        %v1112 = vsel %vm1063, 1, 0
        %v1113 = vsel %vm1064, 1, 0
        %v1114 = vsel %vm1065, 1, 0
        %v1115 = vsel %vm1066, 1, 0
        %v1116 = vsel %vm1067, 1, 0
        %v1117 = vsel %vm1068, 1, 0
        %v1118 = vsel %vm1069, 1, 0
        %v1119 = vsel %vm1070, 1, 0
        %v1120 = vsel %vm1071, 1, 0
        %v1121 = vsel %vm1072, 1, 0
        %v1122 = vsel %vm1073, 1, 0
        %v1123 = vsel %vm1074, 1, 0
        %vm1124 = vcmp.eq.s32.totalorder %v1108, 1
        %vm1125 = vcmp.eq.s32.totalorder %v1109, 1
        %vm1126 = vcmp.eq.s32.totalorder %v1110, 1
        %vm1127 = vcmp.eq.s32.totalorder %v1111, 1
        %vm1128 = vcmp.eq.s32.totalorder %v1112, 1
        %vm1129 = vcmp.eq.s32.totalorder %v1113, 1
        %vm1130 = vcmp.eq.s32.totalorder %v1114, 1
        %vm1131 = vcmp.eq.s32.totalorder %v1115, 1
        %vm1132 = vcmp.eq.s32.totalorder %v1116, 1
        %vm1133 = vcmp.eq.s32.totalorder %v1117, 1
        %vm1134 = vcmp.eq.s32.totalorder %v1118, 1
        %vm1135 = vcmp.eq.s32.totalorder %v1119, 1
        %vm1136 = vcmp.eq.s32.totalorder %v1120, 1
        %vm1137 = vcmp.eq.s32.totalorder %v1121, 1
        %vm1138 = vcmp.eq.s32.totalorder %v1122, 1
        %vm1139 = vcmp.eq.s32.totalorder %v1123, 1
        %v1140 = vsel %vm1124, %v1106, 0.0
        %v1141 = vsel %vm1125, %v1105, 0.0
        %v1142 = vsel %vm1126, %v1104, 0.0
        %v1143 = vsel %vm1127, %v1103, 0.0
        %v1144 = vsel %vm1128, %v1102, 0.0
        %v1145 = vsel %vm1129, %v1101, 0.0
        %v1146 = vsel %vm1130, %v1100, 0.0
        %v1147 = vsel %vm1131, %v1099, 0.0
        %v1148 = vsel %vm1132, %v1098, 0.0
        %v1149 = vsel %vm1133, %v1097, 0.0
        %v1150 = vsel %vm1134, %v1096, 0.0
        %v1151 = vsel %vm1135, %v1095, 0.0
        %v1152 = vsel %vm1136, %v1094, 0.0
        %v1153 = vsel %vm1137, %v1093, 0.0
        %v1154 = vsel %vm1138, %v1092, 0.0
        %v1155 = vsel %vm1139, %v1107, 0.0
        %v1156 = vadd.f32 %v819, %v1140
        %v1157 = vadd.f32 %v824, %v1141
        %v1158 = vadd.f32 %v829, %v1142
        %v1159 = vadd.f32 %v834, %v1143
        %v1160 = vadd.f32 %v839, %v1144
        %v1161 = vadd.f32 %v844, %v1145
        %v1162 = vadd.f32 %v849, %v1146
        %v1163 = vadd.f32 %v854, %v1147
        %v1164 = vadd.f32 %v859, %v1148
        %v1165 = vadd.f32 %v864, %v1149
        %v1166 = vadd.f32 %v869, %v1150
        %v1167 = vadd.f32 %v874, %v1151
        %v1168 = vadd.f32 %v879, %v1152
        %v1169 = vadd.f32 %v884, %v1153
        %v1170 = vadd.f32 %v889, %v1154
        %v1171 = vadd.f32 %v894, %v1155
        %1172 = vst [vmem:[%s244] sm:$0xff] %v1156
        %1173 = vst [vmem:[%s244 + $0x8] sm:$0xff] %v1157
        %1174 = vst [vmem:[%s244 + $0x10] sm:$0xff] %v1158
        %1175 = vst [vmem:[%s244 + $0x18] sm:$0xff] %v1159
        %1176 = vst [vmem:[%s244 + $0x20] sm:$0xff] %v1160
        %1177 = vst [vmem:[%s244 + $0x28] sm:$0xff] %v1161
        %1178 = vst [vmem:[%s244 + $0x30] sm:$0xff] %v1162
        %1179 = vst [vmem:[%s244 + $0x38] sm:$0xff] %v1163
        %1180 = vst [vmem:[%s244 + $0x40] sm:$0xff] %v1164
        %1181 = vst [vmem:[%s244 + $0x48] sm:$0xff] %v1165
        %1182 = vst [vmem:[%s244 + $0x50] sm:$0xff] %v1166
        %1183 = vst [vmem:[%s244 + $0x58] sm:$0xff] %v1167
        %1184 = vst [vmem:[%s244 + $0x60] sm:$0xff] %v1168
        %1185 = vst [vmem:[%s244 + $0x68] sm:$0xff] %v1169
        %1186 = vst [vmem:[%s244 + $0x70] sm:$0xff] %v1170
        %1187 = vst [vmem:[%s244 + $0x78] sm:$0xff] %v1171
        %v1188 = vadd.f32 %v1156, %v1157
        %v1189 = vadd.f32 %v1188, %v1158
        %v1190 = vadd.f32 %v1189, %v1159
        %v1191 = vadd.f32 %v1190, %v1160
        %v1192 = vadd.f32 %v1191, %v1161
        %v1193 = vadd.f32 %v1192, %v1162
        %v1194 = vadd.f32 %v1193, %v1163
        %v1195 = vadd.f32 %v1194, %v1164
        %v1196 = vadd.f32 %v1195, %v1165
        %v1197 = vadd.f32 %v1196, %v1166
        %v1198 = vadd.f32 %v1197, %v1167
        %v1199 = vadd.f32 %v1198, %v1168
        %v1200 = vadd.f32 %v1199, %v1169
        %v1201 = vadd.f32 %v1200, %v1170
        %v1202 = vadd.f32 %v1201, %v1171
        %v1203 = vrot.slane %v1202, 4
        %v1204 = vadd.f32 %v1202, %v1203
        %v1205 = vrot.slane %v1204, 2
        %v1206 = vadd.f32 %v1204, %v1205
        %v1207 = vrot.slane %v1206, 1
        %v1208 = vadd.f32 %v1206, %v1207
        %v1209 = vmul.f32 %v1208, 0.0078125
        %v1210 = vsub.f32 %v1156, %v1209
        %v1211 = vsub.f32 %v1157, %v1209
        %v1212 = vsub.f32 %v1158, %v1209
        %v1213 = vsub.f32 %v1159, %v1209
        %v1214 = vsub.f32 %v1160, %v1209
        %v1215 = vsub.f32 %v1161, %v1209
        %v1216 = vsub.f32 %v1162, %v1209
        %v1217 = vsub.f32 %v1163, %v1209
        %v1218 = vsub.f32 %v1164, %v1209
        %v1219 = vsub.f32 %v1165, %v1209
        %v1220 = vsub.f32 %v1166, %v1209
        %v1221 = vsub.f32 %v1167, %v1209
        %v1222 = vsub.f32 %v1168, %v1209
        %v1223 = vsub.f32 %v1169, %v1209
        %v1224 = vsub.f32 %v1170, %v1209
        %v1225 = vsub.f32 %v1171, %v1209
        %1226 = vst [vmem:[%s248] sm:$0x1] %v1208
        %v1227 = vmul.f32 %v1210, %v1210
        %v1228 = vmul.f32 %v1211, %v1211
        %v1229 = vmul.f32 %v1212, %v1212
        %v1230 = vmul.f32 %v1213, %v1213
        %v1231 = vmul.f32 %v1214, %v1214
        %v1232 = vmul.f32 %v1215, %v1215
        %v1233 = vmul.f32 %v1216, %v1216
        %v1234 = vmul.f32 %v1217, %v1217
        %v1235 = vmul.f32 %v1218, %v1218
        %v1236 = vmul.f32 %v1219, %v1219
        %v1237 = vmul.f32 %v1220, %v1220
        %v1238 = vmul.f32 %v1221, %v1221
        %v1239 = vmul.f32 %v1222, %v1222
        %v1240 = vmul.f32 %v1223, %v1223
        %v1241 = vmul.f32 %v1224, %v1224
        %v1242 = vmul.f32 %v1225, %v1225
        %v1243 = vadd.f32 %v1227, %v1228
        %v1244 = vadd.f32 %v1243, %v1229
        %v1245 = vadd.f32 %v1244, %v1230
        %v1246 = vadd.f32 %v1245, %v1231
        %v1247 = vadd.f32 %v1246, %v1232
        %v1248 = vadd.f32 %v1247, %v1233
        %v1249 = vadd.f32 %v1248, %v1234
        %v1250 = vadd.f32 %v1249, %v1235
        %v1251 = vadd.f32 %v1250, %v1236
        %v1252 = vadd.f32 %v1251, %v1237
        %v1253 = vadd.f32 %v1252, %v1238
        %v1254 = vadd.f32 %v1253, %v1239
        %v1255 = vadd.f32 %v1254, %v1240
        %v1256 = vadd.f32 %v1255, %v1241
        %v1257 = vadd.f32 %v1256, %v1242
        %v1258 = vrot.slane %v1257, 4
        %v1259 = vadd.f32 %v1257, %v1258
        %v1260 = vrot.slane %v1259, 2
        %v1261 = vadd.f32 %v1259, %v1260
        %v1262 = vrot.slane %v1261, 1
        %v1263 = vadd.f32 %v1261, %v1262
        %1264 = vst [vmem:[%s251] sm:$0x1] %v1263
        %s1265 = smul.u32 16, %s20
        %p1266 = scmp.lt.s32.totalorder %s1265, 31
        %s1267 = scalar_select %p1266, %s1265, 31
        %s1268 = smul.addr %s1267, 8
        %s1269 = scalar_lea.vmem %s2, %s1268
        %p1270 = scmp.lt.s32.totalorder %s20, 1
        %s1271 = scalar_select %p1270, %s20, 1
        %s1272 = scalar_lea.vmem %s3, %s1271
        %p1273 = scmp.lt.s32.totalorder %s20, 1
        %s1274 = scalar_select %p1273, %s20, 1
        %s1275 = scalar_lea.vmem %s4, %s1274
        // Predicated region
        $region37: #{basic_block_forward_lane.3} parent=27 // pred_check
          %p1276 = pneg %p85
        $region38: #{basic_block_forward_lane.3} parent=27 // pred_check_branch
          %1278 = sbr.rel (%p1276) target = $region40
        $region39: #{basic_block_forward_lane.3} parent=27 // pred_region
          %s1279 = smul.u32 16, %s20
        $region40: #{basic_block_forward_lane.3} parent=27 // pred_fallthru
          _
        // Predicated region
        $region41: #{basic_block_forward_lane.3} parent=27 // pred_check
          %p1280 = pneg %p111
        $region42: #{basic_block_forward_lane.3} parent=27 // pred_check_branch
          %1282 = sbr.rel (%p1280) target = $region44
        $region43: #{basic_block_forward_lane.3} parent=27 // pred_region
          _
        $region44: #{basic_block_forward_lane.3} parent=27 // pred_fallthru
          _
        // Predicated region
        $region45: #{basic_block_forward_lane.3} parent=27 // pred_check
          %p1283 = pneg %p137
        $region46: #{basic_block_forward_lane.3} parent=27 // pred_check_branch
          %1285 = sbr.rel (%p1283) target = $region48
        $region47: #{basic_block_forward_lane.3} parent=27 // pred_region
          _
        $region48: #{basic_block_forward_lane.3} parent=27 // pred_fallthru
          _
      $region28: #{basic_block_forward_lane.3} parent=5 // pred_fallthru
        _
      %p1286 = scmp.le.s32.totalorder 2, %s15
      // Predicated region
      $region49: #{basic_block_forward_lane.3} parent=5 // pred_check
        %p1287 = pneg %p1286
      $region50: #{basic_block_forward_lane.3} parent=5 // pred_check_branch
        %1289 = sbr.rel (%p1287) target = $region52
      $region51: #{basic_block_forward_lane.3} parent=5 // pred_region
        %s1290 = ssub.s32 %s15, 2
        // Predicated region
        $region53: #{basic_block_forward_lane.3} parent=51 // pred_check
          %p1291 = pneg %p91
        $region54: #{basic_block_forward_lane.3} parent=51 // pred_check_branch
          %1293 = sbr.rel (%p1291) target = $region56
        $region55: #{basic_block_forward_lane.3} parent=51 // pred_region
          %s1294 = smul.u32 16, %s21
          %p1295 = scmp.lt.s32.totalorder %s1294, 31
          %s1296 = scalar_select %p1295, %s1294, 31
          %s1297 = smul.addr %s1296, 8
          %s1298 = scalar_lea.vmem %s2, %s1297
        $region56: #{basic_block_forward_lane.3} parent=51 // pred_fallthru
          _
        // Predicated region
        $region57: #{basic_block_forward_lane.3} parent=51 // pred_check
          %p1299 = pneg %p117
        $region58: #{basic_block_forward_lane.3} parent=51 // pred_check_branch
          %1301 = sbr.rel (%p1299) target = $region60
        $region59: #{basic_block_forward_lane.3} parent=51 // pred_region
          %p1302 = scmp.lt.s32.totalorder %s21, 1
          %s1303 = scalar_select %p1302, %s21, 1
          %s1304 = scalar_lea.vmem %s3, %s1303
        $region60: #{basic_block_forward_lane.3} parent=51 // pred_fallthru
          _
        // Predicated region
        $region61: #{basic_block_forward_lane.3} parent=51 // pred_check
          %p1305 = pneg %p143
        $region62: #{basic_block_forward_lane.3} parent=51 // pred_check_branch
          %1307 = sbr.rel (%p1305) target = $region64
        $region63: #{basic_block_forward_lane.3} parent=51 // pred_region
          %p1308 = scmp.lt.s32.totalorder %s21, 1
          %s1309 = scalar_select %p1308, %s21, 1
          %s1310 = scalar_lea.vmem %s4, %s1309
        $region64: #{basic_block_forward_lane.3} parent=51 // pred_fallthru
          _
      $region52: #{basic_block_forward_lane.3} parent=5 // pred_fallthru
        _
    $region6: #{basic_block_forward_lane.3} parent=1 // loop_footer
      %s19 = sadd.s32 1, %s15
    $region7: #{basic_block_forward_lane.3} parent=1 // loop_footer_branch
      %14 = sbr.rel target = $region3
    $region8: #{basic_block_forward_lane.3} parent=1 // loop_exit
      _
    %1311 = vsyncpa [#allocation3], 1
    %s1312 = scalar_lea.sflag [#allocation3], 1
    %1313 = vsyncpa %s1312, 1
    %1314 = vsyncpa [#allocation5], 1

// kernel: basic_block_forward_lane.4
$region0: #{basic_block_forward_lane.4}
  #allocation0 [shape = 'u32[]', space=smem, size = 0x4, offset = 0x4, fixed_abs, tag = 'smem constant byte address 0x4 - core index']
  #allocation1 [shape = 'u32[144,128]{1,0:T(1,128)}', space=vmem, size = 0x12000, scoped, tag = 'internal scratch']
  %s0 = inlined_call_operand.vmem [shape: f32[256,128], index: 0, kind: input, shape index: {}, may-alias: {0,4}]
  %s1 = inlined_call_operand.vmem [shape: f32[1,128], index: 1, kind: input, shape index: {}]
  %s2 = inlined_call_operand.vmem [shape: f32[1,128], index: 2, kind: input, shape index: {}]
  %s3 = inlined_call_operand.vmem [shape: f32[3,128,128], index: 3, kind: input, shape index: {}]
  %s4 = inlined_call_operand.vmem [shape: f32[256,128], index: 4, kind: output, shape index: {0}, may-alias: {0,4}]
  %s5 = inlined_call_operand.vmem [shape: f32[2,1,128], index: 5, kind: output, shape index: {1}]
  %s6 = inlined_call_operand.vmem [shape: f32[2,1,128], index: 6, kind: output, shape index: {2}]
  %7 = xla_tuple %s4, %s5, %s6
  %s8 = sld [smem:[#allocation0]]
  $region65: #{basic_block_forward_lane.4} parent=0
    _
  %s10 = ssub.s32 1, %s8
  %s11 = scalar_select 0, %s10, %s8
  loop: start=0, step=1, limit=4
  $region2: #{basic_block_forward_lane.4} parent=0 // loop_pre_header
    _
  $region3: #{basic_block_forward_lane.4} parent=0 // loop_header
    %s13 = sphi 0, %s17
    %p14 = scmp.ge.s32.totalorder %s13, 4
    %s23 = sphi 0, %s25
    %s26 = sphi 0, %s23
    %s27 = sphi 0, %s26
    %s43 = sphi 0, %s27
    %s47 = sphi 0, %s47
    %s49 = sphi 0, %s47
    %s50 = sphi 0, %s49
    %s64 = sphi 0, %s50
    %s68 = sphi 0, %s68
    %s70 = sphi 0, %s68
    %s71 = sphi 0, %s70
    %s85 = sphi 0, %s71
    %s89 = sphi 0, %s89
    %s91 = sphi 0, %s89
    %s92 = sphi 0, %s91
    %s106 = sphi 0, %s92
    %s112 = sphi 0, %s114
    %s115 = sphi 0, %s112
    %s116 = sphi 0, %s115
    %s132 = sphi 0, %s116
    %s138 = sphi 0, %s140
    %s141 = sphi 0, %s138
    %s142 = sphi 0, %s141
    %s158 = sphi 0, %s142
    %s164 = sphi 0, %s166
    %s167 = sphi 0, %s164
    %s168 = sphi 0, %s167
    %s184 = sphi 0, %s168
  $region4: #{basic_block_forward_lane.4} parent=0 // loop_header_branch
    %16 = sbr.rel (%p14) target = $region8
  $region5: #{basic_block_forward_lane.4} parent=0 // loop_body
    %s18 = ssub.s32 %s13, 1
    %s19 = ssub.s32 %s13, 2
    %s20 = sadd.s32 %s13, 1
    %s21 = ssub.s32 %s13, %s20
    %p22 = scmp.eq.s32.totalorder %s21, 0
    %s24 = sadd.s32 %s23, 1
    %s25 = scalar_select %p22, %s23, %s24
    %p28 = pneg %p22
    %p29 = scmp.eq.s32.totalorder %s13, 1
    %p30 = por %p28, %p29
    %p31 = scmp.ne.s32.totalorder %s23, %s26
    %p32 = scmp.eq.s32.totalorder %s13, 0
    %p33 = por %p31, %p32
    %p34 = scmp.ne.s32.totalorder %s23, %s26
    %p35 = scmp.eq.s32.totalorder %s18, 1
    %p36 = por %p34, %p35
    %p37 = scmp.ne.s32.totalorder %s26, %s27
    %p38 = scmp.eq.s32.totalorder %s18, 0
    %p39 = por %p37, %p38
    %p40 = scmp.ne.s32.totalorder %s26, %s27
    %p41 = scmp.eq.s32.totalorder %s19, 1
    %p42 = por %p40, %p41
    %p44 = scmp.ne.s32.totalorder %s27, %s43
    %p45 = scmp.eq.s32.totalorder %s19, 0
    %p46 = por %p44, %p45
    %s48 = sadd.s32 %s47, 1
    %p51 = scmp.eq.s32.totalorder %s13, 1
    %p52 = scmp.ne.s32.totalorder %s47, %s49
    %p53 = scmp.eq.s32.totalorder %s13, 0
    %p54 = por %p52, %p53
    %p55 = scmp.ne.s32.totalorder %s47, %s49
    %p56 = scmp.eq.s32.totalorder %s18, 1
    %p57 = por %p55, %p56
    %p58 = scmp.ne.s32.totalorder %s49, %s50
    %p59 = scmp.eq.s32.totalorder %s18, 0
    %p60 = por %p58, %p59
    %p61 = scmp.ne.s32.totalorder %s49, %s50
    %p62 = scmp.eq.s32.totalorder %s19, 1
    %p63 = por %p61, %p62
    %p65 = scmp.ne.s32.totalorder %s50, %s64
    %p66 = scmp.eq.s32.totalorder %s19, 0
    %p67 = por %p65, %p66
    %s69 = sadd.s32 %s68, 1
    %p72 = scmp.eq.s32.totalorder %s13, 1
    %p73 = scmp.ne.s32.totalorder %s68, %s70
    %p74 = scmp.eq.s32.totalorder %s13, 0
    %p75 = por %p73, %p74
    %p76 = scmp.ne.s32.totalorder %s68, %s70
    %p77 = scmp.eq.s32.totalorder %s18, 1
    %p78 = por %p76, %p77
    %p79 = scmp.ne.s32.totalorder %s70, %s71
    %p80 = scmp.eq.s32.totalorder %s18, 0
    %p81 = por %p79, %p80
    %p82 = scmp.ne.s32.totalorder %s70, %s71
    %p83 = scmp.eq.s32.totalorder %s19, 1
    %p84 = por %p82, %p83
    %p86 = scmp.ne.s32.totalorder %s71, %s85
    %p87 = scmp.eq.s32.totalorder %s19, 0
    %p88 = por %p86, %p87
    %s90 = sadd.s32 %s89, 1
    %p93 = scmp.eq.s32.totalorder %s13, 1
    %p94 = scmp.ne.s32.totalorder %s89, %s91
    %p95 = scmp.eq.s32.totalorder %s13, 0
    %p96 = por %p94, %p95
    %p97 = scmp.ne.s32.totalorder %s89, %s91
    %p98 = scmp.eq.s32.totalorder %s18, 1
    %p99 = por %p97, %p98
    %p100 = scmp.ne.s32.totalorder %s91, %s92
    %p101 = scmp.eq.s32.totalorder %s18, 0
    %p102 = por %p100, %p101
    %p103 = scmp.ne.s32.totalorder %s91, %s92
    %p104 = scmp.eq.s32.totalorder %s19, 1
    %p105 = por %p103, %p104
    %p107 = scmp.ne.s32.totalorder %s92, %s106
    %p108 = scmp.eq.s32.totalorder %s19, 0
    %p109 = por %p107, %p108
    %s110 = ssub.s32 %s13, %s20
    %p111 = scmp.eq.s32.totalorder %s110, 0
    %s113 = sadd.s32 %s112, 1
    %s114 = scalar_select %p111, %s112, %s113
    %p117 = pneg %p111
    %p118 = scmp.eq.s32.totalorder %s13, 1
    %p119 = por %p117, %p118
    %p120 = scmp.ne.s32.totalorder %s112, %s115
    %p121 = scmp.eq.s32.totalorder %s13, 0
    %p122 = por %p120, %p121
    %p123 = scmp.ne.s32.totalorder %s112, %s115
    %p124 = scmp.eq.s32.totalorder %s18, 1
    %p125 = por %p123, %p124
    %p126 = scmp.ne.s32.totalorder %s115, %s116
    %p127 = scmp.eq.s32.totalorder %s18, 0
    %p128 = por %p126, %p127
    %p129 = scmp.ne.s32.totalorder %s115, %s116
    %p130 = scmp.eq.s32.totalorder %s19, 1
    %p131 = por %p129, %p130
    %p133 = scmp.ne.s32.totalorder %s116, %s132
    %p134 = scmp.eq.s32.totalorder %s19, 0
    %p135 = por %p133, %p134
    %s136 = ssub.s32 %s13, %s20
    %p137 = scmp.eq.s32.totalorder %s136, 0
    %s139 = sadd.s32 %s138, 1
    %s140 = scalar_select %p137, %s138, %s139
    %p143 = pneg %p137
    %p144 = scmp.eq.s32.totalorder %s13, 1
    %p145 = por %p143, %p144
    %p146 = scmp.ne.s32.totalorder %s138, %s141
    %p147 = scmp.eq.s32.totalorder %s13, 0
    %p148 = por %p146, %p147
    %p149 = scmp.ne.s32.totalorder %s138, %s141
    %p150 = scmp.eq.s32.totalorder %s18, 1
    %p151 = por %p149, %p150
    %p152 = scmp.ne.s32.totalorder %s141, %s142
    %p153 = scmp.eq.s32.totalorder %s18, 0
    %p154 = por %p152, %p153
    %p155 = scmp.ne.s32.totalorder %s141, %s142
    %p156 = scmp.eq.s32.totalorder %s19, 1
    %p157 = por %p155, %p156
    %p159 = scmp.ne.s32.totalorder %s142, %s158
    %p160 = scmp.eq.s32.totalorder %s19, 0
    %p161 = por %p159, %p160
    %s162 = ssub.s32 %s13, %s20
    %p163 = scmp.eq.s32.totalorder %s162, 0
    %s165 = sadd.s32 %s164, 1
    %s166 = scalar_select %p163, %s164, %s165
    %p169 = pneg %p163
    %p170 = scmp.eq.s32.totalorder %s13, 1
    %p171 = por %p169, %p170
    %p172 = scmp.ne.s32.totalorder %s164, %s167
    %p173 = scmp.eq.s32.totalorder %s13, 0
    %p174 = por %p172, %p173
    %p175 = scmp.ne.s32.totalorder %s164, %s167
    %p176 = scmp.eq.s32.totalorder %s18, 1
    %p177 = por %p175, %p176
    %p178 = scmp.ne.s32.totalorder %s167, %s168
    %p179 = scmp.eq.s32.totalorder %s18, 0
    %p180 = por %p178, %p179
    %p181 = scmp.ne.s32.totalorder %s167, %s168
    %p182 = scmp.eq.s32.totalorder %s19, 1
    %p183 = por %p181, %p182
    %p185 = scmp.ne.s32.totalorder %s168, %s184
    %p186 = scmp.eq.s32.totalorder %s19, 0
    %p187 = por %p185, %p186
    %p188 = scmp.le.s32.totalorder 1, %s13
    %p189 = scmp.lt.s32.totalorder %s13, 3
    %p190 = pnand %p188, %p189
    %p191 = pneg %p190
    // Predicated region
    $region9: #{basic_block_forward_lane.4} parent=5 // pred_check
      _
    $region10: #{basic_block_forward_lane.4} parent=5 // pred_check_branch
      %193 = sbr.rel (%p190) target = $region12
    $region11: #{basic_block_forward_lane.4} parent=5 // pred_region
      %s194 = ssub.s32 %s13, 1
      // Predicated region
      $region13: #{basic_block_forward_lane.4} parent=11 // pred_check
        %p195 = pneg %p60
      $region14: #{basic_block_forward_lane.4} parent=11 // pred_check_branch
        %197 = sbr.rel (%p195) target = $region16
      $region15: #{basic_block_forward_lane.4} parent=11 // pred_region
        _
      $region16: #{basic_block_forward_lane.4} parent=11 // pred_fallthru
        _
      // Predicated region
      $region17: #{basic_block_forward_lane.4} parent=11 // pred_check
        %p198 = pneg %p81
      $region18: #{basic_block_forward_lane.4} parent=11 // pred_check_branch
        %200 = sbr.rel (%p198) target = $region20
      $region19: #{basic_block_forward_lane.4} parent=11 // pred_region
        _
      $region20: #{basic_block_forward_lane.4} parent=11 // pred_fallthru
        _
      // Predicated region
      $region21: #{basic_block_forward_lane.4} parent=11 // pred_check
        %p201 = pneg %p102
      $region22: #{basic_block_forward_lane.4} parent=11 // pred_check_branch
        %203 = sbr.rel (%p201) target = $region24
      $region23: #{basic_block_forward_lane.4} parent=11 // pred_region
        _
      $region24: #{basic_block_forward_lane.4} parent=11 // pred_fallthru
        _
    $region12: #{basic_block_forward_lane.4} parent=5 // pred_fallthru
      _
    %p204 = scmp.lt.s32.totalorder %s13, 2
    // Predicated region
    $region25: #{basic_block_forward_lane.4} parent=5 // pred_check
      %p205 = pneg %p204
    $region26: #{basic_block_forward_lane.4} parent=5 // pred_check_branch
      %207 = sbr.rel (%p205) target = $region28
    $region27: #{basic_block_forward_lane.4} parent=5 // pred_region
      // Predicated region
      $region29: #{basic_block_forward_lane.4} parent=27 // pred_check
        %p208 = pneg %p33
      $region30: #{basic_block_forward_lane.4} parent=27 // pred_check_branch
        %210 = sbr.rel (%p208) target = $region32
      $region31: #{basic_block_forward_lane.4} parent=27 // pred_region
        %s211 = smul.u32 16, %s13
        %p212 = scmp.lt.s32.totalorder %s211, 31
        %s213 = scalar_select %p212, %s211, 31
        %s214 = smul.addr %s213, 8
        %s215 = scalar_lea.vmem %s0, %s214
        %s216 = smul.u32 16, %s13
      $region32: #{basic_block_forward_lane.4} parent=27 // pred_fallthru
        _
    $region28: #{basic_block_forward_lane.4} parent=5 // pred_fallthru
      _
    %p217 = scmp.le.s32.totalorder 1, %s13
    %p218 = scmp.lt.s32.totalorder %s13, 3
    %p219 = pnand %p217, %p218
    %p220 = pneg %p219
    // Predicated region
    $region33: #{basic_block_forward_lane.4} parent=5 // pred_check
      _
    $region34: #{basic_block_forward_lane.4} parent=5 // pred_check_branch
      %222 = sbr.rel (%p219) target = $region36
    $region35: #{basic_block_forward_lane.4} parent=5 // pred_region
      %s223 = ssub.s32 %s13, 1
      %s224 = smul.u32 16, %s18
      %p225 = scmp.lt.s32.totalorder %s224, 31
      %s226 = scalar_select %p225, %s224, 31
      %s227 = smul.addr %s226, 8
      %s228 = scalar_lea.vmem %s0, %s227
      %p229 = pneg %p39
      %p230 = pneg %p36
      %p231 = pneg %p60
      %p232 = pneg %p57
      %p233 = pneg %p81
      %p234 = pneg %p78
      %p235 = pneg %p102
      %p236 = pneg %p99
      %p237 = pneg %p128
      %p238 = pneg %p125
      %s239 = smul.u32 16, %s18
      %p240 = scmp.lt.s32.totalorder %s239, 31
      %s241 = scalar_select %p240, %s239, 31
      %s242 = smul.addr %s241, 8
      %s243 = scalar_lea.vmem %s4, %s242
      %p244 = pneg %p154
      %p245 = pneg %p151
      %p246 = scmp.lt.s32.totalorder %s18, 1
      %s247 = scalar_select %p246, %s18, 1
      %s248 = scalar_lea.vmem %s5, %s247
      %p249 = pneg %p180
      %p250 = pneg %p177
      %p251 = scmp.lt.s32.totalorder %s18, 1
      %s252 = scalar_select %p251, %s18, 1
      %s253 = scalar_lea.vmem %s6, %s252
      %s254 = smul.u32 16, %s18
      %p255 = scmp.lt.s32.totalorder %s254, 31
      %s256 = scalar_select %p255, %s254, 31
      %s257 = smul.addr %s256, 8
      %s258 = scalar_lea.vmem %s0, %s257
      %s259 = smul.u32 16, %s18
      %s260 = smul.u32 16, %s18
      %p261 = scmp.lt.s32.totalorder %s260, 31
      %s262 = scalar_select %p261, %s260, 31
      %s263 = smul.addr %s262, 8
      %s264 = scalar_lea.vmem %s4, %s263
      %s265 = smul.u32 16, %s18
      %p266 = scmp.lt.s32.totalorder %s18, 1
      %s267 = scalar_select %p266, %s18, 1
      %s268 = scalar_lea.vmem %s5, %s267
      %p269 = scmp.lt.s32.totalorder %s18, 1
      %s270 = scalar_select %p269, %s18, 1
      %s271 = scalar_lea.vmem %s6, %s270
      %v272 = vld [vmem:[%s258] sm:$0xff]
      %v273 = vld [vmem:[%s258 + $0x8] sm:$0xff]
      %v274 = vld [vmem:[%s258 + $0x10] sm:$0xff]
      %v275 = vld [vmem:[%s258 + $0x18] sm:$0xff]
      %v276 = vld [vmem:[%s258 + $0x20] sm:$0xff]
      %v277 = vld [vmem:[%s258 + $0x28] sm:$0xff]
      %v278 = vld [vmem:[%s258 + $0x30] sm:$0xff]
      %v279 = vld [vmem:[%s258 + $0x38] sm:$0xff]
      %v280 = vld [vmem:[%s258 + $0x40] sm:$0xff]
      %v281 = vld [vmem:[%s258 + $0x48] sm:$0xff]
      %v282 = vld [vmem:[%s258 + $0x50] sm:$0xff]
      %v283 = vld [vmem:[%s258 + $0x58] sm:$0xff]
      %v284 = vld [vmem:[%s258 + $0x60] sm:$0xff]
      %v285 = vld [vmem:[%s258 + $0x68] sm:$0xff]
      %v286 = vld [vmem:[%s258 + $0x70] sm:$0xff]
      %v287 = vld [vmem:[%s258 + $0x78] sm:$0xff]
      %v288 = vld [vmem:[%s1] sm:$0x1]
      %v290 = vlaneseq
      %v291 = vshrl.u32 %v290, 7
      %v292 = vsub.s32 0, %v291
      %v293 = vrot.slane %v288, %v292
      %v295 = vmul.f32 %v272, %v293
      %v296 = vmul.f32 %v273, %v293
      %v297 = vmul.f32 %v274, %v293
      %v298 = vmul.f32 %v275, %v293
      %v299 = vmul.f32 %v276, %v293
      %v300 = vmul.f32 %v277, %v293
      %v301 = vmul.f32 %v278, %v293
      %v302 = vmul.f32 %v279, %v293
      %v303 = vmul.f32 %v280, %v293
      %v304 = vmul.f32 %v281, %v293
      %v305 = vmul.f32 %v282, %v293
      %v306 = vmul.f32 %v283, %v293
      %v307 = vmul.f32 %v284, %v293
      %v308 = vmul.f32 %v285, %v293
      %v309 = vmul.f32 %v286, %v293
      %v310 = vmul.f32 %v287, %v293
      %v311 = vld [vmem:[%s2] sm:$0x1]
      %v313 = vlaneseq
      %v314 = vshrl.u32 %v313, 7
      %v315 = vsub.s32 0, %v314
      %v316 = vrot.slane %v311, %v315
      %v318 = vadd.f32 %v295, %v316
      %v319 = vadd.f32 %v296, %v316
      %v320 = vadd.f32 %v297, %v316
      %v321 = vadd.f32 %v298, %v316
      %v322 = vadd.f32 %v299, %v316
      %v323 = vadd.f32 %v300, %v316
      %v324 = vadd.f32 %v301, %v316
      %v325 = vadd.f32 %v302, %v316
      %v326 = vadd.f32 %v303, %v316
      %v327 = vadd.f32 %v304, %v316
      %v328 = vadd.f32 %v305, %v316
      %v329 = vadd.f32 %v306, %v316
      %v330 = vadd.f32 %v307, %v316
      %v331 = vadd.f32 %v308, %v316
      %v332 = vadd.f32 %v309, %v316
      %v333 = vadd.f32 %v310, %v316
      %v334 = vmax.f32 %v318, 0.0
      %v335 = vmax.f32 %v319, 0.0
      %v336 = vmax.f32 %v320, 0.0
      %v337 = vmax.f32 %v321, 0.0
      %v338 = vmax.f32 %v322, 0.0
      %v339 = vmax.f32 %v323, 0.0
      %v340 = vmax.f32 %v324, 0.0
      %v341 = vmax.f32 %v325, 0.0
      %v342 = vmax.f32 %v326, 0.0
      %v343 = vmax.f32 %v327, 0.0
      %v344 = vmax.f32 %v328, 0.0
      %v345 = vmax.f32 %v329, 0.0
      %v346 = vmax.f32 %v330, 0.0
      %v347 = vmax.f32 %v331, 0.0
      %v348 = vmax.f32 %v332, 0.0
      %v349 = vmax.f32 %v333, 0.0
      %v350 = vlaneseq
      %v351 = vshrl.u32 %v350, 7
      %v352 = vadd.s32 %v351, 8
      %v353 = vadd.s32 %v351, 16
      %v354 = vadd.s32 %v351, 24
      %v355 = vadd.s32 %v351, 32
      %v356 = vadd.s32 %v351, 40
      %v357 = vadd.s32 %v351, 48
      %v358 = vadd.s32 %v351, 56
      %v359 = vadd.s32 %v351, 64
      %v360 = vadd.s32 %v351, 72
      %v361 = vadd.s32 %v351, 80
      %v362 = vadd.s32 %v351, 88
      %v363 = vadd.s32 %v351, 96
      %v364 = vadd.s32 %v351, 104
      %v365 = vadd.s32 %v351, 112
      %v366 = vadd.s32 %v351, 120
      %vm367 = vcmp.lt.s32.totalorder %v351, 0
      %v368 = vsub.s32 0, %v351
      %v369 = vsel %vm367, %v368, %v351
      %v370 = vshrl.u32 %v369, 4
      %v371 = vand.u32 %v369, 15
      %v372 = vsub.s32 0, %v371
      %v373 = vsel %vm367, %v372, %v371
      %vm374 = vcmp.lt.s32.totalorder %v352, 0
      %v375 = vsub.s32 0, %v352
      %v376 = vsel %vm374, %v375, %v352
      %v377 = vshrl.u32 %v376, 4
      %v378 = vand.u32 %v376, 15
      %v379 = vsub.s32 0, %v378
      %v380 = vsel %vm374, %v379, %v378
      %vm381 = vcmp.lt.s32.totalorder %v353, 0
      %v382 = vsub.s32 0, %v353
      %v383 = vsel %vm381, %v382, %v353
      %v384 = vshrl.u32 %v383, 4
      %v385 = vand.u32 %v383, 15
      %v386 = vsub.s32 0, %v385
      %v387 = vsel %vm381, %v386, %v385
      %vm388 = vcmp.lt.s32.totalorder %v354, 0
      %v389 = vsub.s32 0, %v354
      %v390 = vsel %vm388, %v389, %v354
      %v391 = vshrl.u32 %v390, 4
      %v392 = vand.u32 %v390, 15
      %v393 = vsub.s32 0, %v392
      %v394 = vsel %vm388, %v393, %v392
      %vm395 = vcmp.lt.s32.totalorder %v355, 0
      %v396 = vsub.s32 0, %v355
      %v397 = vsel %vm395, %v396, %v355
      %v398 = vshrl.u32 %v397, 4
      %v399 = vand.u32 %v397, 15
      %v400 = vsub.s32 0, %v399
      %v401 = vsel %vm395, %v400, %v399
      %vm402 = vcmp.lt.s32.totalorder %v356, 0
      %v403 = vsub.s32 0, %v356
      %v404 = vsel %vm402, %v403, %v356
      %v405 = vshrl.u32 %v404, 4
      %v406 = vand.u32 %v404, 15
      %v407 = vsub.s32 0, %v406
      %v408 = vsel %vm402, %v407, %v406
      %vm409 = vcmp.lt.s32.totalorder %v357, 0
      %v410 = vsub.s32 0, %v357
      %v411 = vsel %vm409, %v410, %v357
      %v412 = vshrl.u32 %v411, 4
      %v413 = vand.u32 %v411, 15
      %v414 = vsub.s32 0, %v413
      %v415 = vsel %vm409, %v414, %v413
      %vm416 = vcmp.lt.s32.totalorder %v358, 0
      %v417 = vsub.s32 0, %v358
      %v418 = vsel %vm416, %v417, %v358
      %v419 = vshrl.u32 %v418, 4
      %v420 = vand.u32 %v418, 15
      %v421 = vsub.s32 0, %v420
      %v422 = vsel %vm416, %v421, %v420
      %vm423 = vcmp.lt.s32.totalorder %v359, 0
      %v424 = vsub.s32 0, %v359
      %v425 = vsel %vm423, %v424, %v359
      %v426 = vshrl.u32 %v425, 4
      %v427 = vand.u32 %v425, 15
      %v428 = vsub.s32 0, %v427
      %v429 = vsel %vm423, %v428, %v427
      %vm430 = vcmp.lt.s32.totalorder %v360, 0
      %v431 = vsub.s32 0, %v360
      %v432 = vsel %vm430, %v431, %v360
      %v433 = vshrl.u32 %v432, 4
      %v434 = vand.u32 %v432, 15
      %v435 = vsub.s32 0, %v434
      %v436 = vsel %vm430, %v435, %v434
      %vm437 = vcmp.lt.s32.totalorder %v361, 0
      %v438 = vsub.s32 0, %v361
      %v439 = vsel %vm437, %v438, %v361
      %v440 = vshrl.u32 %v439, 4
      %v441 = vand.u32 %v439, 15
      %v442 = vsub.s32 0, %v441
      %v443 = vsel %vm437, %v442, %v441
      %vm444 = vcmp.lt.s32.totalorder %v362, 0
      %v445 = vsub.s32 0, %v362
      %v446 = vsel %vm444, %v445, %v362
      %v447 = vshrl.u32 %v446, 4
      %v448 = vand.u32 %v446, 15
      %v449 = vsub.s32 0, %v448
      %v450 = vsel %vm444, %v449, %v448
      %vm451 = vcmp.lt.s32.totalorder %v363, 0
      %v452 = vsub.s32 0, %v363
      %v453 = vsel %vm451, %v452, %v363
      %v454 = vshrl.u32 %v453, 4
      %v455 = vand.u32 %v453, 15
      %v456 = vsub.s32 0, %v455
      %v457 = vsel %vm451, %v456, %v455
      %vm458 = vcmp.lt.s32.totalorder %v364, 0
      %v459 = vsub.s32 0, %v364
      %v460 = vsel %vm458, %v459, %v364
      %v461 = vshrl.u32 %v460, 4
      %v462 = vand.u32 %v460, 15
      %v463 = vsub.s32 0, %v462
      %v464 = vsel %vm458, %v463, %v462
      %vm465 = vcmp.lt.s32.totalorder %v365, 0
      %v466 = vsub.s32 0, %v365
      %v467 = vsel %vm465, %v466, %v365
      %v468 = vshrl.u32 %v467, 4
      %v469 = vand.u32 %v467, 15
      %v470 = vsub.s32 0, %v469
      %v471 = vsel %vm465, %v470, %v469
      %vm472 = vcmp.lt.s32.totalorder %v366, 0
      %v473 = vsub.s32 0, %v366
      %v474 = vsel %vm472, %v473, %v366
      %v475 = vshrl.u32 %v474, 4
      %v476 = vand.u32 %v474, 15
      %v477 = vsub.s32 0, %v476
      %v478 = vsel %vm472, %v477, %v476
      %vm479 = vcmp.ne.s32.totalorder %v373, 0
      %vm480 = vcmp.ne.s32.totalorder %v380, 0
      %vm481 = vcmp.ne.s32.totalorder %v387, 0
      %vm482 = vcmp.ne.s32.totalorder %v394, 0
      %vm483 = vcmp.ne.s32.totalorder %v401, 0
      %vm484 = vcmp.ne.s32.totalorder %v408, 0
      %vm485 = vcmp.ne.s32.totalorder %v415, 0
      %vm486 = vcmp.ne.s32.totalorder %v422, 0
      %vm487 = vcmp.ne.s32.totalorder %v429, 0
      %vm488 = vcmp.ne.s32.totalorder %v436, 0
      %vm489 = vcmp.ne.s32.totalorder %v443, 0
      %vm490 = vcmp.ne.s32.totalorder %v450, 0
      %vm491 = vcmp.ne.s32.totalorder %v457, 0
      %vm492 = vcmp.ne.s32.totalorder %v464, 0
      %vm493 = vcmp.ne.s32.totalorder %v471, 0
      %vm494 = vcmp.ne.s32.totalorder %v478, 0
      %vm495 = vcmp.lt.s32.totalorder %v373, 0
      %vm496 = vcmp.lt.s32.totalorder %v380, 0
      %vm497 = vcmp.lt.s32.totalorder %v387, 0
      %vm498 = vcmp.lt.s32.totalorder %v394, 0
      %vm499 = vcmp.lt.s32.totalorder %v401, 0
      %vm500 = vcmp.lt.s32.totalorder %v408, 0
      %vm501 = vcmp.lt.s32.totalorder %v415, 0
      %vm502 = vcmp.lt.s32.totalorder %v422, 0
      %vm503 = vcmp.lt.s32.totalorder %v429, 0
      %vm504 = vcmp.lt.s32.totalorder %v436, 0
      %vm505 = vcmp.lt.s32.totalorder %v443, 0
      %vm506 = vcmp.lt.s32.totalorder %v450, 0
      %vm507 = vcmp.lt.s32.totalorder %v457, 0
      %vm508 = vcmp.lt.s32.totalorder %v464, 0
      %vm509 = vcmp.lt.s32.totalorder %v471, 0
      %vm510 = vcmp.lt.s32.totalorder %v478, 0
      %vm511 = vmand %vm495, %vm479
      %vm512 = vmand %vm496, %vm480
      %vm513 = vmand %vm497, %vm481
      %vm514 = vmand %vm498, %vm482
      %vm515 = vmand %vm499, %vm483
      %vm516 = vmand %vm500, %vm484
      %vm517 = vmand %vm501, %vm485
      %vm518 = vmand %vm502, %vm486
      %vm519 = vmand %vm503, %vm487
      %vm520 = vmand %vm504, %vm488
      %vm521 = vmand %vm505, %vm489
      %vm522 = vmand %vm506, %vm490
      %vm523 = vmand %vm507, %vm491
      %vm524 = vmand %vm508, %vm492
      %vm525 = vmand %vm509, %vm493
      %vm526 = vmand %vm510, %vm494
      %v527 = vadd.s32 %v373, 16
      %v528 = vadd.s32 %v380, 16
      %v529 = vadd.s32 %v387, 16
      %v530 = vadd.s32 %v394, 16
      %v531 = vadd.s32 %v401, 16
      %v532 = vadd.s32 %v408, 16
      %v533 = vadd.s32 %v415, 16
      %v534 = vadd.s32 %v422, 16
      %v535 = vadd.s32 %v429, 16
      %v536 = vadd.s32 %v436, 16
      %v537 = vadd.s32 %v443, 16
      %v538 = vadd.s32 %v450, 16
      %v539 = vadd.s32 %v457, 16
      %v540 = vadd.s32 %v464, 16
      %v541 = vadd.s32 %v471, 16
      %v542 = vadd.s32 %v478, 16
      %v543 = vsel %vm511, %v527, %v373
      %v544 = vsel %vm512, %v528, %v380
      %v545 = vsel %vm513, %v529, %v387
      %v546 = vsel %vm514, %v530, %v394
      %v547 = vsel %vm515, %v531, %v401
      %v548 = vsel %vm516, %v532, %v408
      %v549 = vsel %vm517, %v533, %v415
      %v550 = vsel %vm518, %v534, %v422
      %v551 = vsel %vm519, %v535, %v429
      %v552 = vsel %vm520, %v536, %v436
      %v553 = vsel %vm521, %v537, %v443
      %v554 = vsel %vm522, %v538, %v450
      %v555 = vsel %vm523, %v539, %v457
      %v556 = vsel %vm524, %v540, %v464
      %v557 = vsel %vm525, %v541, %v471
      %v558 = vsel %vm526, %v542, %v478
      %s559 = scalar_lea.vmem %s3, 128
      %v560 = vld [vmem:[%s559] sm:$0xff]
      %v561 = vld [vmem:[%s559 + $0x8] sm:$0xff]
      %v562 = vld [vmem:[%s559 + $0x10] sm:$0xff]
      %v563 = vld [vmem:[%s559 + $0x18] sm:$0xff]
      %v564 = vld [vmem:[%s559 + $0x20] sm:$0xff]
      %v565 = vld [vmem:[%s559 + $0x28] sm:$0xff]
      %v566 = vld [vmem:[%s559 + $0x30] sm:$0xff]
      %v567 = vld [vmem:[%s559 + $0x38] sm:$0xff]
      %v568 = vld [vmem:[%s559 + $0x40] sm:$0xff]
      %v569 = vld [vmem:[%s559 + $0x48] sm:$0xff]
      %v570 = vld [vmem:[%s559 + $0x50] sm:$0xff]
      %v571 = vld [vmem:[%s559 + $0x58] sm:$0xff]
      %v572 = vld [vmem:[%s559 + $0x60] sm:$0xff]
      %v573 = vld [vmem:[%s559 + $0x68] sm:$0xff]
      %v574 = vld [vmem:[%s559 + $0x70] sm:$0xff]
      %v575 = vld [vmem:[%s559 + $0x78] sm:$0xff]
      %v576 = vld [vmem:[%s3] sm:$0xff]
      %v577 = vld [vmem:[%s3 + $0x8] sm:$0xff]
      %v578 = vld [vmem:[%s3 + $0x10] sm:$0xff]
      %v579 = vld [vmem:[%s3 + $0x18] sm:$0xff]
      %v580 = vld [vmem:[%s3 + $0x20] sm:$0xff]
      %v581 = vld [vmem:[%s3 + $0x28] sm:$0xff]
      %v582 = vld [vmem:[%s3 + $0x30] sm:$0xff]
      %v583 = vld [vmem:[%s3 + $0x38] sm:$0xff]
      %v584 = vld [vmem:[%s3 + $0x40] sm:$0xff]
      %v585 = vld [vmem:[%s3 + $0x48] sm:$0xff]
      %v586 = vld [vmem:[%s3 + $0x50] sm:$0xff]
      %v587 = vld [vmem:[%s3 + $0x58] sm:$0xff]
      %v588 = vld [vmem:[%s3 + $0x60] sm:$0xff]
      %v589 = vld [vmem:[%s3 + $0x68] sm:$0xff]
      %v590 = vld [vmem:[%s3 + $0x70] sm:$0xff]
      %v591 = vld [vmem:[%s3 + $0x78] sm:$0xff]
      %592 = vmatprep.subr.mxu0 0.0
      %593 = vmatpush1.msra.mxu0 %v576
      %594 = vmatprep.subr.mxu0 0.0
      %595 = vmatpush1.msra.mxu0 %v577
      %596 = vmatprep.subr.mxu0 0.0
      %597 = vmatpush1.msra.mxu0 %v578
      %598 = vmatprep.subr.mxu0 0.0
      %599 = vmatpush1.msra.mxu0 %v579
      %600 = vmatprep.subr.mxu0 0.0
      %601 = vmatpush1.msra.mxu0 %v580
      %602 = vmatprep.subr.mxu0 0.0
      %603 = vmatpush1.msra.mxu0 %v581
      %604 = vmatprep.subr.mxu0 0.0
      %605 = vmatpush1.msra.mxu0 %v582
      %606 = vmatprep.subr.mxu0 0.0
      %607 = vmatpush1.msra.mxu0 %v583
      %608 = vmatprep.subr.mxu0 0.0
      %609 = vmatpush1.msra.mxu0 %v584
      %610 = vmatprep.subr.mxu0 0.0
      %611 = vmatpush1.msra.mxu0 %v585
      %612 = vmatprep.subr.mxu0 0.0
      %613 = vmatpush1.msra.mxu0 %v586
      %614 = vmatprep.subr.mxu0 0.0
      %615 = vmatpush1.msra.mxu0 %v587
      %616 = vmatprep.subr.mxu0 0.0
      %617 = vmatpush1.msra.mxu0 %v588
      %618 = vmatprep.subr.mxu0 0.0
      %619 = vmatpush1.msra.mxu0 %v589
      %620 = vmatprep.subr.mxu0 0.0
      %621 = vmatpush1.msra.mxu0 %v590
      %622 = vmatprep.subr.mxu0 0.0
      %623 = vmatpush1.msra.mxu0 %v591
      %624 = vmatprep.subr.mxu0 0.0
      %625 = vmatpush1.msra.mxu0 0.0
      %626 = vmatprep.subr.mxu0 0.0
      %627 = vmatpush1.msra.mxu0 0.0
      %628 = vmatprep.subr.mxu0 0.0
      %629 = vmatpush1.msra.mxu0 0.0
      %630 = vmatprep.subr.mxu0 0.0
      %631 = vmatpush1.msra.mxu0 0.0
      %632 = vmatprep.subr.mxu0 0.0
      %633 = vmatpush1.msra.mxu0 0.0
      %634 = vmatprep.subr.mxu0 0.0
      %635 = vmatpush1.msra.mxu0 0.0
      %636 = vmatprep.subr.mxu0 0.0
      %637 = vmatpush1.msra.mxu0 0.0
      %638 = vmatprep.subr.mxu0 0.0
      %639 = vmatpush1.msra.mxu0 0.0
      %640 = vmatprep.subr.mxu0 0.0
      %641 = vmatpush1.msra.mxu0 0.0
      %642 = vmatprep.subr.mxu0 0.0
      %643 = vmatpush1.msra.mxu0 0.0
      %644 = vmatprep.subr.mxu0 0.0
      %645 = vmatpush1.msra.mxu0 0.0
      %646 = vmatprep.subr.mxu0 0.0
      %647 = vmatpush1.msra.mxu0 0.0
      %648 = vmatprep.subr.mxu0 0.0
      %649 = vmatpush1.msra.mxu0 0.0
      %650 = vmatprep.subr.mxu0 0.0
      %651 = vmatpush1.msra.mxu0 0.0
      %652 = vmatprep.subr.mxu0 0.0
      %653 = vmatpush1.msra.mxu0 0.0
      %654 = vmatprep.subr.mxu0 0.0
      %655 = vmatpush1.msra.mxu0 0.0
      %656 = vmatprep.mubr.f32.mxu0 0.0
      %657 = vmatmul.mubr.f32.gmra.mrb[0].mxu0 %v334
      %v658 = vpop.f32.mrb[0].mxu0
      %v659 = vadd.f32 0.0, %v658
      %v660 = vpop.f32.mrb[0].mxu0
      %661 = vmatprep.mubr.f32.mxu0 0.0
      %662 = vmatmul.mubr.f32.gmra.mrb[0].mxu0 %v335
      %v663 = vpop.f32.mrb[0].mxu0
      %v664 = vadd.f32 0.0, %v663
      %v665 = vpop.f32.mrb[0].mxu0
      %666 = vmatprep.mubr.f32.mxu0 0.0
      %667 = vmatmul.mubr.f32.gmra.mrb[0].mxu0 %v336
      %v668 = vpop.f32.mrb[0].mxu0
      %v669 = vadd.f32 0.0, %v668
      %v670 = vpop.f32.mrb[0].mxu0
      %671 = vmatprep.mubr.f32.mxu0 0.0
      %672 = vmatmul.mubr.f32.gmra.mrb[0].mxu0 %v337
      %v673 = vpop.f32.mrb[0].mxu0
      %v674 = vadd.f32 0.0, %v673
      %v675 = vpop.f32.mrb[0].mxu0
      %676 = vmatprep.mubr.f32.mxu0 0.0
      %677 = vmatmul.mubr.f32.gmra.mrb[0].mxu0 %v338
      %v678 = vpop.f32.mrb[0].mxu0
      %v679 = vadd.f32 0.0, %v678
      %v680 = vpop.f32.mrb[0].mxu0
      %681 = vmatprep.mubr.f32.mxu0 0.0
      %682 = vmatmul.mubr.f32.gmra.mrb[0].mxu0 %v339
      %v683 = vpop.f32.mrb[0].mxu0
      %v684 = vadd.f32 0.0, %v683
      %v685 = vpop.f32.mrb[0].mxu0
      %686 = vmatprep.mubr.f32.mxu0 0.0
      %687 = vmatmul.mubr.f32.gmra.mrb[0].mxu0 %v340
      %v688 = vpop.f32.mrb[0].mxu0
      %v689 = vadd.f32 0.0, %v688
      %v690 = vpop.f32.mrb[0].mxu0
      %691 = vmatprep.mubr.f32.mxu0 0.0
      %692 = vmatmul.mubr.f32.gmra.mrb[0].mxu0 %v341
      %v693 = vpop.f32.mrb[0].mxu0
      %v694 = vadd.f32 0.0, %v693
      %v695 = vpop.f32.mrb[0].mxu0
      %696 = vmatprep.mubr.f32.mxu0 0.0
      %697 = vmatmul.mubr.f32.gmra.mrb[0].mxu0 %v342
      %v698 = vpop.f32.mrb[0].mxu0
      %v699 = vadd.f32 0.0, %v698
      %v700 = vpop.f32.mrb[0].mxu0
      %701 = vmatprep.mubr.f32.mxu0 0.0
      %702 = vmatmul.mubr.f32.gmra.mrb[0].mxu0 %v343
      %v703 = vpop.f32.mrb[0].mxu0
      %v704 = vadd.f32 0.0, %v703
      %v705 = vpop.f32.mrb[0].mxu0
      %706 = vmatprep.mubr.f32.mxu0 0.0
      %707 = vmatmul.mubr.f32.gmra.mrb[0].mxu0 %v344
      %v708 = vpop.f32.mrb[0].mxu0
      %v709 = vadd.f32 0.0, %v708
      %v710 = vpop.f32.mrb[0].mxu0
      %711 = vmatprep.mubr.f32.mxu0 0.0
      %712 = vmatmul.mubr.f32.gmra.mrb[0].mxu0 %v345
      %v713 = vpop.f32.mrb[0].mxu0
      %v714 = vadd.f32 0.0, %v713
      %v715 = vpop.f32.mrb[0].mxu0
      %716 = vmatprep.mubr.f32.mxu0 0.0
      %717 = vmatmul.mubr.f32.gmra.mrb[0].mxu0 %v346
      %v718 = vpop.f32.mrb[0].mxu0
      %v719 = vadd.f32 0.0, %v718
      %v720 = vpop.f32.mrb[0].mxu0
      %721 = vmatprep.mubr.f32.mxu0 0.0
      %722 = vmatmul.mubr.f32.gmra.mrb[0].mxu0 %v347
      %v723 = vpop.f32.mrb[0].mxu0
      %v724 = vadd.f32 0.0, %v723
      %v725 = vpop.f32.mrb[0].mxu0
      %726 = vmatprep.mubr.f32.mxu0 0.0
      %727 = vmatmul.mubr.f32.gmra.mrb[0].mxu0 %v348
      %v728 = vpop.f32.mrb[0].mxu0
      %v729 = vadd.f32 0.0, %v728
      %v730 = vpop.f32.mrb[0].mxu0
      %731 = vmatprep.mubr.f32.mxu0 0.0
      %732 = vmatmul.mubr.f32.gmra.mrb[0].mxu0 %v349
      %v733 = vpop.f32.mrb[0].mxu0
      %v734 = vadd.f32 0.0, %v733
      %v735 = vpop.f32.mrb[0].mxu0
      %736 = vdwg.mxu0
      %vm737 = vcmp.ne.s32.totalorder %v543, 0
      %vm738 = vcmp.ne.s32.totalorder %v544, 0
      %vm739 = vcmp.ne.s32.totalorder %v545, 0
      %vm740 = vcmp.ne.s32.totalorder %v546, 0
      %vm741 = vcmp.ne.s32.totalorder %v547, 0
      %vm742 = vcmp.ne.s32.totalorder %v548, 0
      %vm743 = vcmp.ne.s32.totalorder %v549, 0
      %vm744 = vcmp.ne.s32.totalorder %v550, 0
      %vm745 = vcmp.ne.s32.totalorder %v551, 0
      %vm746 = vcmp.ne.s32.totalorder %v552, 0
      %vm747 = vcmp.ne.s32.totalorder %v553, 0
      %vm748 = vcmp.ne.s32.totalorder %v554, 0
      %vm749 = vcmp.ne.s32.totalorder %v555, 0
      %vm750 = vcmp.ne.s32.totalorder %v556, 0
      %vm751 = vcmp.ne.s32.totalorder %v557, 0
      %vm752 = vcmp.ne.s32.totalorder %v558, 0
      %v753 = vrot.slane %v659, 7
      %v754 = vrot.slane %v664, 7
      %v755 = vrot.slane %v669, 7
      %v756 = vrot.slane %v674, 7
      %v757 = vrot.slane %v679, 7
      %v758 = vrot.slane %v684, 7
      %v759 = vrot.slane %v689, 7
      %v760 = vrot.slane %v694, 7
      %v761 = vrot.slane %v699, 7
      %v762 = vrot.slane %v704, 7
      %v763 = vrot.slane %v709, 7
      %v764 = vrot.slane %v714, 7
      %v765 = vrot.slane %v719, 7
      %v766 = vrot.slane %v724, 7
      %v767 = vrot.slane %v729, 7
      %v768 = vrot.slane %v734, 7
      %vm769 = vcmp.lt.s32.totalorder %v351, 1
      %v770 = vsel %vm769, %v767, %v768
      %v771 = vsel %vm769, %v766, %v767
      %v772 = vsel %vm769, %v765, %v766
      %v773 = vsel %vm769, %v764, %v765
      %v774 = vsel %vm769, %v763, %v764
      %v775 = vsel %vm769, %v762, %v763
      %v776 = vsel %vm769, %v761, %v762
      %v777 = vsel %vm769, %v760, %v761
      %v778 = vsel %vm769, %v759, %v760
      %v779 = vsel %vm769, %v758, %v759
      %v780 = vsel %vm769, %v757, %v758
      %v781 = vsel %vm769, %v756, %v757
      %v782 = vsel %vm769, %v755, %v756
      %v783 = vsel %vm769, %v754, %v755
      %v784 = vsel %vm769, %v753, %v754
      %v785 = vsel %vm769, %v768, %v753
      %v786 = vsel %vm737, 1, 0
      %v787 = vsel %vm738, 1, 0
      %v788 = vsel %vm739, 1, 0
      %v789 = vsel %vm740, 1, 0
      %v790 = vsel %vm741, 1, 0
      %v791 = vsel %vm742, 1, 0
      %v792 = vsel %vm743, 1, 0
      %v793 = vsel %vm744, 1, 0
      %v794 = vsel %vm745, 1, 0
      %v795 = vsel %vm746, 1, 0
      %v796 = vsel %vm747, 1, 0
      %v797 = vsel %vm748, 1, 0
      %v798 = vsel %vm749, 1, 0
      %v799 = vsel %vm750, 1, 0
      %v800 = vsel %vm751, 1, 0
      %v801 = vsel %vm752, 1, 0
      %vm802 = vcmp.eq.s32.totalorder %v786, 1
      %vm803 = vcmp.eq.s32.totalorder %v787, 1
      %vm804 = vcmp.eq.s32.totalorder %v788, 1
      %vm805 = vcmp.eq.s32.totalorder %v789, 1
      %vm806 = vcmp.eq.s32.totalorder %v790, 1
      %vm807 = vcmp.eq.s32.totalorder %v791, 1
      %vm808 = vcmp.eq.s32.totalorder %v792, 1
      %vm809 = vcmp.eq.s32.totalorder %v793, 1
      %vm810 = vcmp.eq.s32.totalorder %v794, 1
      %vm811 = vcmp.eq.s32.totalorder %v795, 1
      %vm812 = vcmp.eq.s32.totalorder %v796, 1
      %vm813 = vcmp.eq.s32.totalorder %v797, 1
      %vm814 = vcmp.eq.s32.totalorder %v798, 1
      %vm815 = vcmp.eq.s32.totalorder %v799, 1
      %vm816 = vcmp.eq.s32.totalorder %v800, 1
      %vm817 = vcmp.eq.s32.totalorder %v801, 1
      %v818 = vsel %vm802, %v785, 0.0
      %v819 = vsel %vm803, %v784, 0.0
      %v820 = vsel %vm804, %v783, 0.0
      %v821 = vsel %vm805, %v782, 0.0
      %v822 = vsel %vm806, %v781, 0.0
      %v823 = vsel %vm807, %v780, 0.0
      %v824 = vsel %vm808, %v779, 0.0
      %v825 = vsel %vm809, %v778, 0.0
      %v826 = vsel %vm810, %v777, 0.0
      %v827 = vsel %vm811, %v776, 0.0
      %v828 = vsel %vm812, %v775, 0.0
      %v829 = vsel %vm813, %v774, 0.0
      %v830 = vsel %vm814, %v773, 0.0
      %v831 = vsel %vm815, %v772, 0.0
      %v832 = vsel %vm816, %v771, 0.0
      %v833 = vsel %vm817, %v770, 0.0
      %834 = vmatprep.subr.mxu0 0.0
      %835 = vmatpush1.msra.mxu0 %v560
      %836 = vmatprep.subr.mxu0 0.0
      %837 = vmatpush1.msra.mxu0 %v561
      %838 = vmatprep.subr.mxu0 0.0
      %839 = vmatpush1.msra.mxu0 %v562
      %840 = vmatprep.subr.mxu0 0.0
      %841 = vmatpush1.msra.mxu0 %v563
      %842 = vmatprep.subr.mxu0 0.0
      %843 = vmatpush1.msra.mxu0 %v564
      %844 = vmatprep.subr.mxu0 0.0
      %845 = vmatpush1.msra.mxu0 %v565
      %846 = vmatprep.subr.mxu0 0.0
      %847 = vmatpush1.msra.mxu0 %v566
      %848 = vmatprep.subr.mxu0 0.0
      %849 = vmatpush1.msra.mxu0 %v567
      %850 = vmatprep.subr.mxu0 0.0
      %851 = vmatpush1.msra.mxu0 %v568
      %852 = vmatprep.subr.mxu0 0.0
      %853 = vmatpush1.msra.mxu0 %v569
      %854 = vmatprep.subr.mxu0 0.0
      %855 = vmatpush1.msra.mxu0 %v570
      %856 = vmatprep.subr.mxu0 0.0
      %857 = vmatpush1.msra.mxu0 %v571
      %858 = vmatprep.subr.mxu0 0.0
      %859 = vmatpush1.msra.mxu0 %v572
      %860 = vmatprep.subr.mxu0 0.0
      %861 = vmatpush1.msra.mxu0 %v573
      %862 = vmatprep.subr.mxu0 0.0
      %863 = vmatpush1.msra.mxu0 %v574
      %864 = vmatprep.subr.mxu0 0.0
      %865 = vmatpush1.msra.mxu0 %v575
      %866 = vmatprep.subr.mxu0 0.0
      %867 = vmatpush1.msra.mxu0 0.0
      %868 = vmatprep.subr.mxu0 0.0
      %869 = vmatpush1.msra.mxu0 0.0
      %870 = vmatprep.subr.mxu0 0.0
      %871 = vmatpush1.msra.mxu0 0.0
      %872 = vmatprep.subr.mxu0 0.0
      %873 = vmatpush1.msra.mxu0 0.0
      %874 = vmatprep.subr.mxu0 0.0
      %875 = vmatpush1.msra.mxu0 0.0
      %876 = vmatprep.subr.mxu0 0.0
      %877 = vmatpush1.msra.mxu0 0.0
      %878 = vmatprep.subr.mxu0 0.0
      %879 = vmatpush1.msra.mxu0 0.0
      %880 = vmatprep.subr.mxu0 0.0
      %881 = vmatpush1.msra.mxu0 0.0
      %882 = vmatprep.subr.mxu0 0.0
      %883 = vmatpush1.msra.mxu0 0.0
      %884 = vmatprep.subr.mxu0 0.0
      %885 = vmatpush1.msra.mxu0 0.0
      %886 = vmatprep.subr.mxu0 0.0
      %887 = vmatpush1.msra.mxu0 0.0
      %888 = vmatprep.subr.mxu0 0.0
      %889 = vmatpush1.msra.mxu0 0.0
      %890 = vmatprep.subr.mxu0 0.0
      %891 = vmatpush1.msra.mxu0 0.0
      %892 = vmatprep.subr.mxu0 0.0
      %893 = vmatpush1.msra.mxu0 0.0
      %894 = vmatprep.subr.mxu0 0.0
      %895 = vmatpush1.msra.mxu0 0.0
      %896 = vmatprep.subr.mxu0 0.0
      %897 = vmatpush1.msra.mxu0 0.0
      %898 = vmatprep.mubr.f32.mxu0 0.0
      %899 = vmatmul.mubr.f32.gmra.mrb[0].mxu0 %v334
      %v900 = vpop.f32.mrb[0].mxu0
      %v901 = vadd.f32 %v818, %v900
      %v902 = vpop.f32.mrb[0].mxu0
      %903 = vmatprep.mubr.f32.mxu0 0.0
      %904 = vmatmul.mubr.f32.gmra.mrb[0].mxu0 %v335
      %v905 = vpop.f32.mrb[0].mxu0
      %v906 = vadd.f32 %v819, %v905
      %v907 = vpop.f32.mrb[0].mxu0
      %908 = vmatprep.mubr.f32.mxu0 0.0
      %909 = vmatmul.mubr.f32.gmra.mrb[0].mxu0 %v336
      %v910 = vpop.f32.mrb[0].mxu0
      %v911 = vadd.f32 %v820, %v910
      %v912 = vpop.f32.mrb[0].mxu0
      %913 = vmatprep.mubr.f32.mxu0 0.0
      %914 = vmatmul.mubr.f32.gmra.mrb[0].mxu0 %v337
      %v915 = vpop.f32.mrb[0].mxu0
      %v916 = vadd.f32 %v821, %v915
      %v917 = vpop.f32.mrb[0].mxu0
      %918 = vmatprep.mubr.f32.mxu0 0.0
      %919 = vmatmul.mubr.f32.gmra.mrb[0].mxu0 %v338
      %v920 = vpop.f32.mrb[0].mxu0
      %v921 = vadd.f32 %v822, %v920
      %v922 = vpop.f32.mrb[0].mxu0
      %923 = vmatprep.mubr.f32.mxu0 0.0
      %924 = vmatmul.mubr.f32.gmra.mrb[0].mxu0 %v339
      %v925 = vpop.f32.mrb[0].mxu0
      %v926 = vadd.f32 %v823, %v925
      %v927 = vpop.f32.mrb[0].mxu0
      %928 = vmatprep.mubr.f32.mxu0 0.0
      %929 = vmatmul.mubr.f32.gmra.mrb[0].mxu0 %v340
      %v930 = vpop.f32.mrb[0].mxu0
      %v931 = vadd.f32 %v824, %v930
      %v932 = vpop.f32.mrb[0].mxu0
      %933 = vmatprep.mubr.f32.mxu0 0.0
      %934 = vmatmul.mubr.f32.gmra.mrb[0].mxu0 %v341
      %v935 = vpop.f32.mrb[0].mxu0
      %v936 = vadd.f32 %v825, %v935
      %v937 = vpop.f32.mrb[0].mxu0
      %938 = vmatprep.mubr.f32.mxu0 0.0
      %939 = vmatmul.mubr.f32.gmra.mrb[0].mxu0 %v342
      %v940 = vpop.f32.mrb[0].mxu0
      %v941 = vadd.f32 %v826, %v940
      %v942 = vpop.f32.mrb[0].mxu0
      %943 = vmatprep.mubr.f32.mxu0 0.0
      %944 = vmatmul.mubr.f32.gmra.mrb[0].mxu0 %v343
      %v945 = vpop.f32.mrb[0].mxu0
      %v946 = vadd.f32 %v827, %v945
      %v947 = vpop.f32.mrb[0].mxu0
      %948 = vmatprep.mubr.f32.mxu0 0.0
      %949 = vmatmul.mubr.f32.gmra.mrb[0].mxu0 %v344
      %v950 = vpop.f32.mrb[0].mxu0
      %v951 = vadd.f32 %v828, %v950
      %v952 = vpop.f32.mrb[0].mxu0
      %953 = vmatprep.mubr.f32.mxu0 0.0
      %954 = vmatmul.mubr.f32.gmra.mrb[0].mxu0 %v345
      %v955 = vpop.f32.mrb[0].mxu0
      %v956 = vadd.f32 %v829, %v955
      %v957 = vpop.f32.mrb[0].mxu0
      %958 = vmatprep.mubr.f32.mxu0 0.0
      %959 = vmatmul.mubr.f32.gmra.mrb[0].mxu0 %v346
      %v960 = vpop.f32.mrb[0].mxu0
      %v961 = vadd.f32 %v830, %v960
      %v962 = vpop.f32.mrb[0].mxu0
      %963 = vmatprep.mubr.f32.mxu0 0.0
      %964 = vmatmul.mubr.f32.gmra.mrb[0].mxu0 %v347
      %v965 = vpop.f32.mrb[0].mxu0
      %v966 = vadd.f32 %v831, %v965
      %v967 = vpop.f32.mrb[0].mxu0
      %968 = vmatprep.mubr.f32.mxu0 0.0
      %969 = vmatmul.mubr.f32.gmra.mrb[0].mxu0 %v348
      %v970 = vpop.f32.mrb[0].mxu0
      %v971 = vadd.f32 %v832, %v970
      %v972 = vpop.f32.mrb[0].mxu0
      %973 = vmatprep.mubr.f32.mxu0 0.0
      %974 = vmatmul.mubr.f32.gmra.mrb[0].mxu0 %v349
      %v975 = vpop.f32.mrb[0].mxu0
      %v976 = vadd.f32 %v833, %v975
      %v977 = vpop.f32.mrb[0].mxu0
      %978 = vdwg.mxu0
      %s979 = scalar_lea.vmem %s3, 256
      %v980 = vld [vmem:[%s979] sm:$0xff]
      %v981 = vld [vmem:[%s979 + $0x8] sm:$0xff]
      %v982 = vld [vmem:[%s979 + $0x10] sm:$0xff]
      %v983 = vld [vmem:[%s979 + $0x18] sm:$0xff]
      %v984 = vld [vmem:[%s979 + $0x20] sm:$0xff]
      %v985 = vld [vmem:[%s979 + $0x28] sm:$0xff]
      %v986 = vld [vmem:[%s979 + $0x30] sm:$0xff]
      %v987 = vld [vmem:[%s979 + $0x38] sm:$0xff]
      %v988 = vld [vmem:[%s979 + $0x40] sm:$0xff]
      %v989 = vld [vmem:[%s979 + $0x48] sm:$0xff]
      %v990 = vld [vmem:[%s979 + $0x50] sm:$0xff]
      %v991 = vld [vmem:[%s979 + $0x58] sm:$0xff]
      %v992 = vld [vmem:[%s979 + $0x60] sm:$0xff]
      %v993 = vld [vmem:[%s979 + $0x68] sm:$0xff]
      %v994 = vld [vmem:[%s979 + $0x70] sm:$0xff]
      %v995 = vld [vmem:[%s979 + $0x78] sm:$0xff]
      %996 = vmatprep.subr.mxu0 0.0
      %997 = vmatpush1.msra.mxu0 %v980
      %998 = vmatprep.subr.mxu0 0.0
      %999 = vmatpush1.msra.mxu0 %v981
      %1000 = vmatprep.subr.mxu0 0.0
      %1001 = vmatpush1.msra.mxu0 %v982
      %1002 = vmatprep.subr.mxu0 0.0
      %1003 = vmatpush1.msra.mxu0 %v983
      %1004 = vmatprep.subr.mxu0 0.0
      %1005 = vmatpush1.msra.mxu0 %v984
      %1006 = vmatprep.subr.mxu0 0.0
      %1007 = vmatpush1.msra.mxu0 %v985
      %1008 = vmatprep.subr.mxu0 0.0
      %1009 = vmatpush1.msra.mxu0 %v986
      %1010 = vmatprep.subr.mxu0 0.0
      %1011 = vmatpush1.msra.mxu0 %v987
      %1012 = vmatprep.subr.mxu0 0.0
      %1013 = vmatpush1.msra.mxu0 %v988
      %1014 = vmatprep.subr.mxu0 0.0
      %1015 = vmatpush1.msra.mxu0 %v989
      %1016 = vmatprep.subr.mxu0 0.0
      %1017 = vmatpush1.msra.mxu0 %v990
      %1018 = vmatprep.subr.mxu0 0.0
      %1019 = vmatpush1.msra.mxu0 %v991
      %1020 = vmatprep.subr.mxu0 0.0
      %1021 = vmatpush1.msra.mxu0 %v992
      %1022 = vmatprep.subr.mxu0 0.0
      %1023 = vmatpush1.msra.mxu0 %v993
      %1024 = vmatprep.subr.mxu0 0.0
      %1025 = vmatpush1.msra.mxu0 %v994
      %1026 = vmatprep.subr.mxu0 0.0
      %1027 = vmatpush1.msra.mxu0 %v995
      %1028 = vmatprep.subr.mxu0 0.0
      %1029 = vmatpush1.msra.mxu0 0.0
      %1030 = vmatprep.subr.mxu0 0.0
      %1031 = vmatpush1.msra.mxu0 0.0
      %1032 = vmatprep.subr.mxu0 0.0
      %1033 = vmatpush1.msra.mxu0 0.0
      %1034 = vmatprep.subr.mxu0 0.0
      %1035 = vmatpush1.msra.mxu0 0.0
      %1036 = vmatprep.subr.mxu0 0.0
      %1037 = vmatpush1.msra.mxu0 0.0
      %1038 = vmatprep.subr.mxu0 0.0
      %1039 = vmatpush1.msra.mxu0 0.0
      %1040 = vmatprep.subr.mxu0 0.0
      %1041 = vmatpush1.msra.mxu0 0.0
      %1042 = vmatprep.subr.mxu0 0.0
      %1043 = vmatpush1.msra.mxu0 0.0
      %1044 = vmatprep.subr.mxu0 0.0
      %1045 = vmatpush1.msra.mxu0 0.0
      %1046 = vmatprep.subr.mxu0 0.0
      %1047 = vmatpush1.msra.mxu0 0.0
      %1048 = vmatprep.subr.mxu0 0.0
      %1049 = vmatpush1.msra.mxu0 0.0
      %1050 = vmatprep.subr.mxu0 0.0
      %1051 = vmatpush1.msra.mxu0 0.0
      %1052 = vmatprep.subr.mxu0 0.0
      %1053 = vmatpush1.msra.mxu0 0.0
      %1054 = vmatprep.subr.mxu0 0.0
      %1055 = vmatpush1.msra.mxu0 0.0
      %1056 = vmatprep.subr.mxu0 0.0
      %1057 = vmatpush1.msra.mxu0 0.0
      %1058 = vmatprep.subr.mxu0 0.0
      %1059 = vmatpush1.msra.mxu0 0.0
      %1060 = vmatprep.mubr.f32.mxu0 0.0
      %1061 = vmatmul.mubr.f32.gmra.mrb[0].mxu0 %v334
      %v1062 = vpop.f32.mrb[0].mxu0
      %v1063 = vadd.f32 0.0, %v1062
      %v1064 = vpop.f32.mrb[0].mxu0
      %1065 = vmatprep.mubr.f32.mxu0 0.0
      %1066 = vmatmul.mubr.f32.gmra.mrb[0].mxu0 %v335
      %v1067 = vpop.f32.mrb[0].mxu0
      %v1068 = vadd.f32 0.0, %v1067
      %v1069 = vpop.f32.mrb[0].mxu0
      %1070 = vmatprep.mubr.f32.mxu0 0.0
      %1071 = vmatmul.mubr.f32.gmra.mrb[0].mxu0 %v336
      %v1072 = vpop.f32.mrb[0].mxu0
      %v1073 = vadd.f32 0.0, %v1072
      %v1074 = vpop.f32.mrb[0].mxu0
      %1075 = vmatprep.mubr.f32.mxu0 0.0
      %1076 = vmatmul.mubr.f32.gmra.mrb[0].mxu0 %v337
      %v1077 = vpop.f32.mrb[0].mxu0
      %v1078 = vadd.f32 0.0, %v1077
      %v1079 = vpop.f32.mrb[0].mxu0
      %1080 = vmatprep.mubr.f32.mxu0 0.0
      %1081 = vmatmul.mubr.f32.gmra.mrb[0].mxu0 %v338
      %v1082 = vpop.f32.mrb[0].mxu0
      %v1083 = vadd.f32 0.0, %v1082
      %v1084 = vpop.f32.mrb[0].mxu0
      %1085 = vmatprep.mubr.f32.mxu0 0.0
      %1086 = vmatmul.mubr.f32.gmra.mrb[0].mxu0 %v339
      %v1087 = vpop.f32.mrb[0].mxu0
      %v1088 = vadd.f32 0.0, %v1087
      %v1089 = vpop.f32.mrb[0].mxu0
      %1090 = vmatprep.mubr.f32.mxu0 0.0
      %1091 = vmatmul.mubr.f32.gmra.mrb[0].mxu0 %v340
      %v1092 = vpop.f32.mrb[0].mxu0
      %v1093 = vadd.f32 0.0, %v1092
      %v1094 = vpop.f32.mrb[0].mxu0
      %1095 = vmatprep.mubr.f32.mxu0 0.0
      %1096 = vmatmul.mubr.f32.gmra.mrb[0].mxu0 %v341
      %v1097 = vpop.f32.mrb[0].mxu0
      %v1098 = vadd.f32 0.0, %v1097
      %v1099 = vpop.f32.mrb[0].mxu0
      %1100 = vmatprep.mubr.f32.mxu0 0.0
      %1101 = vmatmul.mubr.f32.gmra.mrb[0].mxu0 %v342
      %v1102 = vpop.f32.mrb[0].mxu0
      %v1103 = vadd.f32 0.0, %v1102
      %v1104 = vpop.f32.mrb[0].mxu0
      %1105 = vmatprep.mubr.f32.mxu0 0.0
      %1106 = vmatmul.mubr.f32.gmra.mrb[0].mxu0 %v343
      %v1107 = vpop.f32.mrb[0].mxu0
      %v1108 = vadd.f32 0.0, %v1107
      %v1109 = vpop.f32.mrb[0].mxu0
      %1110 = vmatprep.mubr.f32.mxu0 0.0
      %1111 = vmatmul.mubr.f32.gmra.mrb[0].mxu0 %v344
      %v1112 = vpop.f32.mrb[0].mxu0
      %v1113 = vadd.f32 0.0, %v1112
      %v1114 = vpop.f32.mrb[0].mxu0
      %1115 = vmatprep.mubr.f32.mxu0 0.0
      %1116 = vmatmul.mubr.f32.gmra.mrb[0].mxu0 %v345
      %v1117 = vpop.f32.mrb[0].mxu0
      %v1118 = vadd.f32 0.0, %v1117
      %v1119 = vpop.f32.mrb[0].mxu0
      %1120 = vmatprep.mubr.f32.mxu0 0.0
      %1121 = vmatmul.mubr.f32.gmra.mrb[0].mxu0 %v346
      %v1122 = vpop.f32.mrb[0].mxu0
      %v1123 = vadd.f32 0.0, %v1122
      %v1124 = vpop.f32.mrb[0].mxu0
      %1125 = vmatprep.mubr.f32.mxu0 0.0
      %1126 = vmatmul.mubr.f32.gmra.mrb[0].mxu0 %v347
      %v1127 = vpop.f32.mrb[0].mxu0
      %v1128 = vadd.f32 0.0, %v1127
      %v1129 = vpop.f32.mrb[0].mxu0
      %1130 = vmatprep.mubr.f32.mxu0 0.0
      %1131 = vmatmul.mubr.f32.gmra.mrb[0].mxu0 %v348
      %v1132 = vpop.f32.mrb[0].mxu0
      %v1133 = vadd.f32 0.0, %v1132
      %v1134 = vpop.f32.mrb[0].mxu0
      %1135 = vmatprep.mubr.f32.mxu0 0.0
      %1136 = vmatmul.mubr.f32.gmra.mrb[0].mxu0 %v349
      %v1137 = vpop.f32.mrb[0].mxu0
      %v1138 = vadd.f32 0.0, %v1137
      %v1139 = vpop.f32.mrb[0].mxu0
      %1140 = vdwg.mxu0
      %vm1141 = vcmp.ne.s32.totalorder %v543, 15
      %vm1142 = vcmp.ne.s32.totalorder %v544, 15
      %vm1143 = vcmp.ne.s32.totalorder %v545, 15
      %vm1144 = vcmp.ne.s32.totalorder %v546, 15
      %vm1145 = vcmp.ne.s32.totalorder %v547, 15
      %vm1146 = vcmp.ne.s32.totalorder %v548, 15
      %vm1147 = vcmp.ne.s32.totalorder %v549, 15
      %vm1148 = vcmp.ne.s32.totalorder %v550, 15
      %vm1149 = vcmp.ne.s32.totalorder %v551, 15
      %vm1150 = vcmp.ne.s32.totalorder %v552, 15
      %vm1151 = vcmp.ne.s32.totalorder %v553, 15
      %vm1152 = vcmp.ne.s32.totalorder %v554, 15
      %vm1153 = vcmp.ne.s32.totalorder %v555, 15
      %vm1154 = vcmp.ne.s32.totalorder %v556, 15
      %vm1155 = vcmp.ne.s32.totalorder %v557, 15
      %vm1156 = vcmp.ne.s32.totalorder %v558, 15
      %v1157 = vrot.slane %v1063, 1
      %v1158 = vrot.slane %v1068, 1
      %v1159 = vrot.slane %v1073, 1
      %v1160 = vrot.slane %v1078, 1
      %v1161 = vrot.slane %v1083, 1
      %v1162 = vrot.slane %v1088, 1
      %v1163 = vrot.slane %v1093, 1
      %v1164 = vrot.slane %v1098, 1
      %v1165 = vrot.slane %v1103, 1
      %v1166 = vrot.slane %v1108, 1
      %v1167 = vrot.slane %v1113, 1
      %v1168 = vrot.slane %v1118, 1
      %v1169 = vrot.slane %v1123, 1
      %v1170 = vrot.slane %v1128, 1
      %v1171 = vrot.slane %v1133, 1
      %v1172 = vrot.slane %v1138, 1
      %vm1173 = vcmp.lt.s32.totalorder %v351, 7
      %v1174 = vsel %vm1173, %v1171, %v1172
      %v1175 = vsel %vm1173, %v1170, %v1171
      %v1176 = vsel %vm1173, %v1169, %v1170
      %v1177 = vsel %vm1173, %v1168, %v1169
      %v1178 = vsel %vm1173, %v1167, %v1168
      %v1179 = vsel %vm1173, %v1166, %v1167
      %v1180 = vsel %vm1173, %v1165, %v1166
      %v1181 = vsel %vm1173, %v1164, %v1165
      %v1182 = vsel %vm1173, %v1163, %v1164
      %v1183 = vsel %vm1173, %v1162, %v1163
      %v1184 = vsel %vm1173, %v1161, %v1162
      %v1185 = vsel %vm1173, %v1160, %v1161
      %v1186 = vsel %vm1173, %v1159, %v1160
      %v1187 = vsel %vm1173, %v1158, %v1159
      %v1188 = vsel %vm1173, %v1157, %v1158
      %v1189 = vsel %vm1173, %v1172, %v1157
      %v1190 = vsel %vm1141, 1, 0
      %v1191 = vsel %vm1142, 1, 0
      %v1192 = vsel %vm1143, 1, 0
      %v1193 = vsel %vm1144, 1, 0
      %v1194 = vsel %vm1145, 1, 0
      %v1195 = vsel %vm1146, 1, 0
      %v1196 = vsel %vm1147, 1, 0
      %v1197 = vsel %vm1148, 1, 0
      %v1198 = vsel %vm1149, 1, 0
      %v1199 = vsel %vm1150, 1, 0
      %v1200 = vsel %vm1151, 1, 0
      %v1201 = vsel %vm1152, 1, 0
      %v1202 = vsel %vm1153, 1, 0
      %v1203 = vsel %vm1154, 1, 0
      %v1204 = vsel %vm1155, 1, 0
      %v1205 = vsel %vm1156, 1, 0
      %vm1206 = vcmp.eq.s32.totalorder %v1190, 1
      %vm1207 = vcmp.eq.s32.totalorder %v1191, 1
      %vm1208 = vcmp.eq.s32.totalorder %v1192, 1
      %vm1209 = vcmp.eq.s32.totalorder %v1193, 1
      %vm1210 = vcmp.eq.s32.totalorder %v1194, 1
      %vm1211 = vcmp.eq.s32.totalorder %v1195, 1
      %vm1212 = vcmp.eq.s32.totalorder %v1196, 1
      %vm1213 = vcmp.eq.s32.totalorder %v1197, 1
      %vm1214 = vcmp.eq.s32.totalorder %v1198, 1
      %vm1215 = vcmp.eq.s32.totalorder %v1199, 1
      %vm1216 = vcmp.eq.s32.totalorder %v1200, 1
      %vm1217 = vcmp.eq.s32.totalorder %v1201, 1
      %vm1218 = vcmp.eq.s32.totalorder %v1202, 1
      %vm1219 = vcmp.eq.s32.totalorder %v1203, 1
      %vm1220 = vcmp.eq.s32.totalorder %v1204, 1
      %vm1221 = vcmp.eq.s32.totalorder %v1205, 1
      %v1222 = vsel %vm1206, %v1188, 0.0
      %v1223 = vsel %vm1207, %v1187, 0.0
      %v1224 = vsel %vm1208, %v1186, 0.0
      %v1225 = vsel %vm1209, %v1185, 0.0
      %v1226 = vsel %vm1210, %v1184, 0.0
      %v1227 = vsel %vm1211, %v1183, 0.0
      %v1228 = vsel %vm1212, %v1182, 0.0
      %v1229 = vsel %vm1213, %v1181, 0.0
      %v1230 = vsel %vm1214, %v1180, 0.0
      %v1231 = vsel %vm1215, %v1179, 0.0
      %v1232 = vsel %vm1216, %v1178, 0.0
      %v1233 = vsel %vm1217, %v1177, 0.0
      %v1234 = vsel %vm1218, %v1176, 0.0
      %v1235 = vsel %vm1219, %v1175, 0.0
      %v1236 = vsel %vm1220, %v1174, 0.0
      %v1237 = vsel %vm1221, %v1189, 0.0
      %v1238 = vadd.f32 %v901, %v1222
      %v1239 = vadd.f32 %v906, %v1223
      %v1240 = vadd.f32 %v911, %v1224
      %v1241 = vadd.f32 %v916, %v1225
      %v1242 = vadd.f32 %v921, %v1226
      %v1243 = vadd.f32 %v926, %v1227
      %v1244 = vadd.f32 %v931, %v1228
      %v1245 = vadd.f32 %v936, %v1229
      %v1246 = vadd.f32 %v941, %v1230
      %v1247 = vadd.f32 %v946, %v1231
      %v1248 = vadd.f32 %v951, %v1232
      %v1249 = vadd.f32 %v956, %v1233
      %v1250 = vadd.f32 %v961, %v1234
      %v1251 = vadd.f32 %v966, %v1235
      %v1252 = vadd.f32 %v971, %v1236
      %v1253 = vadd.f32 %v976, %v1237
      %1254 = vst [vmem:[%s264] sm:$0xff] %v1238
      %1255 = vst [vmem:[%s264 + $0x8] sm:$0xff] %v1239
      %1256 = vst [vmem:[%s264 + $0x10] sm:$0xff] %v1240
      %1257 = vst [vmem:[%s264 + $0x18] sm:$0xff] %v1241
      %1258 = vst [vmem:[%s264 + $0x20] sm:$0xff] %v1242
      %1259 = vst [vmem:[%s264 + $0x28] sm:$0xff] %v1243
      %1260 = vst [vmem:[%s264 + $0x30] sm:$0xff] %v1244
      %1261 = vst [vmem:[%s264 + $0x38] sm:$0xff] %v1245
      %1262 = vst [vmem:[%s264 + $0x40] sm:$0xff] %v1246
      %1263 = vst [vmem:[%s264 + $0x48] sm:$0xff] %v1247
      %1264 = vst [vmem:[%s264 + $0x50] sm:$0xff] %v1248
      %1265 = vst [vmem:[%s264 + $0x58] sm:$0xff] %v1249
      %1266 = vst [vmem:[%s264 + $0x60] sm:$0xff] %v1250
      %1267 = vst [vmem:[%s264 + $0x68] sm:$0xff] %v1251
      %1268 = vst [vmem:[%s264 + $0x70] sm:$0xff] %v1252
      %1269 = vst [vmem:[%s264 + $0x78] sm:$0xff] %v1253
      %v1270 = vadd.f32 %v1238, %v1239
      %v1271 = vadd.f32 %v1270, %v1240
      %v1272 = vadd.f32 %v1271, %v1241
      %v1273 = vadd.f32 %v1272, %v1242
      %v1274 = vadd.f32 %v1273, %v1243
      %v1275 = vadd.f32 %v1274, %v1244
      %v1276 = vadd.f32 %v1275, %v1245
      %v1277 = vadd.f32 %v1276, %v1246
      %v1278 = vadd.f32 %v1277, %v1247
      %v1279 = vadd.f32 %v1278, %v1248
      %v1280 = vadd.f32 %v1279, %v1249
      %v1281 = vadd.f32 %v1280, %v1250
      %v1282 = vadd.f32 %v1281, %v1251
      %v1283 = vadd.f32 %v1282, %v1252
      %v1284 = vadd.f32 %v1283, %v1253
      %v1285 = vrot.slane %v1284, 4
      %v1286 = vadd.f32 %v1284, %v1285
      %v1287 = vrot.slane %v1286, 2
      %v1288 = vadd.f32 %v1286, %v1287
      %v1289 = vrot.slane %v1288, 1
      %v1290 = vadd.f32 %v1288, %v1289
      %v1291 = vmul.f32 %v1290, 0.0078125
      %v1292 = vsub.f32 %v1238, %v1291
      %v1293 = vsub.f32 %v1239, %v1291
      %v1294 = vsub.f32 %v1240, %v1291
      %v1295 = vsub.f32 %v1241, %v1291
      %v1296 = vsub.f32 %v1242, %v1291
      %v1297 = vsub.f32 %v1243, %v1291
      %v1298 = vsub.f32 %v1244, %v1291
      %v1299 = vsub.f32 %v1245, %v1291
      %v1300 = vsub.f32 %v1246, %v1291
      %v1301 = vsub.f32 %v1247, %v1291
      %v1302 = vsub.f32 %v1248, %v1291
      %v1303 = vsub.f32 %v1249, %v1291
      %v1304 = vsub.f32 %v1250, %v1291
      %v1305 = vsub.f32 %v1251, %v1291
      %v1306 = vsub.f32 %v1252, %v1291
      %v1307 = vsub.f32 %v1253, %v1291
      %1308 = vst [vmem:[%s268] sm:$0x1] %v1290
      %v1309 = vmul.f32 %v1292, %v1292
      %v1310 = vmul.f32 %v1293, %v1293
      %v1311 = vmul.f32 %v1294, %v1294
      %v1312 = vmul.f32 %v1295, %v1295
      %v1313 = vmul.f32 %v1296, %v1296
      %v1314 = vmul.f32 %v1297, %v1297
      %v1315 = vmul.f32 %v1298, %v1298
      %v1316 = vmul.f32 %v1299, %v1299
      %v1317 = vmul.f32 %v1300, %v1300
      %v1318 = vmul.f32 %v1301, %v1301
      %v1319 = vmul.f32 %v1302, %v1302
      %v1320 = vmul.f32 %v1303, %v1303
      %v1321 = vmul.f32 %v1304, %v1304
      %v1322 = vmul.f32 %v1305, %v1305
      %v1323 = vmul.f32 %v1306, %v1306
      %v1324 = vmul.f32 %v1307, %v1307
      %v1325 = vadd.f32 %v1309, %v1310
      %v1326 = vadd.f32 %v1325, %v1311
      %v1327 = vadd.f32 %v1326, %v1312
      %v1328 = vadd.f32 %v1327, %v1313
      %v1329 = vadd.f32 %v1328, %v1314
      %v1330 = vadd.f32 %v1329, %v1315
      %v1331 = vadd.f32 %v1330, %v1316
      %v1332 = vadd.f32 %v1331, %v1317
      %v1333 = vadd.f32 %v1332, %v1318
      %v1334 = vadd.f32 %v1333, %v1319
      %v1335 = vadd.f32 %v1334, %v1320
      %v1336 = vadd.f32 %v1335, %v1321
      %v1337 = vadd.f32 %v1336, %v1322
      %v1338 = vadd.f32 %v1337, %v1323
      %v1339 = vadd.f32 %v1338, %v1324
      %v1340 = vrot.slane %v1339, 4
      %v1341 = vadd.f32 %v1339, %v1340
      %v1342 = vrot.slane %v1341, 2
      %v1343 = vadd.f32 %v1341, %v1342
      %v1344 = vrot.slane %v1343, 1
      %v1345 = vadd.f32 %v1343, %v1344
      %1346 = vst [vmem:[%s271] sm:$0x1] %v1345
      %s1347 = smul.u32 16, %s18
      %p1348 = scmp.lt.s32.totalorder %s1347, 31
      %s1349 = scalar_select %p1348, %s1347, 31
      %s1350 = smul.addr %s1349, 8
      %s1351 = scalar_lea.vmem %s4, %s1350
      %p1352 = scmp.lt.s32.totalorder %s18, 1
      %s1353 = scalar_select %p1352, %s18, 1
      %s1354 = scalar_lea.vmem %s5, %s1353
      %p1355 = scmp.lt.s32.totalorder %s18, 1
      %s1356 = scalar_select %p1355, %s18, 1
      %s1357 = scalar_lea.vmem %s6, %s1356
      // Predicated region
      $region37: #{basic_block_forward_lane.4} parent=35 // pred_check
        %p1358 = pneg %p125
      $region38: #{basic_block_forward_lane.4} parent=35 // pred_check_branch
        %1360 = sbr.rel (%p1358) target = $region40
      $region39: #{basic_block_forward_lane.4} parent=35 // pred_region
        %s1361 = smul.u32 16, %s18
      $region40: #{basic_block_forward_lane.4} parent=35 // pred_fallthru
        _
      // Predicated region
      $region41: #{basic_block_forward_lane.4} parent=35 // pred_check
        %p1362 = pneg %p151
      $region42: #{basic_block_forward_lane.4} parent=35 // pred_check_branch
        %1364 = sbr.rel (%p1362) target = $region44
      $region43: #{basic_block_forward_lane.4} parent=35 // pred_region
        _
      $region44: #{basic_block_forward_lane.4} parent=35 // pred_fallthru
        _
      // Predicated region
      $region45: #{basic_block_forward_lane.4} parent=35 // pred_check
        %p1365 = pneg %p177
      $region46: #{basic_block_forward_lane.4} parent=35 // pred_check_branch
        %1367 = sbr.rel (%p1365) target = $region48
      $region47: #{basic_block_forward_lane.4} parent=35 // pred_region
        _
      $region48: #{basic_block_forward_lane.4} parent=35 // pred_fallthru
        _
    $region36: #{basic_block_forward_lane.4} parent=5 // pred_fallthru
      _
    %p1368 = scmp.le.s32.totalorder 2, %s13
    // Predicated region
    $region49: #{basic_block_forward_lane.4} parent=5 // pred_check
      %p1369 = pneg %p1368
    $region50: #{basic_block_forward_lane.4} parent=5 // pred_check_branch
      %1371 = sbr.rel (%p1369) target = $region52
    $region51: #{basic_block_forward_lane.4} parent=5 // pred_region
      %s1372 = ssub.s32 %s13, 2
      // Predicated region
      $region53: #{basic_block_forward_lane.4} parent=51 // pred_check
        %p1373 = pneg %p131
      $region54: #{basic_block_forward_lane.4} parent=51 // pred_check_branch
        %1375 = sbr.rel (%p1373) target = $region56
      $region55: #{basic_block_forward_lane.4} parent=51 // pred_region
        %s1376 = smul.u32 16, %s19
        %p1377 = scmp.lt.s32.totalorder %s1376, 31
        %s1378 = scalar_select %p1377, %s1376, 31
        %s1379 = smul.addr %s1378, 8
        %s1380 = scalar_lea.vmem %s4, %s1379
      $region56: #{basic_block_forward_lane.4} parent=51 // pred_fallthru
        _
      // Predicated region
      $region57: #{basic_block_forward_lane.4} parent=51 // pred_check
        %p1381 = pneg %p157
      $region58: #{basic_block_forward_lane.4} parent=51 // pred_check_branch
        %1383 = sbr.rel (%p1381) target = $region60
      $region59: #{basic_block_forward_lane.4} parent=51 // pred_region
        %p1384 = scmp.lt.s32.totalorder %s19, 1
        %s1385 = scalar_select %p1384, %s19, 1
        %s1386 = scalar_lea.vmem %s5, %s1385
      $region60: #{basic_block_forward_lane.4} parent=51 // pred_fallthru
        _
      // Predicated region
      $region61: #{basic_block_forward_lane.4} parent=51 // pred_check
        %p1387 = pneg %p183
      $region62: #{basic_block_forward_lane.4} parent=51 // pred_check_branch
        %1389 = sbr.rel (%p1387) target = $region64
      $region63: #{basic_block_forward_lane.4} parent=51 // pred_region
        %p1390 = scmp.lt.s32.totalorder %s19, 1
        %s1391 = scalar_select %p1390, %s19, 1
        %s1392 = scalar_lea.vmem %s6, %s1391
      $region64: #{basic_block_forward_lane.4} parent=51 // pred_fallthru
        _
    $region52: #{basic_block_forward_lane.4} parent=5 // pred_fallthru
      _
  $region6: #{basic_block_forward_lane.4} parent=0 // loop_footer
    %s17 = sadd.s32 1, %s13
  $region7: #{basic_block_forward_lane.4} parent=0 // loop_footer_branch
    %12 = sbr.rel target = $region3
  $region8: #{basic_block_forward_lane.4} parent=0 // loop_exit
    _

</llo_original>
